<compile_context>
chip_gen: v7x
topology: tpu7x:2x2x1
jax: 0.10.0
libtpu: 0.0.40
codegen_flags: <defaults>
</compile_context>

<pallas_src>
import functools

import jax
import jax.numpy as jnp
import numpy as np
from jax.experimental import pallas as pl
from jax.experimental.pallas import tpu as pltpu


def _rdb_kernel(num_dense_layer, H, W, halo, x_ref, *refs):
    """One batch element per grid step.

    refs = (w_taps_0, b_0, ..., w_taps_{L-1}, b_{L-1}, w1x1, b1x1, out_ref, feat_scratch)
      w_taps_i : (9, G, Cin_i)   per-tap conv matrices (tap k = kh*3 + kw)
      b_i      : (G, 1)
      w1x1     : (C0, C_total)
      b1x1     : (C0, 1)
      feat_scratch : (C_total, halo + H*W + halo) f32 VMEM
    """
    feat_ref = refs[-1]
    out_ref = refs[-2]
    b1x1_ref = refs[-3]
    w1x1_ref = refs[-4]
    dense_refs = refs[:-4]

    HW = H * W
    B = halo
    c_total = feat_ref.shape[0]

    x = x_ref[0]                         # (C0, HW) f32, lane-dense
    C0 = x.shape[0]

    # Zero the left/right halo bands so row-shifted (dh = +-1) taps read zeros.
    feat_ref[:, 0:B] = jnp.zeros((c_total, B), jnp.float32)
    feat_ref[:, B + HW:B + HW + B] = jnp.zeros((c_total, B), jnp.float32)

    # Input occupies the first C0 channel rows of the feature scratch.
    feat_ref[0:C0, B:B + HW] = x

    # Column-boundary masks: only dw = +-1 taps can wrap across image columns
    # (row shifts land in the zero halo bands and need no mask).
    col = jax.lax.broadcasted_iota(jnp.int32, (1, HW), 1) % W
    col_masks = {-1: col >= 1, 0: None, 1: col <= (W - 2)}

    c_off = C0
    for i in range(num_dense_layer):
        w_ref = dense_refs[2 * i]        # (9, G, Cin)
        b_ref = dense_refs[2 * i + 1]    # (G, 1)
        cin = c_off
        G = w_ref.shape[1]

        acc = jnp.zeros((G, HW), jnp.float32)
        for dw in (-1, 0, 1):
            part = jnp.zeros((G, HW), jnp.float32)
            for dh in (-1, 0, 1):
                k = (dh + 1) * 3 + (dw + 1)
                s = dh * W + dw
                # shifted[c, p] == feat[c, h+dh, w+dw]  (zero / masked at borders)
                shifted = feat_ref[0:cin, B + s:B + s + HW]          # (Cin, HW)
                part = part + jnp.dot(w_ref[k], shifted,
                                      preferred_element_type=jnp.float32)
            m = col_masks[dw]
            if m is not None:
                part = jnp.where(m, part, 0.0)
            acc = acc + part

        acc = jnp.maximum(acc + b_ref[...], 0.0)                     # bias + relu
        feat_ref[c_off:c_off + G, B:B + HW] = acc                    # "concat" = row write
        c_off += G

    # 1x1 conv over all accumulated channels + residual add.
    feat_all = feat_ref[:, B:B + HW]                                 # (C_total, HW)
    y = jnp.dot(w1x1_ref[...], feat_all, preferred_element_type=jnp.float32)
    y = y + b1x1_ref[...] + x
    out_ref[0] = y.astype(out_ref.dtype)


def rdb_forward(x_nchw, dense_params, w1x1, b1x1):
    """x_nchw: (N, C0, H, W).  dense_params: list of (w:(G, Cin_i, 3, 3) OIHW, b:(G,)).
    w1x1: (C0, C_total).  b1x1: (C0,).  Returns (N, C0, H, W)."""
    N, C0, H, W = x_nchw.shape
    L = len(dense_params)
    HW = H * W
    halo = max(128, ((W + 1 + 127) // 128) * 128)   # lane-aligned zero halo (>= W+1)
    c_total = C0 + sum(w.shape[0] for (w, _) in dense_params)

    x2 = x_nchw.reshape(N, C0, HW)                  # free reshape: NCHW -> (N, C, HW)

    in_specs = [pl.BlockSpec((1, C0, HW), lambda n: (n, 0, 0))]
    args = [x2]
    for (w, b) in dense_params:
        G, cin = w.shape[0], w.shape[1]
        # OIHW -> (kh, kw, O, I) -> (9, G, Cin): per-tap matmul matrices.
        w_taps = jnp.transpose(w, (2, 3, 0, 1)).reshape(9, G, cin)
        in_specs.append(pl.BlockSpec((9, G, cin), lambda n: (0, 0, 0)))
        in_specs.append(pl.BlockSpec((G, 1), lambda n: (0, 0)))
        args += [w_taps, b.reshape(G, 1)]
    in_specs.append(pl.BlockSpec(w1x1.shape, lambda n: (0, 0)))
    in_specs.append(pl.BlockSpec((C0, 1), lambda n: (0, 0)))
    args += [w1x1, b1x1.reshape(C0, 1)]

    out_spec = pl.BlockSpec((1, C0, HW), lambda n: (n, 0, 0))
    kernel = functools.partial(_rdb_kernel, L, H, W, halo)

    out = pl.pallas_call(
        kernel,
        out_shape=jax.ShapeDtypeStruct((N, C0, HW), x_nchw.dtype),
        grid=(N,),
        in_specs=in_specs,
        out_specs=out_spec,
        scratch_shapes=[pltpu.VMEM((c_total, halo + HW + halo), jnp.float32)],
        compiler_params=pltpu.CompilerParams(
            dimension_semantics=("parallel",)),
    )(*args)
    return out.reshape(N, C0, H, W)


def rdb_reference(x, dense_params, w1x1, b1x1):
    """Pure-JAX NCHW reference matching the PyTorch RDB forward."""
    feat = x
    for w, b in dense_params:
        y = jax.lax.conv_general_dilated(
            feat, w, window_strides=(1, 1), padding="SAME",
            dimension_numbers=("NCHW", "OIHW", "NCHW"),
            precision=jax.lax.Precision.HIGHEST)
        y = jax.nn.relu(y + b.reshape(1, -1, 1, 1))
        feat = jnp.concatenate([feat, y], axis=1)
    out = jnp.einsum("oc,nchw->nohw", w1x1, feat,
                     precision=jax.lax.Precision.HIGHEST)
    out = out + b1x1.reshape(1, -1, 1, 1)
    return out + x


def init_rdb_params(key, in_channels, num_dense_layer, growth_rate):
    dense_params = []
    c = in_channels
    for _ in range(num_dense_layer):
        key, kw, kb = jax.random.split(key, 3)
        w = jax.random.normal(kw, (growth_rate, c, 3, 3), jnp.float32) * 0.1
        b = jax.random.normal(kb, (growth_rate,), jnp.float32) * 0.1
        dense_params.append((w, b))
        c += growth_rate
    key, kw, kb = jax.random.split(key, 3)
    w1x1 = jax.random.normal(kw, (in_channels, c), jnp.float32) * 0.1
    b1x1 = jax.random.normal(kb, (in_channels,), jnp.float32) * 0.1
    return dense_params, w1x1, b1x1


if __name__ == "__main__":
    N, H, W = 2, 16, 16
    in_channels, num_dense_layer, growth_rate = 4, 3, 4

    key = jax.random.PRNGKey(0)
    key, kx = jax.random.split(key)
    x = jax.random.normal(kx, (N, in_channels, H, W), jnp.float32)

    dense_params, w1x1, b1x1 = init_rdb_params(
        key, in_channels, num_dense_layer, growth_rate)

    out = jax.block_until_ready(rdb_forward(x, dense_params, w1x1, b1x1))
    ref = jax.block_until_ready(rdb_reference(x, dense_params, w1x1, b1x1))

    np.testing.assert_allclose(np.asarray(out), np.asarray(ref),
                               rtol=1e-4, atol=1e-4)
    print("KERNEL_OK")
</pallas_src>

<mosaic_0001>
module attributes {stable_mosaic.version = 11 : i64} {
  func.func @_rdb_kernel(%arg0: i32, %arg1: memref<1x4x256xf32, #tpu.memory_space<vmem>>, %arg2: memref<9x4x4xf32, #tpu.memory_space<vmem>>, %arg3: memref<4x1xf32, #tpu.memory_space<vmem>>, %arg4: memref<9x4x8xf32, #tpu.memory_space<vmem>>, %arg5: memref<4x1xf32, #tpu.memory_space<vmem>>, %arg6: memref<9x4x12xf32, #tpu.memory_space<vmem>>, %arg7: memref<4x1xf32, #tpu.memory_space<vmem>>, %arg8: memref<4x16xf32, #tpu.memory_space<vmem>>, %arg9: memref<4x1xf32, #tpu.memory_space<vmem>>, %arg10: memref<1x4x256xf32, #tpu.memory_space<vmem>>, %arg11: memref<16x512xf32, #tpu.memory_space<vmem>>) attributes {dimension_semantics = [#tpu.dimension_semantics<parallel>], iteration_bounds = array<i64: 2>, scalar_prefetch = 0 : i64, scratch_operands = 1 : i64, tpu.core_type = #tpu.core_type<tc>, window_params = [{transform_indices = @transform_0, window_bounds = array<i64: 1, 4, 256>}, {pipeline_mode = #tpu.pipeline_mode<synchronous>, transform_indices = @transform_1, window_bounds = array<i64: 9, 4, 4>}, {pipeline_mode = #tpu.pipeline_mode<synchronous>, transform_indices = @transform_2, window_bounds = array<i64: 4, 1>}, {pipeline_mode = #tpu.pipeline_mode<synchronous>, transform_indices = @transform_3, window_bounds = array<i64: 9, 4, 8>}, {pipeline_mode = #tpu.pipeline_mode<synchronous>, transform_indices = @transform_4, window_bounds = array<i64: 4, 1>}, {pipeline_mode = #tpu.pipeline_mode<synchronous>, transform_indices = @transform_5, window_bounds = array<i64: 9, 4, 12>}, {pipeline_mode = #tpu.pipeline_mode<synchronous>, transform_indices = @transform_6, window_bounds = array<i64: 4, 1>}, {pipeline_mode = #tpu.pipeline_mode<synchronous>, transform_indices = @transform_7, window_bounds = array<i64: 4, 16>}, {pipeline_mode = #tpu.pipeline_mode<synchronous>, transform_indices = @transform_8, window_bounds = array<i64: 4, 1>}, {transform_indices = @transform_9, window_bounds = array<i64: 1, 4, 256>}]} {
    %c0 = arith.constant 0 : index
    %c0_0 = arith.constant 0 : index
    %c0_1 = arith.constant 0 : index
    %0 = vector.load %arg1[%c0, %c0_0, %c0_1] : memref<1x4x256xf32, #tpu.memory_space<vmem>>, vector<1x4x256xf32>
    %1 = vector.shape_cast %0 : vector<1x4x256xf32> to vector<4x256xf32>
    %cst = arith.constant 0.000000e+00 : f32
    %2 = vector.broadcast %cst : f32 to vector<16x128xf32>
    %c0_2 = arith.constant 0 : index
    %c0_3 = arith.constant 0 : index
    %3 = vector.load %arg11[%c0_2, %c0_3] : memref<16x512xf32, #tpu.memory_space<vmem>>, vector<16x128xf32>
    tpu.vector_store %arg11[%c0_2, %c0_3], %2 {strides = array<i32>} : memref<16x512xf32, #tpu.memory_space<vmem>>, vector<16x128xf32>,
    %cst_4 = arith.constant 0.000000e+00 : f32
    %4 = vector.broadcast %cst_4 : f32 to vector<16x128xf32>
    %c0_5 = arith.constant 0 : index
    %c384 = arith.constant 384 : index
    %5 = vector.load %arg11[%c0_5, %c384] : memref<16x512xf32, #tpu.memory_space<vmem>>, vector<16x128xf32>
    tpu.vector_store %arg11[%c0_5, %c384], %4 {strides = array<i32>} : memref<16x512xf32, #tpu.memory_space<vmem>>, vector<16x128xf32>,
    %c0_6 = arith.constant 0 : index
    %c128 = arith.constant 128 : index
    %6 = vector.load %arg11[%c0_6, %c128] : memref<16x512xf32, #tpu.memory_space<vmem>>, vector<4x256xf32>
    tpu.vector_store %arg11[%c0_6, %c128], %1 {strides = array<i32>} : memref<16x512xf32, #tpu.memory_space<vmem>>, vector<4x256xf32>,
    %7 = tpu.iota {dimensions = array<i32: 1>} : vector<1x256xi32>
    %c16_i32 = arith.constant 16 : i32
    %c0_i32 = arith.constant 0 : i32
    %8 = arith.cmpi eq, %c16_i32, %c0_i32 : i32
    %c1_i32 = arith.constant 1 : i32
    %9 = arith.select %8, %c1_i32, %c16_i32 : i32
    %10 = vector.broadcast %9 : i32 to vector<1x256xi32>
    %11 = arith.remsi %7, %10 : vector<1x256xi32>
    %c0_i32_7 = arith.constant 0 : i32
    %12 = vector.broadcast %c0_i32_7 : i32 to vector<1x256xi32>
    %13 = arith.cmpi ne, %11, %12 : vector<1x256xi32>
    %c0_i32_8 = arith.constant 0 : i32
    %14 = vector.broadcast %c0_i32_8 : i32 to vector<1x256xi32>
    %15 = arith.cmpi slt, %11, %14 : vector<1x256xi32>
    %c0_i32_9 = arith.constant 0 : i32
    %16 = arith.cmpi slt, %9, %c0_i32_9 : i32
    %17 = vector.broadcast %16 : i1 to vector<1x256xi1>
    %18 = vector.broadcast %17 : vector<1x256xi1> to vector<1x256xi1>
    %19 = arith.xori %15, %18 : vector<1x256xi1>
    %20 = arith.andi %19, %13 : vector<1x256xi1>
    %21 = vector.broadcast %9 : i32 to vector<1x256xi32>
    %22 = arith.addi %11, %21 : vector<1x256xi32>
    %23 = arith.select %20, %22, %11 : vector<1x256xi1>, vector<1x256xi32>
    %c1_i32_10 = arith.constant 1 : i32
    %24 = vector.broadcast %c1_i32_10 : i32 to vector<1x256xi32>
    %25 = arith.cmpi sge, %23, %24 : vector<1x256xi32>
    %c14_i32 = arith.constant 14 : i32
    %26 = vector.broadcast %c14_i32 : i32 to vector<1x256xi32>
    %27 = arith.cmpi sle, %23, %26 : vector<1x256xi32>
    %cst_11 = arith.constant 0.000000e+00 : f32
    %28 = vector.broadcast %cst_11 : f32 to vector<4x256xf32>
    %cst_12 = arith.constant 0.000000e+00 : f32
    %29 = vector.broadcast %cst_12 : f32 to vector<4x256xf32>
    %c0_13 = arith.constant 0 : index
    %c111 = arith.constant 111 : index
    %30 = vector.load %arg11[%c0_13, %c111] : memref<16x512xf32, #tpu.memory_space<vmem>>, vector<4x256xf32>
    %c0_14 = arith.constant 0 : index
    %c0_15 = arith.constant 0 : index
    %c0_16 = arith.constant 0 : index
    %31 = vector.load %arg2[%c0_14, %c0_15, %c0_16] : memref<9x4x4xf32, #tpu.memory_space<vmem>>, vector<1x4x4xf32>
    %32 = vector.shape_cast %31 : vector<1x4x4xf32> to vector<4x4xf32>
    %cst_17 = arith.constant dense<0.000000e+00> : vector<4x256xf32>
    %33 = tpu.matmul %32, %30, %cst_17 {dimension_numbers = #tpu.dot_dimension_numbers<[1], [0], [0], [1], [0, 0, 1, 1], [], []>} : vector<4x4xf32>, vector<4x256xf32>, vector<4x256xf32> -> vector<4x256xf32>
    %34 = arith.addf %29, %33 : vector<4x256xf32>
    %c0_18 = arith.constant 0 : index
    %c127 = arith.constant 127 : index
    %35 = vector.load %arg11[%c0_18, %c127] : memref<16x512xf32, #tpu.memory_space<vmem>>, vector<4x256xf32>
    %c3 = arith.constant 3 : index
    %c0_19 = arith.constant 0 : index
    %c0_20 = arith.constant 0 : index
    %36 = vector.load %arg2[%c3, %c0_19, %c0_20] : memref<9x4x4xf32, #tpu.memory_space<vmem>>, vector<1x4x4xf32>
    %37 = vector.shape_cast %36 : vector<1x4x4xf32> to vector<4x4xf32>
    %cst_21 = arith.constant dense<0.000000e+00> : vector<4x256xf32>
    %38 = tpu.matmul %37, %35, %cst_21 {dimension_numbers = #tpu.dot_dimension_numbers<[1], [0], [0], [1], [0, 0, 1, 1], [], []>} : vector<4x4xf32>, vector<4x256xf32>, vector<4x256xf32> -> vector<4x256xf32>
    %39 = arith.addf %34, %38 : vector<4x256xf32>
    %c0_22 = arith.constant 0 : index
    %c143 = arith.constant 143 : index
    %40 = vector.load %arg11[%c0_22, %c143] : memref<16x512xf32, #tpu.memory_space<vmem>>, vector<4x256xf32>
    %c6 = arith.constant 6 : index
    %c0_23 = arith.constant 0 : index
    %c0_24 = arith.constant 0 : index
    %41 = vector.load %arg2[%c6, %c0_23, %c0_24] : memref<9x4x4xf32, #tpu.memory_space<vmem>>, vector<1x4x4xf32>
    %42 = vector.shape_cast %41 : vector<1x4x4xf32> to vector<4x4xf32>
    %cst_25 = arith.constant dense<0.000000e+00> : vector<4x256xf32>
    %43 = tpu.matmul %42, %40, %cst_25 {dimension_numbers = #tpu.dot_dimension_numbers<[1], [0], [0], [1], [0, 0, 1, 1], [], []>} : vector<4x4xf32>, vector<4x256xf32>, vector<4x256xf32> -> vector<4x256xf32>
    %44 = arith.addf %39, %43 : vector<4x256xf32>
    %cst_26 = arith.constant 0.000000e+00 : f32
    %45 = vector.shape_cast %25 : vector<1x256xi1> to vector<1x256xi1>
    %46 = vector.broadcast %45 : vector<1x256xi1> to vector<4x256xi1>
    %47 = vector.broadcast %cst_26 : f32 to vector<4x256xf32>
    %48 = arith.select %46, %44, %47 : vector<4x256xi1>, vector<4x256xf32>
    %49 = arith.addf %28, %48 : vector<4x256xf32>
    %cst_27 = arith.constant 0.000000e+00 : f32
    %50 = vector.broadcast %cst_27 : f32 to vector<4x256xf32>
    %c0_28 = arith.constant 0 : index
    %c112 = arith.constant 112 : index
    %51 = vector.load %arg11[%c0_28, %c112] : memref<16x512xf32, #tpu.memory_space<vmem>>, vector<4x256xf32>
    %c1 = arith.constant 1 : index
    %c0_29 = arith.constant 0 : index
    %c0_30 = arith.constant 0 : index
    %52 = vector.load %arg2[%c1, %c0_29, %c0_30] : memref<9x4x4xf32, #tpu.memory_space<vmem>>, vector<1x4x4xf32>
    %53 = vector.shape_cast %52 : vector<1x4x4xf32> to vector<4x4xf32>
    %cst_31 = arith.constant dense<0.000000e+00> : vector<4x256xf32>
    %54 = tpu.matmul %53, %51, %cst_31 {dimension_numbers = #tpu.dot_dimension_numbers<[1], [0], [0], [1], [0, 0, 1, 1], [], []>} : vector<4x4xf32>, vector<4x256xf32>, vector<4x256xf32> -> vector<4x256xf32>
    %55 = arith.addf %50, %54 : vector<4x256xf32>
    %c0_32 = arith.constant 0 : index
    %c128_33 = arith.constant 128 : index
    %56 = vector.load %arg11[%c0_32, %c128_33] : memref<16x512xf32, #tpu.memory_space<vmem>>, vector<4x256xf32>
    %c4 = arith.constant 4 : index
    %c0_34 = arith.constant 0 : index
    %c0_35 = arith.constant 0 : index
    %57 = vector.load %arg2[%c4, %c0_34, %c0_35] : memref<9x4x4xf32, #tpu.memory_space<vmem>>, vector<1x4x4xf32>
    %58 = vector.shape_cast %57 : vector<1x4x4xf32> to vector<4x4xf32>
    %cst_36 = arith.constant dense<0.000000e+00> : vector<4x256xf32>
    %59 = tpu.matmul %58, %56, %cst_36 {dimension_numbers = #tpu.dot_dimension_numbers<[1], [0], [0], [1], [0, 0, 1, 1], [], []>} : vector<4x4xf32>, vector<4x256xf32>, vector<4x256xf32> -> vector<4x256xf32>
    %60 = arith.addf %55, %59 : vector<4x256xf32>
    %c0_37 = arith.constant 0 : index
    %c144 = arith.constant 144 : index
    %61 = vector.load %arg11[%c0_37, %c144] : memref<16x512xf32, #tpu.memory_space<vmem>>, vector<4x256xf32>
    %c7 = arith.constant 7 : index
    %c0_38 = arith.constant 0 : index
    %c0_39 = arith.constant 0 : index
    %62 = vector.load %arg2[%c7, %c0_38, %c0_39] : memref<9x4x4xf32, #tpu.memory_space<vmem>>, vector<1x4x4xf32>
    %63 = vector.shape_cast %62 : vector<1x4x4xf32> to vector<4x4xf32>
    %cst_40 = arith.constant dense<0.000000e+00> : vector<4x256xf32>
    %64 = tpu.matmul %63, %61, %cst_40 {dimension_numbers = #tpu.dot_dimension_numbers<[1], [0], [0], [1], [0, 0, 1, 1], [], []>} : vector<4x4xf32>, vector<4x256xf32>, vector<4x256xf32> -> vector<4x256xf32>
    %65 = arith.addf %60, %64 : vector<4x256xf32>
    %66 = arith.addf %49, %65 : vector<4x256xf32>
    %cst_41 = arith.constant 0.000000e+00 : f32
    %67 = vector.broadcast %cst_41 : f32 to vector<4x256xf32>
    %c0_42 = arith.constant 0 : index
    %c113 = arith.constant 113 : index
    %68 = vector.load %arg11[%c0_42, %c113] : memref<16x512xf32, #tpu.memory_space<vmem>>, vector<4x256xf32>
    %c2 = arith.constant 2 : index
    %c0_43 = arith.constant 0 : index
    %c0_44 = arith.constant 0 : index
    %69 = vector.load %arg2[%c2, %c0_43, %c0_44] : memref<9x4x4xf32, #tpu.memory_space<vmem>>, vector<1x4x4xf32>
    %70 = vector.shape_cast %69 : vector<1x4x4xf32> to vector<4x4xf32>
    %cst_45 = arith.constant dense<0.000000e+00> : vector<4x256xf32>
    %71 = tpu.matmul %70, %68, %cst_45 {dimension_numbers = #tpu.dot_dimension_numbers<[1], [0], [0], [1], [0, 0, 1, 1], [], []>} : vector<4x4xf32>, vector<4x256xf32>, vector<4x256xf32> -> vector<4x256xf32>
    %72 = arith.addf %67, %71 : vector<4x256xf32>
    %c0_46 = arith.constant 0 : index
    %c129 = arith.constant 129 : index
    %73 = vector.load %arg11[%c0_46, %c129] : memref<16x512xf32, #tpu.memory_space<vmem>>, vector<4x256xf32>
    %c5 = arith.constant 5 : index
    %c0_47 = arith.constant 0 : index
    %c0_48 = arith.constant 0 : index
    %74 = vector.load %arg2[%c5, %c0_47, %c0_48] : memref<9x4x4xf32, #tpu.memory_space<vmem>>, vector<1x4x4xf32>
    %75 = vector.shape_cast %74 : vector<1x4x4xf32> to vector<4x4xf32>
    %cst_49 = arith.constant dense<0.000000e+00> : vector<4x256xf32>
    %76 = tpu.matmul %75, %73, %cst_49 {dimension_numbers = #tpu.dot_dimension_numbers<[1], [0], [0], [1], [0, 0, 1, 1], [], []>} : vector<4x4xf32>, vector<4x256xf32>, vector<4x256xf32> -> vector<4x256xf32>
    %77 = arith.addf %72, %76 : vector<4x256xf32>
    %c0_50 = arith.constant 0 : index
    %c145 = arith.constant 145 : index
    %78 = vector.load %arg11[%c0_50, %c145] : memref<16x512xf32, #tpu.memory_space<vmem>>, vector<4x256xf32>
    %c8 = arith.constant 8 : index
    %c0_51 = arith.constant 0 : index
    %c0_52 = arith.constant 0 : index
    %79 = vector.load %arg2[%c8, %c0_51, %c0_52] : memref<9x4x4xf32, #tpu.memory_space<vmem>>, vector<1x4x4xf32>
    %80 = vector.shape_cast %79 : vector<1x4x4xf32> to vector<4x4xf32>
    %cst_53 = arith.constant dense<0.000000e+00> : vector<4x256xf32>
    %81 = tpu.matmul %80, %78, %cst_53 {dimension_numbers = #tpu.dot_dimension_numbers<[1], [0], [0], [1], [0, 0, 1, 1], [], []>} : vector<4x4xf32>, vector<4x256xf32>, vector<4x256xf32> -> vector<4x256xf32>
    %82 = arith.addf %77, %81 : vector<4x256xf32>
    %cst_54 = arith.constant 0.000000e+00 : f32
    %83 = vector.shape_cast %27 : vector<1x256xi1> to vector<1x256xi1>
    %84 = vector.broadcast %83 : vector<1x256xi1> to vector<4x256xi1>
    %85 = vector.broadcast %cst_54 : f32 to vector<4x256xf32>
    %86 = arith.select %84, %82, %85 : vector<4x256xi1>, vector<4x256xf32>
    %87 = arith.addf %66, %86 : vector<4x256xf32>
    %c0_55 = arith.constant 0 : index
    %c0_56 = arith.constant 0 : index
    %88 = vector.load %arg3[%c0_55, %c0_56] : memref<4x1xf32, #tpu.memory_space<vmem>>, vector<4x1xf32>
    %89 = vector.broadcast %88 : vector<4x1xf32> to vector<4x256xf32>
    %90 = arith.addf %87, %89 : vector<4x256xf32>
    %cst_57 = arith.constant 0.000000e+00 : f32
    %91 = vector.broadcast %cst_57 : f32 to vector<4x256xf32>
    %92 = arith.maximumf %90, %91 : vector<4x256xf32>
    %c4_58 = arith.constant 4 : index
    %c128_59 = arith.constant 128 : index
    %93 = vector.load %arg11[%c4_58, %c128_59] : memref<16x512xf32, #tpu.memory_space<vmem>>, vector<4x256xf32>
    tpu.vector_store %arg11[%c4_58, %c128_59], %92 {strides = array<i32>} : memref<16x512xf32, #tpu.memory_space<vmem>>, vector<4x256xf32>,
    %cst_60 = arith.constant 0.000000e+00 : f32
    %94 = vector.broadcast %cst_60 : f32 to vector<4x256xf32>
    %cst_61 = arith.constant 0.000000e+00 : f32
    %95 = vector.broadcast %cst_61 : f32 to vector<4x256xf32>
    %c0_62 = arith.constant 0 : index
    %c111_63 = arith.constant 111 : index
    %96 = vector.load %arg11[%c0_62, %c111_63] : memref<16x512xf32, #tpu.memory_space<vmem>>, vector<8x256xf32>
    %c0_64 = arith.constant 0 : index
    %c0_65 = arith.constant 0 : index
    %c0_66 = arith.constant 0 : index
    %97 = vector.load %arg4[%c0_64, %c0_65, %c0_66] : memref<9x4x8xf32, #tpu.memory_space<vmem>>, vector<1x4x8xf32>
    %98 = vector.shape_cast %97 : vector<1x4x8xf32> to vector<4x8xf32>
    %cst_67 = arith.constant dense<0.000000e+00> : vector<4x256xf32>
    %99 = tpu.matmul %98, %96, %cst_67 {dimension_numbers = #tpu.dot_dimension_numbers<[1], [0], [0], [1], [0, 0, 1, 1], [], []>} : vector<4x8xf32>, vector<8x256xf32>, vector<4x256xf32> -> vector<4x256xf32>
    %100 = arith.addf %95, %99 : vector<4x256xf32>
    %c0_68 = arith.constant 0 : index
    %c127_69 = arith.constant 127 : index
    %101 = vector.load %arg11[%c0_68, %c127_69] : memref<16x512xf32, #tpu.memory_space<vmem>>, vector<8x256xf32>
    %c3_70 = arith.constant 3 : index
    %c0_71 = arith.constant 0 : index
    %c0_72 = arith.constant 0 : index
    %102 = vector.load %arg4[%c3_70, %c0_71, %c0_72] : memref<9x4x8xf32, #tpu.memory_space<vmem>>, vector<1x4x8xf32>
    %103 = vector.shape_cast %102 : vector<1x4x8xf32> to vector<4x8xf32>
    %cst_73 = arith.constant dense<0.000000e+00> : vector<4x256xf32>
    %104 = tpu.matmul %103, %101, %cst_73 {dimension_numbers = #tpu.dot_dimension_numbers<[1], [0], [0], [1], [0, 0, 1, 1], [], []>} : vector<4x8xf32>, vector<8x256xf32>, vector<4x256xf32> -> vector<4x256xf32>
    %105 = arith.addf %100, %104 : vector<4x256xf32>
    %c0_74 = arith.constant 0 : index
    %c143_75 = arith.constant 143 : index
    %106 = vector.load %arg11[%c0_74, %c143_75] : memref<16x512xf32, #tpu.memory_space<vmem>>, vector<8x256xf32>
    %c6_76 = arith.constant 6 : index
    %c0_77 = arith.constant 0 : index
    %c0_78 = arith.constant 0 : index
    %107 = vector.load %arg4[%c6_76, %c0_77, %c0_78] : memref<9x4x8xf32, #tpu.memory_space<vmem>>, vector<1x4x8xf32>
    %108 = vector.shape_cast %107 : vector<1x4x8xf32> to vector<4x8xf32>
    %cst_79 = arith.constant dense<0.000000e+00> : vector<4x256xf32>
    %109 = tpu.matmul %108, %106, %cst_79 {dimension_numbers = #tpu.dot_dimension_numbers<[1], [0], [0], [1], [0, 0, 1, 1], [], []>} : vector<4x8xf32>, vector<8x256xf32>, vector<4x256xf32> -> vector<4x256xf32>
    %110 = arith.addf %105, %109 : vector<4x256xf32>
    %cst_80 = arith.constant 0.000000e+00 : f32
    %111 = vector.shape_cast %25 : vector<1x256xi1> to vector<1x256xi1>
    %112 = vector.broadcast %111 : vector<1x256xi1> to vector<4x256xi1>
    %113 = vector.broadcast %cst_80 : f32 to vector<4x256xf32>
    %114 = arith.select %112, %110, %113 : vector<4x256xi1>, vector<4x256xf32>
    %115 = arith.addf %94, %114 : vector<4x256xf32>
    %cst_81 = arith.constant 0.000000e+00 : f32
    %116 = vector.broadcast %cst_81 : f32 to vector<4x256xf32>
    %c0_82 = arith.constant 0 : index
    %c112_83 = arith.constant 112 : index
    %117 = vector.load %arg11[%c0_82, %c112_83] : memref<16x512xf32, #tpu.memory_space<vmem>>, vector<8x256xf32>
    %c1_84 = arith.constant 1 : index
    %c0_85 = arith.constant 0 : index
    %c0_86 = arith.constant 0 : index
    %118 = vector.load %arg4[%c1_84, %c0_85, %c0_86] : memref<9x4x8xf32, #tpu.memory_space<vmem>>, vector<1x4x8xf32>
    %119 = vector.shape_cast %118 : vector<1x4x8xf32> to vector<4x8xf32>
    %cst_87 = arith.constant dense<0.000000e+00> : vector<4x256xf32>
    %120 = tpu.matmul %119, %117, %cst_87 {dimension_numbers = #tpu.dot_dimension_numbers<[1], [0], [0], [1], [0, 0, 1, 1], [], []>} : vector<4x8xf32>, vector<8x256xf32>, vector<4x256xf32> -> vector<4x256xf32>
    %121 = arith.addf %116, %120 : vector<4x256xf32>
    %c0_88 = arith.constant 0 : index
    %c128_89 = arith.constant 128 : index
    %122 = vector.load %arg11[%c0_88, %c128_89] : memref<16x512xf32, #tpu.memory_space<vmem>>, vector<8x256xf32>
    %c4_90 = arith.constant 4 : index
    %c0_91 = arith.constant 0 : index
    %c0_92 = arith.constant 0 : index
    %123 = vector.load %arg4[%c4_90, %c0_91, %c0_92] : memref<9x4x8xf32, #tpu.memory_space<vmem>>, vector<1x4x8xf32>
    %124 = vector.shape_cast %123 : vector<1x4x8xf32> to vector<4x8xf32>
    %cst_93 = arith.constant dense<0.000000e+00> : vector<4x256xf32>
    %125 = tpu.matmul %124, %122, %cst_93 {dimension_numbers = #tpu.dot_dimension_numbers<[1], [0], [0], [1], [0, 0, 1, 1], [], []>} : vector<4x8xf32>, vector<8x256xf32>, vector<4x256xf32> -> vector<4x256xf32>
    %126 = arith.addf %121, %125 : vector<4x256xf32>
    %c0_94 = arith.constant 0 : index
    %c144_95 = arith.constant 144 : index
    %127 = vector.load %arg11[%c0_94, %c144_95] : memref<16x512xf32, #tpu.memory_space<vmem>>, vector<8x256xf32>
    %c7_96 = arith.constant 7 : index
    %c0_97 = arith.constant 0 : index
    %c0_98 = arith.constant 0 : index
    %128 = vector.load %arg4[%c7_96, %c0_97, %c0_98] : memref<9x4x8xf32, #tpu.memory_space<vmem>>, vector<1x4x8xf32>
    %129 = vector.shape_cast %128 : vector<1x4x8xf32> to vector<4x8xf32>
    %cst_99 = arith.constant dense<0.000000e+00> : vector<4x256xf32>
    %130 = tpu.matmul %129, %127, %cst_99 {dimension_numbers = #tpu.dot_dimension_numbers<[1], [0], [0], [1], [0, 0, 1, 1], [], []>} : vector<4x8xf32>, vector<8x256xf32>, vector<4x256xf32> -> vector<4x256xf32>
    %131 = arith.addf %126, %130 : vector<4x256xf32>
    %132 = arith.addf %115, %131 : vector<4x256xf32>
    %cst_100 = arith.constant 0.000000e+00 : f32
    %133 = vector.broadcast %cst_100 : f32 to vector<4x256xf32>
    %c0_101 = arith.constant 0 : index
    %c113_102 = arith.constant 113 : index
    %134 = vector.load %arg11[%c0_101, %c113_102] : memref<16x512xf32, #tpu.memory_space<vmem>>, vector<8x256xf32>
    %c2_103 = arith.constant 2 : index
    %c0_104 = arith.constant 0 : index
    %c0_105 = arith.constant 0 : index
    %135 = vector.load %arg4[%c2_103, %c0_104, %c0_105] : memref<9x4x8xf32, #tpu.memory_space<vmem>>, vector<1x4x8xf32>
    %136 = vector.shape_cast %135 : vector<1x4x8xf32> to vector<4x8xf32>
    %cst_106 = arith.constant dense<0.000000e+00> : vector<4x256xf32>
    %137 = tpu.matmul %136, %134, %cst_106 {dimension_numbers = #tpu.dot_dimension_numbers<[1], [0], [0], [1], [0, 0, 1, 1], [], []>} : vector<4x8xf32>, vector<8x256xf32>, vector<4x256xf32> -> vector<4x256xf32>
    %138 = arith.addf %133, %137 : vector<4x256xf32>
    %c0_107 = arith.constant 0 : index
    %c129_108 = arith.constant 129 : index
    %139 = vector.load %arg11[%c0_107, %c129_108] : memref<16x512xf32, #tpu.memory_space<vmem>>, vector<8x256xf32>
    %c5_109 = arith.constant 5 : index
    %c0_110 = arith.constant 0 : index
    %c0_111 = arith.constant 0 : index
    %140 = vector.load %arg4[%c5_109, %c0_110, %c0_111] : memref<9x4x8xf32, #tpu.memory_space<vmem>>, vector<1x4x8xf32>
    %141 = vector.shape_cast %140 : vector<1x4x8xf32> to vector<4x8xf32>
    %cst_112 = arith.constant dense<0.000000e+00> : vector<4x256xf32>
    %142 = tpu.matmul %141, %139, %cst_112 {dimension_numbers = #tpu.dot_dimension_numbers<[1], [0], [0], [1], [0, 0, 1, 1], [], []>} : vector<4x8xf32>, vector<8x256xf32>, vector<4x256xf32> -> vector<4x256xf32>
    %143 = arith.addf %138, %142 : vector<4x256xf32>
    %c0_113 = arith.constant 0 : index
    %c145_114 = arith.constant 145 : index
    %144 = vector.load %arg11[%c0_113, %c145_114] : memref<16x512xf32, #tpu.memory_space<vmem>>, vector<8x256xf32>
    %c8_115 = arith.constant 8 : index
    %c0_116 = arith.constant 0 : index
    %c0_117 = arith.constant 0 : index
    %145 = vector.load %arg4[%c8_115, %c0_116, %c0_117] : memref<9x4x8xf32, #tpu.memory_space<vmem>>, vector<1x4x8xf32>
    %146 = vector.shape_cast %145 : vector<1x4x8xf32> to vector<4x8xf32>
    %cst_118 = arith.constant dense<0.000000e+00> : vector<4x256xf32>
    %147 = tpu.matmul %146, %144, %cst_118 {dimension_numbers = #tpu.dot_dimension_numbers<[1], [0], [0], [1], [0, 0, 1, 1], [], []>} : vector<4x8xf32>, vector<8x256xf32>, vector<4x256xf32> -> vector<4x256xf32>
    %148 = arith.addf %143, %147 : vector<4x256xf32>
    %cst_119 = arith.constant 0.000000e+00 : f32
    %149 = vector.shape_cast %27 : vector<1x256xi1> to vector<1x256xi1>
    %150 = vector.broadcast %149 : vector<1x256xi1> to vector<4x256xi1>
    %151 = vector.broadcast %cst_119 : f32 to vector<4x256xf32>
    %152 = arith.select %150, %148, %151 : vector<4x256xi1>, vector<4x256xf32>
    %153 = arith.addf %132, %152 : vector<4x256xf32>
    %c0_120 = arith.constant 0 : index
    %c0_121 = arith.constant 0 : index
    %154 = vector.load %arg5[%c0_120, %c0_121] : memref<4x1xf32, #tpu.memory_space<vmem>>, vector<4x1xf32>
    %155 = vector.broadcast %154 : vector<4x1xf32> to vector<4x256xf32>
    %156 = arith.addf %153, %155 : vector<4x256xf32>
    %cst_122 = arith.constant 0.000000e+00 : f32
    %157 = vector.broadcast %cst_122 : f32 to vector<4x256xf32>
    %158 = arith.maximumf %156, %157 : vector<4x256xf32>
    %c8_123 = arith.constant 8 : index
    %c128_124 = arith.constant 128 : index
    %159 = vector.load %arg11[%c8_123, %c128_124] : memref<16x512xf32, #tpu.memory_space<vmem>>, vector<4x256xf32>
    tpu.vector_store %arg11[%c8_123, %c128_124], %158 {strides = array<i32>} : memref<16x512xf32, #tpu.memory_space<vmem>>, vector<4x256xf32>,
    %cst_125 = arith.constant 0.000000e+00 : f32
    %160 = vector.broadcast %cst_125 : f32 to vector<4x256xf32>
    %cst_126 = arith.constant 0.000000e+00 : f32
    %161 = vector.broadcast %cst_126 : f32 to vector<4x256xf32>
    %c0_127 = arith.constant 0 : index
    %c111_128 = arith.constant 111 : index
    %162 = vector.load %arg11[%c0_127, %c111_128] : memref<16x512xf32, #tpu.memory_space<vmem>>, vector<12x256xf32>
    %c0_129 = arith.constant 0 : index
    %c0_130 = arith.constant 0 : index
    %c0_131 = arith.constant 0 : index
    %163 = vector.load %arg6[%c0_129, %c0_130, %c0_131] : memref<9x4x12xf32, #tpu.memory_space<vmem>>, vector<1x4x12xf32>
    %164 = vector.shape_cast %163 : vector<1x4x12xf32> to vector<4x12xf32>
    %cst_132 = arith.constant dense<0.000000e+00> : vector<4x256xf32>
    %165 = tpu.matmul %164, %162, %cst_132 {dimension_numbers = #tpu.dot_dimension_numbers<[1], [0], [0], [1], [0, 0, 1, 1], [], []>} : vector<4x12xf32>, vector<12x256xf32>, vector<4x256xf32> -> vector<4x256xf32>
    %166 = arith.addf %161, %165 : vector<4x256xf32>
    %c0_133 = arith.constant 0 : index
    %c127_134 = arith.constant 127 : index
    %167 = vector.load %arg11[%c0_133, %c127_134] : memref<16x512xf32, #tpu.memory_space<vmem>>, vector<12x256xf32>
    %c3_135 = arith.constant 3 : index
    %c0_136 = arith.constant 0 : index
    %c0_137 = arith.constant 0 : index
    %168 = vector.load %arg6[%c3_135, %c0_136, %c0_137] : memref<9x4x12xf32, #tpu.memory_space<vmem>>, vector<1x4x12xf32>
    %169 = vector.shape_cast %168 : vector<1x4x12xf32> to vector<4x12xf32>
    %cst_138 = arith.constant dense<0.000000e+00> : vector<4x256xf32>
    %170 = tpu.matmul %169, %167, %cst_138 {dimension_numbers = #tpu.dot_dimension_numbers<[1], [0], [0], [1], [0, 0, 1, 1], [], []>} : vector<4x12xf32>, vector<12x256xf32>, vector<4x256xf32> -> vector<4x256xf32>
    %171 = arith.addf %166, %170 : vector<4x256xf32>
    %c0_139 = arith.constant 0 : index
    %c143_140 = arith.constant 143 : index
    %172 = vector.load %arg11[%c0_139, %c143_140] : memref<16x512xf32, #tpu.memory_space<vmem>>, vector<12x256xf32>
    %c6_141 = arith.constant 6 : index
    %c0_142 = arith.constant 0 : index
    %c0_143 = arith.constant 0 : index
    %173 = vector.load %arg6[%c6_141, %c0_142, %c0_143] : memref<9x4x12xf32, #tpu.memory_space<vmem>>, vector<1x4x12xf32>
    %174 = vector.shape_cast %173 : vector<1x4x12xf32> to vector<4x12xf32>
    %cst_144 = arith.constant dense<0.000000e+00> : vector<4x256xf32>
    %175 = tpu.matmul %174, %172, %cst_144 {dimension_numbers = #tpu.dot_dimension_numbers<[1], [0], [0], [1], [0, 0, 1, 1], [], []>} : vector<4x12xf32>, vector<12x256xf32>, vector<4x256xf32> -> vector<4x256xf32>
    %176 = arith.addf %171, %175 : vector<4x256xf32>
    %cst_145 = arith.constant 0.000000e+00 : f32
    %177 = vector.shape_cast %25 : vector<1x256xi1> to vector<1x256xi1>
    %178 = vector.broadcast %177 : vector<1x256xi1> to vector<4x256xi1>
    %179 = vector.broadcast %cst_145 : f32 to vector<4x256xf32>
    %180 = arith.select %178, %176, %179 : vector<4x256xi1>, vector<4x256xf32>
    %181 = arith.addf %160, %180 : vector<4x256xf32>
    %cst_146 = arith.constant 0.000000e+00 : f32
    %182 = vector.broadcast %cst_146 : f32 to vector<4x256xf32>
    %c0_147 = arith.constant 0 : index
    %c112_148 = arith.constant 112 : index
    %183 = vector.load %arg11[%c0_147, %c112_148] : memref<16x512xf32, #tpu.memory_space<vmem>>, vector<12x256xf32>
    %c1_149 = arith.constant 1 : index
    %c0_150 = arith.constant 0 : index
    %c0_151 = arith.constant 0 : index
    %184 = vector.load %arg6[%c1_149, %c0_150, %c0_151] : memref<9x4x12xf32, #tpu.memory_space<vmem>>, vector<1x4x12xf32>
    %185 = vector.shape_cast %184 : vector<1x4x12xf32> to vector<4x12xf32>
    %cst_152 = arith.constant dense<0.000000e+00> : vector<4x256xf32>
    %186 = tpu.matmul %185, %183, %cst_152 {dimension_numbers = #tpu.dot_dimension_numbers<[1], [0], [0], [1], [0, 0, 1, 1], [], []>} : vector<4x12xf32>, vector<12x256xf32>, vector<4x256xf32> -> vector<4x256xf32>
    %187 = arith.addf %182, %186 : vector<4x256xf32>
    %c0_153 = arith.constant 0 : index
    %c128_154 = arith.constant 128 : index
    %188 = vector.load %arg11[%c0_153, %c128_154] : memref<16x512xf32, #tpu.memory_space<vmem>>, vector<12x256xf32>
    %c4_155 = arith.constant 4 : index
    %c0_156 = arith.constant 0 : index
    %c0_157 = arith.constant 0 : index
    %189 = vector.load %arg6[%c4_155, %c0_156, %c0_157] : memref<9x4x12xf32, #tpu.memory_space<vmem>>, vector<1x4x12xf32>
    %190 = vector.shape_cast %189 : vector<1x4x12xf32> to vector<4x12xf32>
    %cst_158 = arith.constant dense<0.000000e+00> : vector<4x256xf32>
    %191 = tpu.matmul %190, %188, %cst_158 {dimension_numbers = #tpu.dot_dimension_numbers<[1], [0], [0], [1], [0, 0, 1, 1], [], []>} : vector<4x12xf32>, vector<12x256xf32>, vector<4x256xf32> -> vector<4x256xf32>
    %192 = arith.addf %187, %191 : vector<4x256xf32>
    %c0_159 = arith.constant 0 : index
    %c144_160 = arith.constant 144 : index
    %193 = vector.load %arg11[%c0_159, %c144_160] : memref<16x512xf32, #tpu.memory_space<vmem>>, vector<12x256xf32>
    %c7_161 = arith.constant 7 : index
    %c0_162 = arith.constant 0 : index
    %c0_163 = arith.constant 0 : index
    %194 = vector.load %arg6[%c7_161, %c0_162, %c0_163] : memref<9x4x12xf32, #tpu.memory_space<vmem>>, vector<1x4x12xf32>
    %195 = vector.shape_cast %194 : vector<1x4x12xf32> to vector<4x12xf32>
    %cst_164 = arith.constant dense<0.000000e+00> : vector<4x256xf32>
    %196 = tpu.matmul %195, %193, %cst_164 {dimension_numbers = #tpu.dot_dimension_numbers<[1], [0], [0], [1], [0, 0, 1, 1], [], []>} : vector<4x12xf32>, vector<12x256xf32>, vector<4x256xf32> -> vector<4x256xf32>
    %197 = arith.addf %192, %196 : vector<4x256xf32>
    %198 = arith.addf %181, %197 : vector<4x256xf32>
    %cst_165 = arith.constant 0.000000e+00 : f32
    %199 = vector.broadcast %cst_165 : f32 to vector<4x256xf32>
    %c0_166 = arith.constant 0 : index
    %c113_167 = arith.constant 113 : index
    %200 = vector.load %arg11[%c0_166, %c113_167] : memref<16x512xf32, #tpu.memory_space<vmem>>, vector<12x256xf32>
    %c2_168 = arith.constant 2 : index
    %c0_169 = arith.constant 0 : index
    %c0_170 = arith.constant 0 : index
    %201 = vector.load %arg6[%c2_168, %c0_169, %c0_170] : memref<9x4x12xf32, #tpu.memory_space<vmem>>, vector<1x4x12xf32>
    %202 = vector.shape_cast %201 : vector<1x4x12xf32> to vector<4x12xf32>
    %cst_171 = arith.constant dense<0.000000e+00> : vector<4x256xf32>
    %203 = tpu.matmul %202, %200, %cst_171 {dimension_numbers = #tpu.dot_dimension_numbers<[1], [0], [0], [1], [0, 0, 1, 1], [], []>} : vector<4x12xf32>, vector<12x256xf32>, vector<4x256xf32> -> vector<4x256xf32>
    %204 = arith.addf %199, %203 : vector<4x256xf32>
    %c0_172 = arith.constant 0 : index
    %c129_173 = arith.constant 129 : index
    %205 = vector.load %arg11[%c0_172, %c129_173] : memref<16x512xf32, #tpu.memory_space<vmem>>, vector<12x256xf32>
    %c5_174 = arith.constant 5 : index
    %c0_175 = arith.constant 0 : index
    %c0_176 = arith.constant 0 : index
    %206 = vector.load %arg6[%c5_174, %c0_175, %c0_176] : memref<9x4x12xf32, #tpu.memory_space<vmem>>, vector<1x4x12xf32>
    %207 = vector.shape_cast %206 : vector<1x4x12xf32> to vector<4x12xf32>
    %cst_177 = arith.constant dense<0.000000e+00> : vector<4x256xf32>
    %208 = tpu.matmul %207, %205, %cst_177 {dimension_numbers = #tpu.dot_dimension_numbers<[1], [0], [0], [1], [0, 0, 1, 1], [], []>} : vector<4x12xf32>, vector<12x256xf32>, vector<4x256xf32> -> vector<4x256xf32>
    %209 = arith.addf %204, %208 : vector<4x256xf32>
    %c0_178 = arith.constant 0 : index
    %c145_179 = arith.constant 145 : index
    %210 = vector.load %arg11[%c0_178, %c145_179] : memref<16x512xf32, #tpu.memory_space<vmem>>, vector<12x256xf32>
    %c8_180 = arith.constant 8 : index
    %c0_181 = arith.constant 0 : index
    %c0_182 = arith.constant 0 : index
    %211 = vector.load %arg6[%c8_180, %c0_181, %c0_182] : memref<9x4x12xf32, #tpu.memory_space<vmem>>, vector<1x4x12xf32>
    %212 = vector.shape_cast %211 : vector<1x4x12xf32> to vector<4x12xf32>
    %cst_183 = arith.constant dense<0.000000e+00> : vector<4x256xf32>
    %213 = tpu.matmul %212, %210, %cst_183 {dimension_numbers = #tpu.dot_dimension_numbers<[1], [0], [0], [1], [0, 0, 1, 1], [], []>} : vector<4x12xf32>, vector<12x256xf32>, vector<4x256xf32> -> vector<4x256xf32>
    %214 = arith.addf %209, %213 : vector<4x256xf32>
    %cst_184 = arith.constant 0.000000e+00 : f32
    %215 = vector.shape_cast %27 : vector<1x256xi1> to vector<1x256xi1>
    %216 = vector.broadcast %215 : vector<1x256xi1> to vector<4x256xi1>
    %217 = vector.broadcast %cst_184 : f32 to vector<4x256xf32>
    %218 = arith.select %216, %214, %217 : vector<4x256xi1>, vector<4x256xf32>
    %219 = arith.addf %198, %218 : vector<4x256xf32>
    %c0_185 = arith.constant 0 : index
    %c0_186 = arith.constant 0 : index
    %220 = vector.load %arg7[%c0_185, %c0_186] : memref<4x1xf32, #tpu.memory_space<vmem>>, vector<4x1xf32>
    %221 = vector.broadcast %220 : vector<4x1xf32> to vector<4x256xf32>
    %222 = arith.addf %219, %221 : vector<4x256xf32>
    %cst_187 = arith.constant 0.000000e+00 : f32
    %223 = vector.broadcast %cst_187 : f32 to vector<4x256xf32>
    %224 = arith.maximumf %222, %223 : vector<4x256xf32>
    %c12 = arith.constant 12 : index
    %c128_188 = arith.constant 128 : index
    %225 = vector.load %arg11[%c12, %c128_188] : memref<16x512xf32, #tpu.memory_space<vmem>>, vector<4x256xf32>
    tpu.vector_store %arg11[%c12, %c128_188], %224 {strides = array<i32>} : memref<16x512xf32, #tpu.memory_space<vmem>>, vector<4x256xf32>,
    %c0_189 = arith.constant 0 : index
    %c128_190 = arith.constant 128 : index
    %226 = vector.load %arg11[%c0_189, %c128_190] : memref<16x512xf32, #tpu.memory_space<vmem>>, vector<16x256xf32>
    %c0_191 = arith.constant 0 : index
    %c0_192 = arith.constant 0 : index
    %227 = vector.load %arg8[%c0_191, %c0_192] : memref<4x16xf32, #tpu.memory_space<vmem>>, vector<4x16xf32>
    %cst_193 = arith.constant dense<0.000000e+00> : vector<4x256xf32>
    %228 = tpu.matmul %227, %226, %cst_193 {dimension_numbers = #tpu.dot_dimension_numbers<[1], [0], [0], [1], [0, 0, 1, 1], [], []>} : vector<4x16xf32>, vector<16x256xf32>, vector<4x256xf32> -> vector<4x256xf32>
    %c0_194 = arith.constant 0 : index
    %c0_195 = arith.constant 0 : index
    %229 = vector.load %arg9[%c0_194, %c0_195] : memref<4x1xf32, #tpu.memory_space<vmem>>, vector<4x1xf32>
    %230 = vector.broadcast %229 : vector<4x1xf32> to vector<4x256xf32>
    %231 = arith.addf %228, %230 : vector<4x256xf32>
    %232 = arith.addf %231, %1 : vector<4x256xf32>
    %c0_196 = arith.constant 0 : index
    %c0_197 = arith.constant 0 : index
    %c0_198 = arith.constant 0 : index
    %233 = vector.load %arg10[%c0_196, %c0_197, %c0_198] : memref<1x4x256xf32, #tpu.memory_space<vmem>>, vector<1x4x256xf32>
    %234 = vector.shape_cast %233 : vector<1x4x256xf32> to vector<4x256xf32>
    %235 = vector.shape_cast %232 : vector<4x256xf32> to vector<1x4x256xf32>
    tpu.vector_store %arg10[%c0_196, %c0_197, %c0_198], %235 {strides = array<i32>} : memref<1x4x256xf32, #tpu.memory_space<vmem>>, vector<1x4x256xf32>,
    return
  }
  func.func @transform_0(%arg0: i32) -> (i32, i32, i32) {
    %c0_i32 = arith.constant 0 : i32
    %c0_i32_0 = arith.constant 0 : i32
    %c0_i32_1 = arith.constant 0 : i32
    return %arg0, %c0_i32, %c0_i32_0 : i32, i32, i32
  }
  func.func @transform_1(%arg0: i32) -> (i32, i32, i32) {
    %c0_i32 = arith.constant 0 : i32
    %c0_i32_0 = arith.constant 0 : i32
    %c0_i32_1 = arith.constant 0 : i32
    %c0_i32_2 = arith.constant 0 : i32
    return %c0_i32, %c0_i32_0, %c0_i32_1 : i32, i32, i32
  }
  func.func @transform_2(%arg0: i32) -> (i32, i32) {
    %c0_i32 = arith.constant 0 : i32
    %c0_i32_0 = arith.constant 0 : i32
    %c0_i32_1 = arith.constant 0 : i32
    return %c0_i32, %c0_i32_0 : i32, i32
  }
  func.func @transform_3(%arg0: i32) -> (i32, i32, i32) {
    %c0_i32 = arith.constant 0 : i32
    %c0_i32_0 = arith.constant 0 : i32
    %c0_i32_1 = arith.constant 0 : i32
    %c0_i32_2 = arith.constant 0 : i32
    return %c0_i32, %c0_i32_0, %c0_i32_1 : i32, i32, i32
  }
  func.func @transform_4(%arg0: i32) -> (i32, i32) {
    %c0_i32 = arith.constant 0 : i32
    %c0_i32_0 = arith.constant 0 : i32
    %c0_i32_1 = arith.constant 0 : i32
    return %c0_i32, %c0_i32_0 : i32, i32
  }
  func.func @transform_5(%arg0: i32) -> (i32, i32, i32) {
    %c0_i32 = arith.constant 0 : i32
    %c0_i32_0 = arith.constant 0 : i32
    %c0_i32_1 = arith.constant 0 : i32
    %c0_i32_2 = arith.constant 0 : i32
    return %c0_i32, %c0_i32_0, %c0_i32_1 : i32, i32, i32
  }
  func.func @transform_6(%arg0: i32) -> (i32, i32) {
    %c0_i32 = arith.constant 0 : i32
    %c0_i32_0 = arith.constant 0 : i32
    %c0_i32_1 = arith.constant 0 : i32
    return %c0_i32, %c0_i32_0 : i32, i32
  }
  func.func @transform_7(%arg0: i32) -> (i32, i32) {
    %c0_i32 = arith.constant 0 : i32
    %c0_i32_0 = arith.constant 0 : i32
    %c0_i32_1 = arith.constant 0 : i32
    return %c0_i32, %c0_i32_0 : i32, i32
  }
  func.func @transform_8(%arg0: i32) -> (i32, i32) {
    %c0_i32 = arith.constant 0 : i32
    %c0_i32_0 = arith.constant 0 : i32
    %c0_i32_1 = arith.constant 0 : i32
    return %c0_i32, %c0_i32_0 : i32, i32
  }
  func.func @transform_9(%arg0: i32) -> (i32, i32, i32) {
    %c0_i32 = arith.constant 0 : i32
    %c0_i32_0 = arith.constant 0 : i32
    %c0_i32_1 = arith.constant 0 : i32
    return %arg0, %c0_i32, %c0_i32_0 : i32, i32, i32
  }
}

</mosaic_0001>

<llo_original>
// kernel: tpu_custom_call.1
$region0: #{tpu_custom_call.1}
  #allocation0 [shape = 'u32[]', space=smem, size = 0x4, offset = 0x4, fixed_abs, tag = 'smem constant byte address 0x4 - core index']
  #allocation1 [shape = 'u32[144,128]{1,0:T(1,128)}', space=vmem, size = 0x12000, scoped, tag = 'internal scratch']
  #allocation2 [shape = 'f32[16,512]{1,0:T(8,128)}', space=vmem, size = 0x8000, scoped, tag = 'scratch operand']
  %s0 = inlined_call_operand.vmem [shape: f32[2,4,256], index: 0, kind: input, shape index: {}]
  %s1 = inlined_call_operand.vmem [shape: f32[9,4,4], index: 1, kind: input, shape index: {}]
  %s2 = inlined_call_operand.vmem [shape: f32[4,1], index: 2, kind: input, shape index: {}]
  %s3 = inlined_call_operand.vmem [shape: f32[9,4,8], index: 3, kind: input, shape index: {}]
  %s4 = inlined_call_operand.vmem [shape: f32[4,1], index: 4, kind: input, shape index: {}]
  %s5 = inlined_call_operand.vmem [shape: f32[9,4,12], index: 5, kind: input, shape index: {}]
  %s6 = inlined_call_operand.vmem [shape: f32[4,1], index: 6, kind: input, shape index: {}]
  %s7 = inlined_call_operand.vmem [shape: f32[4,16], index: 7, kind: input, shape index: {}]
  %s8 = inlined_call_operand.vmem [shape: f32[4,1], index: 8, kind: input, shape index: {}]
  %s9 = inlined_call_operand.hbm [shape: f32[2,4,256], index: 9, kind: output, shape index: {}]
  %s10 = sld [smem:[#allocation0]]
  $region69: #{tpu_custom_call.1} parent=0
    _
  %s12 = ssub.s32 1, %s10
  %s13 = scalar_select 0, %s12, %s10
  $region1: #{tpu_custom_call.1} parent=0
    #allocation3 [shape = 'u8[8192]{0}', space=vmem, size = 0x2000, scoped, tag = 'output window, operand 0']
    #allocation4 [shape = 's32[2]{0}', space=sflag, size = 0x8, scoped, tag = 'scoped memory for tpu_custom_call.1']
    %14 = vsyncpa [#allocation4], 0
    %s15 = scalar_lea.sflag [#allocation4], 1
    %16 = vsyncpa %s15, 0
    loop: start=0, step=1, limit=4
    $region2: #{tpu_custom_call.1} parent=1 // loop_pre_header
      _
    $region3: #{tpu_custom_call.1} parent=1 // loop_header
      %s18 = sphi 0, %s22
      %p19 = scmp.ge.s32.totalorder %s18, 4
      %s28 = sphi 0, %s30
      %s31 = sphi 0, %s28
      %s32 = sphi 0, %s31
      %s48 = sphi 0, %s32
      %s52 = sphi 0, %s52
      %s54 = sphi 0, %s52
      %s55 = sphi 0, %s54
      %s69 = sphi 0, %s55
      %s73 = sphi 0, %s73
      %s75 = sphi 0, %s73
      %s76 = sphi 0, %s75
      %s90 = sphi 0, %s76
      %s94 = sphi 0, %s94
      %s96 = sphi 0, %s94
      %s97 = sphi 0, %s96
      %s111 = sphi 0, %s97
      %s115 = sphi 0, %s115
      %s117 = sphi 0, %s115
      %s118 = sphi 0, %s117
      %s132 = sphi 0, %s118
      %s136 = sphi 0, %s136
      %s138 = sphi 0, %s136
      %s139 = sphi 0, %s138
      %s153 = sphi 0, %s139
      %s157 = sphi 0, %s157
      %s159 = sphi 0, %s157
      %s160 = sphi 0, %s159
      %s174 = sphi 0, %s160
      %s178 = sphi 0, %s178
      %s180 = sphi 0, %s178
      %s181 = sphi 0, %s180
      %s195 = sphi 0, %s181
      %s199 = sphi 0, %s199
      %s201 = sphi 0, %s199
      %s202 = sphi 0, %s201
      %s216 = sphi 0, %s202
      %s222 = sphi 0, %s224
      %s225 = sphi 0, %s222
      %s226 = sphi 0, %s225
      %s242 = sphi 0, %s226
    $region4: #{tpu_custom_call.1} parent=1 // loop_header_branch
      %21 = sbr.rel (%p19) target = $region8
    $region5: #{tpu_custom_call.1} parent=1 // loop_body
      %s23 = ssub.s32 %s18, 1
      %s24 = ssub.s32 %s18, 2
      %s25 = sadd.s32 %s18, 1
      %s26 = ssub.s32 %s18, %s25
      %p27 = scmp.eq.s32.totalorder %s26, 0
      %s29 = sadd.s32 %s28, 1
      %s30 = scalar_select %p27, %s28, %s29
      %p33 = pneg %p27
      %p34 = scmp.eq.s32.totalorder %s18, 1
      %p35 = por %p33, %p34
      %p36 = scmp.ne.s32.totalorder %s28, %s31
      %p37 = scmp.eq.s32.totalorder %s18, 0
      %p38 = por %p36, %p37
      %p39 = scmp.ne.s32.totalorder %s28, %s31
      %p40 = scmp.eq.s32.totalorder %s23, 1
      %p41 = por %p39, %p40
      %p42 = scmp.ne.s32.totalorder %s31, %s32
      %p43 = scmp.eq.s32.totalorder %s23, 0
      %p44 = por %p42, %p43
      %p45 = scmp.ne.s32.totalorder %s31, %s32
      %p46 = scmp.eq.s32.totalorder %s24, 1
      %p47 = por %p45, %p46
      %p49 = scmp.ne.s32.totalorder %s32, %s48
      %p50 = scmp.eq.s32.totalorder %s24, 0
      %p51 = por %p49, %p50
      %s53 = sadd.s32 %s52, 1
      %p56 = scmp.eq.s32.totalorder %s18, 1
      %p57 = scmp.ne.s32.totalorder %s52, %s54
      %p58 = scmp.eq.s32.totalorder %s18, 0
      %p59 = por %p57, %p58
      %p60 = scmp.ne.s32.totalorder %s52, %s54
      %p61 = scmp.eq.s32.totalorder %s23, 1
      %p62 = por %p60, %p61
      %p63 = scmp.ne.s32.totalorder %s54, %s55
      %p64 = scmp.eq.s32.totalorder %s23, 0
      %p65 = por %p63, %p64
      %p66 = scmp.ne.s32.totalorder %s54, %s55
      %p67 = scmp.eq.s32.totalorder %s24, 1
      %p68 = por %p66, %p67
      %p70 = scmp.ne.s32.totalorder %s55, %s69
      %p71 = scmp.eq.s32.totalorder %s24, 0
      %p72 = por %p70, %p71
      %s74 = sadd.s32 %s73, 1
      %p77 = scmp.eq.s32.totalorder %s18, 1
      %p78 = scmp.ne.s32.totalorder %s73, %s75
      %p79 = scmp.eq.s32.totalorder %s18, 0
      %p80 = por %p78, %p79
      %p81 = scmp.ne.s32.totalorder %s73, %s75
      %p82 = scmp.eq.s32.totalorder %s23, 1
      %p83 = por %p81, %p82
      %p84 = scmp.ne.s32.totalorder %s75, %s76
      %p85 = scmp.eq.s32.totalorder %s23, 0
      %p86 = por %p84, %p85
      %p87 = scmp.ne.s32.totalorder %s75, %s76
      %p88 = scmp.eq.s32.totalorder %s24, 1
      %p89 = por %p87, %p88
      %p91 = scmp.ne.s32.totalorder %s76, %s90
      %p92 = scmp.eq.s32.totalorder %s24, 0
      %p93 = por %p91, %p92
      %s95 = sadd.s32 %s94, 1
      %p98 = scmp.eq.s32.totalorder %s18, 1
      %p99 = scmp.ne.s32.totalorder %s94, %s96
      %p100 = scmp.eq.s32.totalorder %s18, 0
      %p101 = por %p99, %p100
      %p102 = scmp.ne.s32.totalorder %s94, %s96
      %p103 = scmp.eq.s32.totalorder %s23, 1
      %p104 = por %p102, %p103
      %p105 = scmp.ne.s32.totalorder %s96, %s97
      %p106 = scmp.eq.s32.totalorder %s23, 0
      %p107 = por %p105, %p106
      %p108 = scmp.ne.s32.totalorder %s96, %s97
      %p109 = scmp.eq.s32.totalorder %s24, 1
      %p110 = por %p108, %p109
      %p112 = scmp.ne.s32.totalorder %s97, %s111
      %p113 = scmp.eq.s32.totalorder %s24, 0
      %p114 = por %p112, %p113
      %s116 = sadd.s32 %s115, 1
      %p119 = scmp.eq.s32.totalorder %s18, 1
      %p120 = scmp.ne.s32.totalorder %s115, %s117
      %p121 = scmp.eq.s32.totalorder %s18, 0
      %p122 = por %p120, %p121
      %p123 = scmp.ne.s32.totalorder %s115, %s117
      %p124 = scmp.eq.s32.totalorder %s23, 1
      %p125 = por %p123, %p124
      %p126 = scmp.ne.s32.totalorder %s117, %s118
      %p127 = scmp.eq.s32.totalorder %s23, 0
      %p128 = por %p126, %p127
      %p129 = scmp.ne.s32.totalorder %s117, %s118
      %p130 = scmp.eq.s32.totalorder %s24, 1
      %p131 = por %p129, %p130
      %p133 = scmp.ne.s32.totalorder %s118, %s132
      %p134 = scmp.eq.s32.totalorder %s24, 0
      %p135 = por %p133, %p134
      %s137 = sadd.s32 %s136, 1
      %p140 = scmp.eq.s32.totalorder %s18, 1
      %p141 = scmp.ne.s32.totalorder %s136, %s138
      %p142 = scmp.eq.s32.totalorder %s18, 0
      %p143 = por %p141, %p142
      %p144 = scmp.ne.s32.totalorder %s136, %s138
      %p145 = scmp.eq.s32.totalorder %s23, 1
      %p146 = por %p144, %p145
      %p147 = scmp.ne.s32.totalorder %s138, %s139
      %p148 = scmp.eq.s32.totalorder %s23, 0
      %p149 = por %p147, %p148
      %p150 = scmp.ne.s32.totalorder %s138, %s139
      %p151 = scmp.eq.s32.totalorder %s24, 1
      %p152 = por %p150, %p151
      %p154 = scmp.ne.s32.totalorder %s139, %s153
      %p155 = scmp.eq.s32.totalorder %s24, 0
      %p156 = por %p154, %p155
      %s158 = sadd.s32 %s157, 1
      %p161 = scmp.eq.s32.totalorder %s18, 1
      %p162 = scmp.ne.s32.totalorder %s157, %s159
      %p163 = scmp.eq.s32.totalorder %s18, 0
      %p164 = por %p162, %p163
      %p165 = scmp.ne.s32.totalorder %s157, %s159
      %p166 = scmp.eq.s32.totalorder %s23, 1
      %p167 = por %p165, %p166
      %p168 = scmp.ne.s32.totalorder %s159, %s160
      %p169 = scmp.eq.s32.totalorder %s23, 0
      %p170 = por %p168, %p169
      %p171 = scmp.ne.s32.totalorder %s159, %s160
      %p172 = scmp.eq.s32.totalorder %s24, 1
      %p173 = por %p171, %p172
      %p175 = scmp.ne.s32.totalorder %s160, %s174
      %p176 = scmp.eq.s32.totalorder %s24, 0
      %p177 = por %p175, %p176
      %s179 = sadd.s32 %s178, 1
      %p182 = scmp.eq.s32.totalorder %s18, 1
      %p183 = scmp.ne.s32.totalorder %s178, %s180
      %p184 = scmp.eq.s32.totalorder %s18, 0
      %p185 = por %p183, %p184
      %p186 = scmp.ne.s32.totalorder %s178, %s180
      %p187 = scmp.eq.s32.totalorder %s23, 1
      %p188 = por %p186, %p187
      %p189 = scmp.ne.s32.totalorder %s180, %s181
      %p190 = scmp.eq.s32.totalorder %s23, 0
      %p191 = por %p189, %p190
      %p192 = scmp.ne.s32.totalorder %s180, %s181
      %p193 = scmp.eq.s32.totalorder %s24, 1
      %p194 = por %p192, %p193
      %p196 = scmp.ne.s32.totalorder %s181, %s195
      %p197 = scmp.eq.s32.totalorder %s24, 0
      %p198 = por %p196, %p197
      %s200 = sadd.s32 %s199, 1
      %p203 = scmp.eq.s32.totalorder %s18, 1
      %p204 = scmp.ne.s32.totalorder %s199, %s201
      %p205 = scmp.eq.s32.totalorder %s18, 0
      %p206 = por %p204, %p205
      %p207 = scmp.ne.s32.totalorder %s199, %s201
      %p208 = scmp.eq.s32.totalorder %s23, 1
      %p209 = por %p207, %p208
      %p210 = scmp.ne.s32.totalorder %s201, %s202
      %p211 = scmp.eq.s32.totalorder %s23, 0
      %p212 = por %p210, %p211
      %p213 = scmp.ne.s32.totalorder %s201, %s202
      %p214 = scmp.eq.s32.totalorder %s24, 1
      %p215 = por %p213, %p214
      %p217 = scmp.ne.s32.totalorder %s202, %s216
      %p218 = scmp.eq.s32.totalorder %s24, 0
      %p219 = por %p217, %p218
      %s220 = ssub.s32 %s18, %s25
      %p221 = scmp.eq.s32.totalorder %s220, 0
      %s223 = sadd.s32 %s222, 1
      %s224 = scalar_select %p221, %s222, %s223
      %p227 = pneg %p221
      %p228 = scmp.eq.s32.totalorder %s18, 1
      %p229 = por %p227, %p228
      %p230 = scmp.ne.s32.totalorder %s222, %s225
      %p231 = scmp.eq.s32.totalorder %s18, 0
      %p232 = por %p230, %p231
      %p233 = scmp.ne.s32.totalorder %s222, %s225
      %p234 = scmp.eq.s32.totalorder %s23, 1
      %p235 = por %p233, %p234
      %p236 = scmp.ne.s32.totalorder %s225, %s226
      %p237 = scmp.eq.s32.totalorder %s23, 0
      %p238 = por %p236, %p237
      %p239 = scmp.ne.s32.totalorder %s225, %s226
      %p240 = scmp.eq.s32.totalorder %s24, 1
      %p241 = por %p239, %p240
      %p243 = scmp.ne.s32.totalorder %s226, %s242
      %p244 = scmp.eq.s32.totalorder %s24, 0
      %p245 = por %p243, %p244
      %p246 = scmp.le.s32.totalorder 1, %s18
      %p247 = scmp.lt.s32.totalorder %s18, 3
      %p248 = pnand %p246, %p247
      %p249 = pneg %p248
      // Predicated region
      $region9: #{tpu_custom_call.1} parent=5 // pred_check
        _
      $region10: #{tpu_custom_call.1} parent=5 // pred_check_branch
        %251 = sbr.rel (%p248) target = $region12
      $region11: #{tpu_custom_call.1} parent=5 // pred_region
        %s252 = ssub.s32 %s18, 1
        // Predicated region
        $region13: #{tpu_custom_call.1} parent=11 // pred_check
          %p253 = pneg %p65
        $region14: #{tpu_custom_call.1} parent=11 // pred_check_branch
          %255 = sbr.rel (%p253) target = $region16
        $region15: #{tpu_custom_call.1} parent=11 // pred_region
          _
        $region16: #{tpu_custom_call.1} parent=11 // pred_fallthru
          _
        // Predicated region
        $region17: #{tpu_custom_call.1} parent=11 // pred_check
          %p256 = pneg %p86
        $region18: #{tpu_custom_call.1} parent=11 // pred_check_branch
          %258 = sbr.rel (%p256) target = $region20
        $region19: #{tpu_custom_call.1} parent=11 // pred_region
          _
        $region20: #{tpu_custom_call.1} parent=11 // pred_fallthru
          _
        // Predicated region
        $region21: #{tpu_custom_call.1} parent=11 // pred_check
          %p259 = pneg %p107
        $region22: #{tpu_custom_call.1} parent=11 // pred_check_branch
          %261 = sbr.rel (%p259) target = $region24
        $region23: #{tpu_custom_call.1} parent=11 // pred_region
          _
        $region24: #{tpu_custom_call.1} parent=11 // pred_fallthru
          _
        // Predicated region
        $region25: #{tpu_custom_call.1} parent=11 // pred_check
          %p262 = pneg %p128
        $region26: #{tpu_custom_call.1} parent=11 // pred_check_branch
          %264 = sbr.rel (%p262) target = $region28
        $region27: #{tpu_custom_call.1} parent=11 // pred_region
          _
        $region28: #{tpu_custom_call.1} parent=11 // pred_fallthru
          _
        // Predicated region
        $region29: #{tpu_custom_call.1} parent=11 // pred_check
          %p265 = pneg %p149
        $region30: #{tpu_custom_call.1} parent=11 // pred_check_branch
          %267 = sbr.rel (%p265) target = $region32
        $region31: #{tpu_custom_call.1} parent=11 // pred_region
          _
        $region32: #{tpu_custom_call.1} parent=11 // pred_fallthru
          _
        // Predicated region
        $region33: #{tpu_custom_call.1} parent=11 // pred_check
          %p268 = pneg %p170
        $region34: #{tpu_custom_call.1} parent=11 // pred_check_branch
          %270 = sbr.rel (%p268) target = $region36
        $region35: #{tpu_custom_call.1} parent=11 // pred_region
          _
        $region36: #{tpu_custom_call.1} parent=11 // pred_fallthru
          _
        // Predicated region
        $region37: #{tpu_custom_call.1} parent=11 // pred_check
          %p271 = pneg %p191
        $region38: #{tpu_custom_call.1} parent=11 // pred_check_branch
          %273 = sbr.rel (%p271) target = $region40
        $region39: #{tpu_custom_call.1} parent=11 // pred_region
          _
        $region40: #{tpu_custom_call.1} parent=11 // pred_fallthru
          _
        // Predicated region
        $region41: #{tpu_custom_call.1} parent=11 // pred_check
          %p274 = pneg %p212
        $region42: #{tpu_custom_call.1} parent=11 // pred_check_branch
          %276 = sbr.rel (%p274) target = $region44
        $region43: #{tpu_custom_call.1} parent=11 // pred_region
          _
        $region44: #{tpu_custom_call.1} parent=11 // pred_fallthru
          _
      $region12: #{tpu_custom_call.1} parent=5 // pred_fallthru
        _
      %p277 = scmp.lt.s32.totalorder %s18, 2
      // Predicated region
      $region45: #{tpu_custom_call.1} parent=5 // pred_check
        %p278 = pneg %p277
      $region46: #{tpu_custom_call.1} parent=5 // pred_check_branch
        %280 = sbr.rel (%p278) target = $region48
      $region47: #{tpu_custom_call.1} parent=5 // pred_region
        // Predicated region
        $region49: #{tpu_custom_call.1} parent=47 // pred_check
          %p281 = pneg %p38
        $region50: #{tpu_custom_call.1} parent=47 // pred_check_branch
          %283 = sbr.rel (%p281) target = $region52
        $region51: #{tpu_custom_call.1} parent=47 // pred_region
          %p284 = scmp.lt.s32.totalorder %s18, 1
          %s285 = scalar_select %p284, %s18, 1
          %s286 = smul.addr %s285, 2
          %s287 = smul.addr %s286, 4
          %s288 = scalar_lea.vmem %s0, %s287
        $region52: #{tpu_custom_call.1} parent=47 // pred_fallthru
          _
      $region48: #{tpu_custom_call.1} parent=5 // pred_fallthru
        _
      %p289 = scmp.le.s32.totalorder 1, %s18
      %p290 = scmp.lt.s32.totalorder %s18, 3
      %p291 = pnand %p289, %p290
      %p292 = pneg %p291
      // Predicated region
      $region53: #{tpu_custom_call.1} parent=5 // pred_check
        _
      $region54: #{tpu_custom_call.1} parent=5 // pred_check_branch
        %294 = sbr.rel (%p291) target = $region56
      $region55: #{tpu_custom_call.1} parent=5 // pred_region
        %s295 = ssub.s32 %s18, 1
        %p296 = scmp.lt.s32.totalorder %s23, 1
        %s297 = scalar_select %p296, %s23, 1
        %s298 = smul.addr %s297, 2
        %s299 = smul.addr %s298, 4
        %s300 = scalar_lea.vmem %s0, %s299
        %p301 = pneg %p44
        %p302 = pneg %p41
        %p303 = pneg %p65
        %p304 = pneg %p62
        %p305 = pneg %p86
        %p306 = pneg %p83
        %p307 = pneg %p107
        %p308 = pneg %p104
        %p309 = pneg %p128
        %p310 = pneg %p125
        %p311 = pneg %p149
        %p312 = pneg %p146
        %p313 = pneg %p170
        %p314 = pneg %p167
        %p315 = pneg %p191
        %p316 = pneg %p188
        %p317 = pneg %p212
        %p318 = pneg %p209
        %p319 = pneg %p238
        %p320 = pneg %p235
        %s321 = sand.u32 %s225, 1
        %s322 = scalar_lea.sflag [#allocation4], %s321
        %s323 = sand.u32 %s225, 1
        %s324 = smul.addr %s323, 8
        %s325 = scalar_lea.vmem [#allocation3], %s324
        %p326 = scmp.lt.s32.totalorder %s23, 1
        %s327 = scalar_select %p326, %s23, 1
        %s328 = smul.addr %s327, 2
        %s329 = smul.addr %s328, 4
        %s330 = scalar_lea.vmem %s0, %s329
        %v331 = vld [vmem:[%s330] sm:$0xff]
        %332 = vst [vmem:[#allocation2] sm:$0xff] 0.0
        %333 = vst [vmem:[#allocation2 + $0x20] sm:$0xff] 0.0
        %334 = vst [vmem:[#allocation2 + $0x18] sm:$0xff] 0.0
        %335 = vst [vmem:[#allocation2 + $0x38] sm:$0xff] 0.0
        %v337 = vcombine.high %v331, %v331
        %339 = vst [vmem:[#allocation2 + $0x8] sm:$0xf] %v331
        %340 = vst [vmem:[#allocation2 + $0x10] sm:$0xf] %v337
        %v341 = vlaneseq
        %v342 = vand.u32 %v341, 127
        %v343 = vadd.s32 %v342, 128
        %vm344 = vcmp.lt.s32.totalorder %v342, 0
        %v345 = vsub.s32 0, %v342
        %v346 = vsel %vm344, %v345, %v342
        %v347 = vshrl.u32 %v346, 4
        %v348 = vand.u32 %v346, 15
        %v349 = vsub.s32 0, %v348
        %v350 = vsel %vm344, %v349, %v348
        %vm351 = vcmp.lt.s32.totalorder %v343, 0
        %v352 = vsub.s32 0, %v343
        %v353 = vsel %vm351, %v352, %v343
        %v354 = vshrl.u32 %v353, 4
        %v355 = vand.u32 %v353, 15
        %v356 = vsub.s32 0, %v355
        %v357 = vsel %vm351, %v356, %v355
        %vm358 = vcmp.ne.s32.totalorder %v350, 0
        %vm359 = vcmp.ne.s32.totalorder %v357, 0
        %vm360 = vcmp.lt.s32.totalorder %v350, 0
        %vm361 = vcmp.lt.s32.totalorder %v357, 0
        %vm362 = vmand %vm360, %vm358
        %vm363 = vmand %vm361, %vm359
        %v364 = vadd.s32 %v350, 16
        %v365 = vadd.s32 %v357, 16
        %v366 = vsel %vm362, %v364, %v350
        %v367 = vsel %vm363, %v365, %v357
        %vm368 = vcmp.ge.s32.totalorder %v366, 1
        %vm369 = vcmp.ge.s32.totalorder %v367, 1
        %vm370 = vcmp.le.s32.totalorder %v366, 14
        %vm371 = vcmp.le.s32.totalorder %v367, 14
        %v372 = vld [vmem:[#allocation2] sm:$0xf]
        %v373 = vld [vmem:[#allocation2 + $0x8] sm:$0xf]
        %v374 = vld [vmem:[#allocation2 + $0x10] sm:$0xf]
        %v375 = vld [vmem:[%s1] sm:$0xf]
        %s376 = scalar_lea.vmem %s1, 12
        %v377 = vld [vmem:[%s376] sm:$0xf]
        %381 = vrot.lane.b32.xlu0 %v372, 1
        %v382 = vpop.permute.xlu0 %381
        %383 = vrot.lane.b32.xlu0 %v373, 1
        %v384 = vpop.permute.xlu0 %383
        %385 = vrot.lane.b32.xlu0 %v374, 1
        %v386 = vpop.permute.xlu0 %385
        %vm387 = vcmask 7168
        %v388 = vsel %vm387, %v382, %v384
        %v389 = vsel %vm387, %v384, %v386
        %vm390 = vcmask 31744
        %v392 = vsel %vm390, %v377, 0
        %vm394 = vcmask 1043456
        %v395 = vsel %vm394, %v388, 0
        %v397 = vsel %vm394, %v389, 0
        %399 = vmatprep.subr.mxu0 %v397
        %400 = vmatpush1.msra.mxu0 %v395
        %401 = vmatprep.subr.mxu0 0.0
        %402 = vmatpush1.msra.mxu0 0.0
        %403 = vmatprep.subr.mxu0 0.0
        %404 = vmatpush1.msra.mxu0 0.0
        %405 = vmatprep.subr.mxu0 0.0
        %406 = vmatpush1.msra.mxu0 0.0
        %407 = vmatprep.subr.mxu0 0.0
        %408 = vmatpush1.msra.mxu0 0.0
        %409 = vmatprep.subr.mxu0 0.0
        %410 = vmatpush1.msra.mxu0 0.0
        %411 = vmatprep.subr.mxu0 0.0
        %412 = vmatpush1.msra.mxu0 0.0
        %413 = vmatprep.subr.mxu0 0.0
        %414 = vmatpush1.msra.mxu0 0.0
        %415 = vmatprep.subr.mxu0 0.0
        %416 = vmatpush1.msra.mxu0 0.0
        %417 = vmatprep.subr.mxu0 0.0
        %418 = vmatpush1.msra.mxu0 0.0
        %419 = vmatprep.subr.mxu0 0.0
        %420 = vmatpush1.msra.mxu0 0.0
        %421 = vmatprep.subr.mxu0 0.0
        %422 = vmatpush1.msra.mxu0 0.0
        %423 = vmatprep.subr.mxu0 0.0
        %424 = vmatpush1.msra.mxu0 0.0
        %425 = vmatprep.subr.mxu0 0.0
        %426 = vmatpush1.msra.mxu0 0.0
        %427 = vmatprep.subr.mxu0 0.0
        %428 = vmatpush1.msra.mxu0 0.0
        %429 = vmatprep.subr.mxu0 0.0
        %430 = vmatpush1.msra.mxu0 0.0
        %431 = vmatprep.subr.mxu0 0.0
        %432 = vmatpush1.msra.mxu0 0.0
        %433 = vmatprep.subr.mxu0 0.0
        %434 = vmatpush1.msra.mxu0 0.0
        %435 = vmatprep.subr.mxu0 0.0
        %436 = vmatpush1.msra.mxu0 0.0
        %437 = vmatprep.subr.mxu0 0.0
        %438 = vmatpush1.msra.mxu0 0.0
        %439 = vmatprep.subr.mxu0 0.0
        %440 = vmatpush1.msra.mxu0 0.0
        %441 = vmatprep.subr.mxu0 0.0
        %442 = vmatpush1.msra.mxu0 0.0
        %443 = vmatprep.subr.mxu0 0.0
        %444 = vmatpush1.msra.mxu0 0.0
        %445 = vmatprep.subr.mxu0 0.0
        %446 = vmatpush1.msra.mxu0 0.0
        %447 = vmatprep.subr.mxu0 0.0
        %448 = vmatpush1.msra.mxu0 0.0
        %449 = vmatprep.subr.mxu0 0.0
        %450 = vmatpush1.msra.mxu0 0.0
        %451 = vmatprep.subr.mxu0 0.0
        %452 = vmatpush1.msra.mxu0 0.0
        %453 = vmatprep.subr.mxu0 0.0
        %454 = vmatpush1.msra.mxu0 0.0
        %455 = vmatprep.subr.mxu0 0.0
        %456 = vmatpush1.msra.mxu0 0.0
        %457 = vmatprep.subr.mxu0 0.0
        %458 = vmatpush1.msra.mxu0 0.0
        %459 = vmatprep.subr.mxu0 0.0
        %460 = vmatpush1.msra.mxu0 0.0
        %461 = vmatprep.subr.mxu0 0.0
        %462 = vmatpush1.msra.mxu0 0.0
        %463 = vmatprep.mubr.f32.mxu0 0.0
        %464 = vmatmul.mubr.f32.gmra.mrb[0].mxu0 %v392
        %v465 = vpop.f32.mrb[0].mxu0
        %v466 = vadd.f32 0.0, %v465
        %v467 = vpop.f32.mrb[0].mxu0
        %v468 = vadd.f32 0.0, %v467
        %469 = vdwg.mxu0
        %470 = vrot.lane.b32.xlu0 %v372, 17
        %v471 = vpop.permute.xlu0 %470
        %472 = vrot.lane.b32.xlu0 %v373, 17
        %v473 = vpop.permute.xlu0 %472
        %474 = vrot.lane.b32.xlu0 %v374, 17
        %v475 = vpop.permute.xlu0 %474
        %vm476 = vcmask 138240
        %v477 = vsel %vm476, %v471, %v473
        %v478 = vsel %vm476, %v473, %v475
        %v480 = vsel %vm390, %v375, 0
        %v482 = vsel %vm394, %v477, 0
        %v484 = vsel %vm394, %v478, 0
        %486 = vmatprep.subr.mxu0 %v484
        %487 = vmatpush1.msra.mxu0 %v482
        %488 = vmatprep.subr.mxu0 0.0
        %489 = vmatpush1.msra.mxu0 0.0
        %490 = vmatprep.subr.mxu0 0.0
        %491 = vmatpush1.msra.mxu0 0.0
        %492 = vmatprep.subr.mxu0 0.0
        %493 = vmatpush1.msra.mxu0 0.0
        %494 = vmatprep.subr.mxu0 0.0
        %495 = vmatpush1.msra.mxu0 0.0
        %496 = vmatprep.subr.mxu0 0.0
        %497 = vmatpush1.msra.mxu0 0.0
        %498 = vmatprep.subr.mxu0 0.0
        %499 = vmatpush1.msra.mxu0 0.0
        %500 = vmatprep.subr.mxu0 0.0
        %501 = vmatpush1.msra.mxu0 0.0
        %502 = vmatprep.subr.mxu0 0.0
        %503 = vmatpush1.msra.mxu0 0.0
        %504 = vmatprep.subr.mxu0 0.0
        %505 = vmatpush1.msra.mxu0 0.0
        %506 = vmatprep.subr.mxu0 0.0
        %507 = vmatpush1.msra.mxu0 0.0
        %508 = vmatprep.subr.mxu0 0.0
        %509 = vmatpush1.msra.mxu0 0.0
        %510 = vmatprep.subr.mxu0 0.0
        %511 = vmatpush1.msra.mxu0 0.0
        %512 = vmatprep.subr.mxu0 0.0
        %513 = vmatpush1.msra.mxu0 0.0
        %514 = vmatprep.subr.mxu0 0.0
        %515 = vmatpush1.msra.mxu0 0.0
        %516 = vmatprep.subr.mxu0 0.0
        %517 = vmatpush1.msra.mxu0 0.0
        %518 = vmatprep.subr.mxu0 0.0
        %519 = vmatpush1.msra.mxu0 0.0
        %520 = vmatprep.subr.mxu0 0.0
        %521 = vmatpush1.msra.mxu0 0.0
        %522 = vmatprep.subr.mxu0 0.0
        %523 = vmatpush1.msra.mxu0 0.0
        %524 = vmatprep.subr.mxu0 0.0
        %525 = vmatpush1.msra.mxu0 0.0
        %526 = vmatprep.subr.mxu0 0.0
        %527 = vmatpush1.msra.mxu0 0.0
        %528 = vmatprep.subr.mxu0 0.0
        %529 = vmatpush1.msra.mxu0 0.0
        %530 = vmatprep.subr.mxu0 0.0
        %531 = vmatpush1.msra.mxu0 0.0
        %532 = vmatprep.subr.mxu0 0.0
        %533 = vmatpush1.msra.mxu0 0.0
        %534 = vmatprep.subr.mxu0 0.0
        %535 = vmatpush1.msra.mxu0 0.0
        %536 = vmatprep.subr.mxu0 0.0
        %537 = vmatpush1.msra.mxu0 0.0
        %538 = vmatprep.subr.mxu0 0.0
        %539 = vmatpush1.msra.mxu0 0.0
        %540 = vmatprep.subr.mxu0 0.0
        %541 = vmatpush1.msra.mxu0 0.0
        %542 = vmatprep.subr.mxu0 0.0
        %543 = vmatpush1.msra.mxu0 0.0
        %544 = vmatprep.subr.mxu0 0.0
        %545 = vmatpush1.msra.mxu0 0.0
        %546 = vmatprep.subr.mxu0 0.0
        %547 = vmatpush1.msra.mxu0 0.0
        %548 = vmatprep.subr.mxu0 0.0
        %549 = vmatpush1.msra.mxu0 0.0
        %550 = vmatprep.mubr.f32.mxu0 0.0
        %551 = vmatmul.mubr.f32.gmra.mrb[0].mxu0 %v480
        %v552 = vpop.f32.mrb[0].mxu0
        %v553 = vadd.f32 %v466, %v552
        %v554 = vpop.f32.mrb[0].mxu0
        %v555 = vadd.f32 %v468, %v554
        %556 = vdwg.mxu0
        %v557 = vld [vmem:[#allocation2 + $0x8] sm:$0xf]
        %v558 = vld [vmem:[#allocation2 + $0x10] sm:$0xf]
        %v559 = vld [vmem:[#allocation2 + $0x18] sm:$0xf]
        %s560 = scalar_lea.vmem %s1, 24
        %v561 = vld [vmem:[%s560] sm:$0xf]
        %565 = vrot.lane.b32.xlu0 %v557, 113
        %v566 = vpop.permute.xlu0 %565
        %567 = vrot.lane.b32.xlu0 %v558, 113
        %v568 = vpop.permute.xlu0 %567
        %569 = vrot.lane.b32.xlu0 %v559, 113
        %v570 = vpop.permute.xlu0 %569
        %vm571 = vcmask 924672
        %v572 = vsel %vm571, %v566, %v568
        %v573 = vsel %vm571, %v568, %v570
        %v575 = vsel %vm390, %v561, 0
        %v577 = vsel %vm394, %v572, 0
        %v579 = vsel %vm394, %v573, 0
        %581 = vmatprep.subr.mxu0 %v579
        %582 = vmatpush1.msra.mxu0 %v577
        %583 = vmatprep.subr.mxu0 0.0
        %584 = vmatpush1.msra.mxu0 0.0
        %585 = vmatprep.subr.mxu0 0.0
        %586 = vmatpush1.msra.mxu0 0.0
        %587 = vmatprep.subr.mxu0 0.0
        %588 = vmatpush1.msra.mxu0 0.0
        %589 = vmatprep.subr.mxu0 0.0
        %590 = vmatpush1.msra.mxu0 0.0
        %591 = vmatprep.subr.mxu0 0.0
        %592 = vmatpush1.msra.mxu0 0.0
        %593 = vmatprep.subr.mxu0 0.0
        %594 = vmatpush1.msra.mxu0 0.0
        %595 = vmatprep.subr.mxu0 0.0
        %596 = vmatpush1.msra.mxu0 0.0
        %597 = vmatprep.subr.mxu0 0.0
        %598 = vmatpush1.msra.mxu0 0.0
        %599 = vmatprep.subr.mxu0 0.0
        %600 = vmatpush1.msra.mxu0 0.0
        %601 = vmatprep.subr.mxu0 0.0
        %602 = vmatpush1.msra.mxu0 0.0
        %603 = vmatprep.subr.mxu0 0.0
        %604 = vmatpush1.msra.mxu0 0.0
        %605 = vmatprep.subr.mxu0 0.0
        %606 = vmatpush1.msra.mxu0 0.0
        %607 = vmatprep.subr.mxu0 0.0
        %608 = vmatpush1.msra.mxu0 0.0
        %609 = vmatprep.subr.mxu0 0.0
        %610 = vmatpush1.msra.mxu0 0.0
        %611 = vmatprep.subr.mxu0 0.0
        %612 = vmatpush1.msra.mxu0 0.0
        %613 = vmatprep.subr.mxu0 0.0
        %614 = vmatpush1.msra.mxu0 0.0
        %615 = vmatprep.subr.mxu0 0.0
        %616 = vmatpush1.msra.mxu0 0.0
        %617 = vmatprep.subr.mxu0 0.0
        %618 = vmatpush1.msra.mxu0 0.0
        %619 = vmatprep.subr.mxu0 0.0
        %620 = vmatpush1.msra.mxu0 0.0
        %621 = vmatprep.subr.mxu0 0.0
        %622 = vmatpush1.msra.mxu0 0.0
        %623 = vmatprep.subr.mxu0 0.0
        %624 = vmatpush1.msra.mxu0 0.0
        %625 = vmatprep.subr.mxu0 0.0
        %626 = vmatpush1.msra.mxu0 0.0
        %627 = vmatprep.subr.mxu0 0.0
        %628 = vmatpush1.msra.mxu0 0.0
        %629 = vmatprep.subr.mxu0 0.0
        %630 = vmatpush1.msra.mxu0 0.0
        %631 = vmatprep.subr.mxu0 0.0
        %632 = vmatpush1.msra.mxu0 0.0
        %633 = vmatprep.subr.mxu0 0.0
        %634 = vmatpush1.msra.mxu0 0.0
        %635 = vmatprep.subr.mxu0 0.0
        %636 = vmatpush1.msra.mxu0 0.0
        %637 = vmatprep.subr.mxu0 0.0
        %638 = vmatpush1.msra.mxu0 0.0
        %639 = vmatprep.subr.mxu0 0.0
        %640 = vmatpush1.msra.mxu0 0.0
        %641 = vmatprep.subr.mxu0 0.0
        %642 = vmatpush1.msra.mxu0 0.0
        %643 = vmatprep.subr.mxu0 0.0
        %644 = vmatpush1.msra.mxu0 0.0
        %645 = vmatprep.mubr.f32.mxu0 0.0
        %646 = vmatmul.mubr.f32.gmra.mrb[0].mxu0 %v575
        %v647 = vpop.f32.mrb[0].mxu0
        %v648 = vadd.f32 0.0, %v647
        %v649 = vpop.f32.mrb[0].mxu0
        %v650 = vadd.f32 0.0, %v649
        %651 = vdwg.mxu0
        %v652 = vadd.f32 %v553, %v648
        %v653 = vadd.f32 %v555, %v650
        %v654 = vsel %vm368, 1, 0
        %v655 = vsel %vm369, 1, 0
        %vm656 = vcmp.eq.s32.totalorder %v654, 1
        %vm657 = vcmp.eq.s32.totalorder %v655, 1
        %v658 = vsel %vm656, %v652, 0.0
        %v659 = vsel %vm657, %v653, 0.0
        %v660 = vadd.f32 %v658, 0.0
        %v661 = vadd.f32 %v659, 0.0
        %s662 = scalar_lea.vmem %s1, 4
        %v663 = vld [vmem:[%s662] sm:$0xf]
        %s664 = scalar_lea.vmem %s1, 16
        %v665 = vld [vmem:[%s664] sm:$0xf]
        %v667 = vsel %vm390, %v665, 0
        %v669 = vsel %vm394, %v373, 0
        %v671 = vsel %vm394, %v374, 0
        %673 = vmatprep.subr.mxu0 %v671
        %674 = vmatpush1.msra.mxu0 %v669
        %675 = vmatprep.subr.mxu0 0.0
        %676 = vmatpush1.msra.mxu0 0.0
        %677 = vmatprep.subr.mxu0 0.0
        %678 = vmatpush1.msra.mxu0 0.0
        %679 = vmatprep.subr.mxu0 0.0
        %680 = vmatpush1.msra.mxu0 0.0
        %681 = vmatprep.subr.mxu0 0.0
        %682 = vmatpush1.msra.mxu0 0.0
        %683 = vmatprep.subr.mxu0 0.0
        %684 = vmatpush1.msra.mxu0 0.0
        %685 = vmatprep.subr.mxu0 0.0
        %686 = vmatpush1.msra.mxu0 0.0
        %687 = vmatprep.subr.mxu0 0.0
        %688 = vmatpush1.msra.mxu0 0.0
        %689 = vmatprep.subr.mxu0 0.0
        %690 = vmatpush1.msra.mxu0 0.0
        %691 = vmatprep.subr.mxu0 0.0
        %692 = vmatpush1.msra.mxu0 0.0
        %693 = vmatprep.subr.mxu0 0.0
        %694 = vmatpush1.msra.mxu0 0.0
        %695 = vmatprep.subr.mxu0 0.0
        %696 = vmatpush1.msra.mxu0 0.0
        %697 = vmatprep.subr.mxu0 0.0
        %698 = vmatpush1.msra.mxu0 0.0
        %699 = vmatprep.subr.mxu0 0.0
        %700 = vmatpush1.msra.mxu0 0.0
        %701 = vmatprep.subr.mxu0 0.0
        %702 = vmatpush1.msra.mxu0 0.0
        %703 = vmatprep.subr.mxu0 0.0
        %704 = vmatpush1.msra.mxu0 0.0
        %705 = vmatprep.subr.mxu0 0.0
        %706 = vmatpush1.msra.mxu0 0.0
        %707 = vmatprep.subr.mxu0 0.0
        %708 = vmatpush1.msra.mxu0 0.0
        %709 = vmatprep.subr.mxu0 0.0
        %710 = vmatpush1.msra.mxu0 0.0
        %711 = vmatprep.subr.mxu0 0.0
        %712 = vmatpush1.msra.mxu0 0.0
        %713 = vmatprep.subr.mxu0 0.0
        %714 = vmatpush1.msra.mxu0 0.0
        %715 = vmatprep.subr.mxu0 0.0
        %716 = vmatpush1.msra.mxu0 0.0
        %717 = vmatprep.subr.mxu0 0.0
        %718 = vmatpush1.msra.mxu0 0.0
        %719 = vmatprep.subr.mxu0 0.0
        %720 = vmatpush1.msra.mxu0 0.0
        %721 = vmatprep.subr.mxu0 0.0
        %722 = vmatpush1.msra.mxu0 0.0
        %723 = vmatprep.subr.mxu0 0.0
        %724 = vmatpush1.msra.mxu0 0.0
        %725 = vmatprep.subr.mxu0 0.0
        %726 = vmatpush1.msra.mxu0 0.0
        %727 = vmatprep.subr.mxu0 0.0
        %728 = vmatpush1.msra.mxu0 0.0
        %729 = vmatprep.subr.mxu0 0.0
        %730 = vmatpush1.msra.mxu0 0.0
        %731 = vmatprep.subr.mxu0 0.0
        %732 = vmatpush1.msra.mxu0 0.0
        %733 = vmatprep.subr.mxu0 0.0
        %734 = vmatpush1.msra.mxu0 0.0
        %735 = vmatprep.subr.mxu0 0.0
        %736 = vmatpush1.msra.mxu0 0.0
        %737 = vmatprep.mubr.f32.mxu0 0.0
        %738 = vmatmul.mubr.f32.gmra.mrb[0].mxu0 %v667
        %v739 = vpop.f32.mrb[0].mxu0
        %v740 = vadd.f32 0.0, %v739
        %v741 = vpop.f32.mrb[0].mxu0
        %v742 = vadd.f32 0.0, %v741
        %743 = vdwg.mxu0
        %744 = vrot.lane.b32.xlu0 %v372, 16
        %v745 = vpop.permute.xlu0 %744
        %746 = vrot.lane.b32.xlu0 %v373, 16
        %v747 = vpop.permute.xlu0 %746
        %748 = vrot.lane.b32.xlu0 %v374, 16
        %v749 = vpop.permute.xlu0 %748
        %vm750 = vcmask 130048
        %v751 = vsel %vm750, %v745, %v747
        %v752 = vsel %vm750, %v747, %v749
        %v754 = vsel %vm390, %v663, 0
        %v756 = vsel %vm394, %v751, 0
        %v758 = vsel %vm394, %v752, 0
        %760 = vmatprep.subr.mxu0 %v758
        %761 = vmatpush1.msra.mxu0 %v756
        %762 = vmatprep.subr.mxu0 0.0
        %763 = vmatpush1.msra.mxu0 0.0
        %764 = vmatprep.subr.mxu0 0.0
        %765 = vmatpush1.msra.mxu0 0.0
        %766 = vmatprep.subr.mxu0 0.0
        %767 = vmatpush1.msra.mxu0 0.0
        %768 = vmatprep.subr.mxu0 0.0
        %769 = vmatpush1.msra.mxu0 0.0
        %770 = vmatprep.subr.mxu0 0.0
        %771 = vmatpush1.msra.mxu0 0.0
        %772 = vmatprep.subr.mxu0 0.0
        %773 = vmatpush1.msra.mxu0 0.0
        %774 = vmatprep.subr.mxu0 0.0
        %775 = vmatpush1.msra.mxu0 0.0
        %776 = vmatprep.subr.mxu0 0.0
        %777 = vmatpush1.msra.mxu0 0.0
        %778 = vmatprep.subr.mxu0 0.0
        %779 = vmatpush1.msra.mxu0 0.0
        %780 = vmatprep.subr.mxu0 0.0
        %781 = vmatpush1.msra.mxu0 0.0
        %782 = vmatprep.subr.mxu0 0.0
        %783 = vmatpush1.msra.mxu0 0.0
        %784 = vmatprep.subr.mxu0 0.0
        %785 = vmatpush1.msra.mxu0 0.0
        %786 = vmatprep.subr.mxu0 0.0
        %787 = vmatpush1.msra.mxu0 0.0
        %788 = vmatprep.subr.mxu0 0.0
        %789 = vmatpush1.msra.mxu0 0.0
        %790 = vmatprep.subr.mxu0 0.0
        %791 = vmatpush1.msra.mxu0 0.0
        %792 = vmatprep.subr.mxu0 0.0
        %793 = vmatpush1.msra.mxu0 0.0
        %794 = vmatprep.subr.mxu0 0.0
        %795 = vmatpush1.msra.mxu0 0.0
        %796 = vmatprep.subr.mxu0 0.0
        %797 = vmatpush1.msra.mxu0 0.0
        %798 = vmatprep.subr.mxu0 0.0
        %799 = vmatpush1.msra.mxu0 0.0
        %800 = vmatprep.subr.mxu0 0.0
        %801 = vmatpush1.msra.mxu0 0.0
        %802 = vmatprep.subr.mxu0 0.0
        %803 = vmatpush1.msra.mxu0 0.0
        %804 = vmatprep.subr.mxu0 0.0
        %805 = vmatpush1.msra.mxu0 0.0
        %806 = vmatprep.subr.mxu0 0.0
        %807 = vmatpush1.msra.mxu0 0.0
        %808 = vmatprep.subr.mxu0 0.0
        %809 = vmatpush1.msra.mxu0 0.0
        %810 = vmatprep.subr.mxu0 0.0
        %811 = vmatpush1.msra.mxu0 0.0
        %812 = vmatprep.subr.mxu0 0.0
        %813 = vmatpush1.msra.mxu0 0.0
        %814 = vmatprep.subr.mxu0 0.0
        %815 = vmatpush1.msra.mxu0 0.0
        %816 = vmatprep.subr.mxu0 0.0
        %817 = vmatpush1.msra.mxu0 0.0
        %818 = vmatprep.subr.mxu0 0.0
        %819 = vmatpush1.msra.mxu0 0.0
        %820 = vmatprep.subr.mxu0 0.0
        %821 = vmatpush1.msra.mxu0 0.0
        %822 = vmatprep.subr.mxu0 0.0
        %823 = vmatpush1.msra.mxu0 0.0
        %824 = vmatprep.mubr.f32.mxu0 0.0
        %825 = vmatmul.mubr.f32.gmra.mrb[0].mxu0 %v754
        %v826 = vpop.f32.mrb[0].mxu0
        %v827 = vadd.f32 %v740, %v826
        %v828 = vpop.f32.mrb[0].mxu0
        %v829 = vadd.f32 %v742, %v828
        %830 = vdwg.mxu0
        %s831 = scalar_lea.vmem %s1, 28
        %v832 = vld [vmem:[%s831] sm:$0xf]
        %833 = vrot.lane.b32.xlu0 %v557, 112
        %v834 = vpop.permute.xlu0 %833
        %835 = vrot.lane.b32.xlu0 %v558, 112
        %v836 = vpop.permute.xlu0 %835
        %837 = vrot.lane.b32.xlu0 %v559, 112
        %v838 = vpop.permute.xlu0 %837
        %vm839 = vcmask 916480
        %v840 = vsel %vm839, %v834, %v836
        %v841 = vsel %vm839, %v836, %v838
        %v843 = vsel %vm390, %v832, 0
        %v845 = vsel %vm394, %v840, 0
        %v847 = vsel %vm394, %v841, 0
        %849 = vmatprep.subr.mxu0 %v847
        %850 = vmatpush1.msra.mxu0 %v845
        %851 = vmatprep.subr.mxu0 0.0
        %852 = vmatpush1.msra.mxu0 0.0
        %853 = vmatprep.subr.mxu0 0.0
        %854 = vmatpush1.msra.mxu0 0.0
        %855 = vmatprep.subr.mxu0 0.0
        %856 = vmatpush1.msra.mxu0 0.0
        %857 = vmatprep.subr.mxu0 0.0
        %858 = vmatpush1.msra.mxu0 0.0
        %859 = vmatprep.subr.mxu0 0.0
        %860 = vmatpush1.msra.mxu0 0.0
        %861 = vmatprep.subr.mxu0 0.0
        %862 = vmatpush1.msra.mxu0 0.0
        %863 = vmatprep.subr.mxu0 0.0
        %864 = vmatpush1.msra.mxu0 0.0
        %865 = vmatprep.subr.mxu0 0.0
        %866 = vmatpush1.msra.mxu0 0.0
        %867 = vmatprep.subr.mxu0 0.0
        %868 = vmatpush1.msra.mxu0 0.0
        %869 = vmatprep.subr.mxu0 0.0
        %870 = vmatpush1.msra.mxu0 0.0
        %871 = vmatprep.subr.mxu0 0.0
        %872 = vmatpush1.msra.mxu0 0.0
        %873 = vmatprep.subr.mxu0 0.0
        %874 = vmatpush1.msra.mxu0 0.0
        %875 = vmatprep.subr.mxu0 0.0
        %876 = vmatpush1.msra.mxu0 0.0
        %877 = vmatprep.subr.mxu0 0.0
        %878 = vmatpush1.msra.mxu0 0.0
        %879 = vmatprep.subr.mxu0 0.0
        %880 = vmatpush1.msra.mxu0 0.0
        %881 = vmatprep.subr.mxu0 0.0
        %882 = vmatpush1.msra.mxu0 0.0
        %883 = vmatprep.subr.mxu0 0.0
        %884 = vmatpush1.msra.mxu0 0.0
        %885 = vmatprep.subr.mxu0 0.0
        %886 = vmatpush1.msra.mxu0 0.0
        %887 = vmatprep.subr.mxu0 0.0
        %888 = vmatpush1.msra.mxu0 0.0
        %889 = vmatprep.subr.mxu0 0.0
        %890 = vmatpush1.msra.mxu0 0.0
        %891 = vmatprep.subr.mxu0 0.0
        %892 = vmatpush1.msra.mxu0 0.0
        %893 = vmatprep.subr.mxu0 0.0
        %894 = vmatpush1.msra.mxu0 0.0
        %895 = vmatprep.subr.mxu0 0.0
        %896 = vmatpush1.msra.mxu0 0.0
        %897 = vmatprep.subr.mxu0 0.0
        %898 = vmatpush1.msra.mxu0 0.0
        %899 = vmatprep.subr.mxu0 0.0
        %900 = vmatpush1.msra.mxu0 0.0
        %901 = vmatprep.subr.mxu0 0.0
        %902 = vmatpush1.msra.mxu0 0.0
        %903 = vmatprep.subr.mxu0 0.0
        %904 = vmatpush1.msra.mxu0 0.0
        %905 = vmatprep.subr.mxu0 0.0
        %906 = vmatpush1.msra.mxu0 0.0
        %907 = vmatprep.subr.mxu0 0.0
        %908 = vmatpush1.msra.mxu0 0.0
        %909 = vmatprep.subr.mxu0 0.0
        %910 = vmatpush1.msra.mxu0 0.0
        %911 = vmatprep.subr.mxu0 0.0
        %912 = vmatpush1.msra.mxu0 0.0
        %913 = vmatprep.mubr.f32.mxu0 0.0
        %914 = vmatmul.mubr.f32.gmra.mrb[0].mxu0 %v843
        %v915 = vpop.f32.mrb[0].mxu0
        %v916 = vadd.f32 0.0, %v915
        %v917 = vpop.f32.mrb[0].mxu0
        %v918 = vadd.f32 0.0, %v917
        %919 = vdwg.mxu0
        %v920 = vadd.f32 %v827, %v916
        %v921 = vadd.f32 %v829, %v918
        %v922 = vadd.f32 %v660, %v920
        %v923 = vadd.f32 %v661, %v921
        %s924 = scalar_lea.vmem %s1, 8
        %v925 = vld [vmem:[%s924] sm:$0xf]
        %s926 = scalar_lea.vmem %s1, 20
        %v927 = vld [vmem:[%s926] sm:$0xf]
        %928 = vrot.lane.b32.xlu0 %v557, 127
        %v929 = vpop.permute.xlu0 %928
        %930 = vrot.lane.b32.xlu0 %v558, 127
        %v931 = vpop.permute.xlu0 %930
        %932 = vrot.lane.b32.xlu0 %v559, 127
        %v933 = vpop.permute.xlu0 %932
        %vm934 = vcmask 1039360
        %v935 = vsel %vm934, %v929, %v931
        %v936 = vsel %vm934, %v931, %v933
        %v938 = vsel %vm390, %v927, 0
        %v940 = vsel %vm394, %v935, 0
        %v942 = vsel %vm394, %v936, 0
        %944 = vmatprep.subr.mxu0 %v942
        %945 = vmatpush1.msra.mxu0 %v940
        %946 = vmatprep.subr.mxu0 0.0
        %947 = vmatpush1.msra.mxu0 0.0
        %948 = vmatprep.subr.mxu0 0.0
        %949 = vmatpush1.msra.mxu0 0.0
        %950 = vmatprep.subr.mxu0 0.0
        %951 = vmatpush1.msra.mxu0 0.0
        %952 = vmatprep.subr.mxu0 0.0
        %953 = vmatpush1.msra.mxu0 0.0
        %954 = vmatprep.subr.mxu0 0.0
        %955 = vmatpush1.msra.mxu0 0.0
        %956 = vmatprep.subr.mxu0 0.0
        %957 = vmatpush1.msra.mxu0 0.0
        %958 = vmatprep.subr.mxu0 0.0
        %959 = vmatpush1.msra.mxu0 0.0
        %960 = vmatprep.subr.mxu0 0.0
        %961 = vmatpush1.msra.mxu0 0.0
        %962 = vmatprep.subr.mxu0 0.0
        %963 = vmatpush1.msra.mxu0 0.0
        %964 = vmatprep.subr.mxu0 0.0
        %965 = vmatpush1.msra.mxu0 0.0
        %966 = vmatprep.subr.mxu0 0.0
        %967 = vmatpush1.msra.mxu0 0.0
        %968 = vmatprep.subr.mxu0 0.0
        %969 = vmatpush1.msra.mxu0 0.0
        %970 = vmatprep.subr.mxu0 0.0
        %971 = vmatpush1.msra.mxu0 0.0
        %972 = vmatprep.subr.mxu0 0.0
        %973 = vmatpush1.msra.mxu0 0.0
        %974 = vmatprep.subr.mxu0 0.0
        %975 = vmatpush1.msra.mxu0 0.0
        %976 = vmatprep.subr.mxu0 0.0
        %977 = vmatpush1.msra.mxu0 0.0
        %978 = vmatprep.subr.mxu0 0.0
        %979 = vmatpush1.msra.mxu0 0.0
        %980 = vmatprep.subr.mxu0 0.0
        %981 = vmatpush1.msra.mxu0 0.0
        %982 = vmatprep.subr.mxu0 0.0
        %983 = vmatpush1.msra.mxu0 0.0
        %984 = vmatprep.subr.mxu0 0.0
        %985 = vmatpush1.msra.mxu0 0.0
        %986 = vmatprep.subr.mxu0 0.0
        %987 = vmatpush1.msra.mxu0 0.0
        %988 = vmatprep.subr.mxu0 0.0
        %989 = vmatpush1.msra.mxu0 0.0
        %990 = vmatprep.subr.mxu0 0.0
        %991 = vmatpush1.msra.mxu0 0.0
        %992 = vmatprep.subr.mxu0 0.0
        %993 = vmatpush1.msra.mxu0 0.0
        %994 = vmatprep.subr.mxu0 0.0
        %995 = vmatpush1.msra.mxu0 0.0
        %996 = vmatprep.subr.mxu0 0.0
        %997 = vmatpush1.msra.mxu0 0.0
        %998 = vmatprep.subr.mxu0 0.0
        %999 = vmatpush1.msra.mxu0 0.0
        %1000 = vmatprep.subr.mxu0 0.0
        %1001 = vmatpush1.msra.mxu0 0.0
        %1002 = vmatprep.subr.mxu0 0.0
        %1003 = vmatpush1.msra.mxu0 0.0
        %1004 = vmatprep.subr.mxu0 0.0
        %1005 = vmatpush1.msra.mxu0 0.0
        %1006 = vmatprep.subr.mxu0 0.0
        %1007 = vmatpush1.msra.mxu0 0.0
        %1008 = vmatprep.mubr.f32.mxu0 0.0
        %1009 = vmatmul.mubr.f32.gmra.mrb[0].mxu0 %v938
        %v1010 = vpop.f32.mrb[0].mxu0
        %v1011 = vadd.f32 0.0, %v1010
        %v1012 = vpop.f32.mrb[0].mxu0
        %v1013 = vadd.f32 0.0, %v1012
        %1014 = vdwg.mxu0
        %1015 = vrot.lane.b32.xlu0 %v372, 15
        %v1016 = vpop.permute.xlu0 %1015
        %1017 = vrot.lane.b32.xlu0 %v373, 15
        %v1018 = vpop.permute.xlu0 %1017
        %1019 = vrot.lane.b32.xlu0 %v374, 15
        %v1020 = vpop.permute.xlu0 %1019
        %vm1021 = vcmask 121856
        %v1022 = vsel %vm1021, %v1016, %v1018
        %v1023 = vsel %vm1021, %v1018, %v1020
        %v1025 = vsel %vm390, %v925, 0
        %v1027 = vsel %vm394, %v1022, 0
        %v1029 = vsel %vm394, %v1023, 0
        %1031 = vmatprep.subr.mxu0 %v1029
        %1032 = vmatpush1.msra.mxu0 %v1027
        %1033 = vmatprep.subr.mxu0 0.0
        %1034 = vmatpush1.msra.mxu0 0.0
        %1035 = vmatprep.subr.mxu0 0.0
        %1036 = vmatpush1.msra.mxu0 0.0
        %1037 = vmatprep.subr.mxu0 0.0
        %1038 = vmatpush1.msra.mxu0 0.0
        %1039 = vmatprep.subr.mxu0 0.0
        %1040 = vmatpush1.msra.mxu0 0.0
        %1041 = vmatprep.subr.mxu0 0.0
        %1042 = vmatpush1.msra.mxu0 0.0
        %1043 = vmatprep.subr.mxu0 0.0
        %1044 = vmatpush1.msra.mxu0 0.0
        %1045 = vmatprep.subr.mxu0 0.0
        %1046 = vmatpush1.msra.mxu0 0.0
        %1047 = vmatprep.subr.mxu0 0.0
        %1048 = vmatpush1.msra.mxu0 0.0
        %1049 = vmatprep.subr.mxu0 0.0
        %1050 = vmatpush1.msra.mxu0 0.0
        %1051 = vmatprep.subr.mxu0 0.0
        %1052 = vmatpush1.msra.mxu0 0.0
        %1053 = vmatprep.subr.mxu0 0.0
        %1054 = vmatpush1.msra.mxu0 0.0
        %1055 = vmatprep.subr.mxu0 0.0
        %1056 = vmatpush1.msra.mxu0 0.0
        %1057 = vmatprep.subr.mxu0 0.0
        %1058 = vmatpush1.msra.mxu0 0.0
        %1059 = vmatprep.subr.mxu0 0.0
        %1060 = vmatpush1.msra.mxu0 0.0
        %1061 = vmatprep.subr.mxu0 0.0
        %1062 = vmatpush1.msra.mxu0 0.0
        %1063 = vmatprep.subr.mxu0 0.0
        %1064 = vmatpush1.msra.mxu0 0.0
        %1065 = vmatprep.subr.mxu0 0.0
        %1066 = vmatpush1.msra.mxu0 0.0
        %1067 = vmatprep.subr.mxu0 0.0
        %1068 = vmatpush1.msra.mxu0 0.0
        %1069 = vmatprep.subr.mxu0 0.0
        %1070 = vmatpush1.msra.mxu0 0.0
        %1071 = vmatprep.subr.mxu0 0.0
        %1072 = vmatpush1.msra.mxu0 0.0
        %1073 = vmatprep.subr.mxu0 0.0
        %1074 = vmatpush1.msra.mxu0 0.0
        %1075 = vmatprep.subr.mxu0 0.0
        %1076 = vmatpush1.msra.mxu0 0.0
        %1077 = vmatprep.subr.mxu0 0.0
        %1078 = vmatpush1.msra.mxu0 0.0
        %1079 = vmatprep.subr.mxu0 0.0
        %1080 = vmatpush1.msra.mxu0 0.0
        %1081 = vmatprep.subr.mxu0 0.0
        %1082 = vmatpush1.msra.mxu0 0.0
        %1083 = vmatprep.subr.mxu0 0.0
        %1084 = vmatpush1.msra.mxu0 0.0
        %1085 = vmatprep.subr.mxu0 0.0
        %1086 = vmatpush1.msra.mxu0 0.0
        %1087 = vmatprep.subr.mxu0 0.0
        %1088 = vmatpush1.msra.mxu0 0.0
        %1089 = vmatprep.subr.mxu0 0.0
        %1090 = vmatpush1.msra.mxu0 0.0
        %1091 = vmatprep.subr.mxu0 0.0
        %1092 = vmatpush1.msra.mxu0 0.0
        %1093 = vmatprep.subr.mxu0 0.0
        %1094 = vmatpush1.msra.mxu0 0.0
        %1095 = vmatprep.mubr.f32.mxu0 0.0
        %1096 = vmatmul.mubr.f32.gmra.mrb[0].mxu0 %v1025
        %v1097 = vpop.f32.mrb[0].mxu0
        %v1098 = vadd.f32 %v1011, %v1097
        %v1099 = vpop.f32.mrb[0].mxu0
        %v1100 = vadd.f32 %v1013, %v1099
        %1101 = vdwg.mxu0
        %s1102 = scalar_lea.vmem %s1, 32
        %v1103 = vld [vmem:[%s1102] sm:$0xf]
        %1104 = vrot.lane.b32.xlu0 %v557, 111
        %v1105 = vpop.permute.xlu0 %1104
        %1106 = vrot.lane.b32.xlu0 %v558, 111
        %v1107 = vpop.permute.xlu0 %1106
        %1108 = vrot.lane.b32.xlu0 %v559, 111
        %v1109 = vpop.permute.xlu0 %1108
        %vm1110 = vcmask 908288
        %v1111 = vsel %vm1110, %v1105, %v1107
        %v1112 = vsel %vm1110, %v1107, %v1109
        %v1114 = vsel %vm390, %v1103, 0
        %v1116 = vsel %vm394, %v1111, 0
        %v1118 = vsel %vm394, %v1112, 0
        %1120 = vmatprep.subr.mxu0 %v1118
        %1121 = vmatpush1.msra.mxu0 %v1116
        %1122 = vmatprep.subr.mxu0 0.0
        %1123 = vmatpush1.msra.mxu0 0.0
        %1124 = vmatprep.subr.mxu0 0.0
        %1125 = vmatpush1.msra.mxu0 0.0
        %1126 = vmatprep.subr.mxu0 0.0
        %1127 = vmatpush1.msra.mxu0 0.0
        %1128 = vmatprep.subr.mxu0 0.0
        %1129 = vmatpush1.msra.mxu0 0.0
        %1130 = vmatprep.subr.mxu0 0.0
        %1131 = vmatpush1.msra.mxu0 0.0
        %1132 = vmatprep.subr.mxu0 0.0
        %1133 = vmatpush1.msra.mxu0 0.0
        %1134 = vmatprep.subr.mxu0 0.0
        %1135 = vmatpush1.msra.mxu0 0.0
        %1136 = vmatprep.subr.mxu0 0.0
        %1137 = vmatpush1.msra.mxu0 0.0
        %1138 = vmatprep.subr.mxu0 0.0
        %1139 = vmatpush1.msra.mxu0 0.0
        %1140 = vmatprep.subr.mxu0 0.0
        %1141 = vmatpush1.msra.mxu0 0.0
        %1142 = vmatprep.subr.mxu0 0.0
        %1143 = vmatpush1.msra.mxu0 0.0
        %1144 = vmatprep.subr.mxu0 0.0
        %1145 = vmatpush1.msra.mxu0 0.0
        %1146 = vmatprep.subr.mxu0 0.0
        %1147 = vmatpush1.msra.mxu0 0.0
        %1148 = vmatprep.subr.mxu0 0.0
        %1149 = vmatpush1.msra.mxu0 0.0
        %1150 = vmatprep.subr.mxu0 0.0
        %1151 = vmatpush1.msra.mxu0 0.0
        %1152 = vmatprep.subr.mxu0 0.0
        %1153 = vmatpush1.msra.mxu0 0.0
        %1154 = vmatprep.subr.mxu0 0.0
        %1155 = vmatpush1.msra.mxu0 0.0
        %1156 = vmatprep.subr.mxu0 0.0
        %1157 = vmatpush1.msra.mxu0 0.0
        %1158 = vmatprep.subr.mxu0 0.0
        %1159 = vmatpush1.msra.mxu0 0.0
        %1160 = vmatprep.subr.mxu0 0.0
        %1161 = vmatpush1.msra.mxu0 0.0
        %1162 = vmatprep.subr.mxu0 0.0
        %1163 = vmatpush1.msra.mxu0 0.0
        %1164 = vmatprep.subr.mxu0 0.0
        %1165 = vmatpush1.msra.mxu0 0.0
        %1166 = vmatprep.subr.mxu0 0.0
        %1167 = vmatpush1.msra.mxu0 0.0
        %1168 = vmatprep.subr.mxu0 0.0
        %1169 = vmatpush1.msra.mxu0 0.0
        %1170 = vmatprep.subr.mxu0 0.0
        %1171 = vmatpush1.msra.mxu0 0.0
        %1172 = vmatprep.subr.mxu0 0.0
        %1173 = vmatpush1.msra.mxu0 0.0
        %1174 = vmatprep.subr.mxu0 0.0
        %1175 = vmatpush1.msra.mxu0 0.0
        %1176 = vmatprep.subr.mxu0 0.0
        %1177 = vmatpush1.msra.mxu0 0.0
        %1178 = vmatprep.subr.mxu0 0.0
        %1179 = vmatpush1.msra.mxu0 0.0
        %1180 = vmatprep.subr.mxu0 0.0
        %1181 = vmatpush1.msra.mxu0 0.0
        %1182 = vmatprep.subr.mxu0 0.0
        %1183 = vmatpush1.msra.mxu0 0.0
        %1184 = vmatprep.mubr.f32.mxu0 0.0
        %1185 = vmatmul.mubr.f32.gmra.mrb[0].mxu0 %v1114
        %v1186 = vpop.f32.mrb[0].mxu0
        %v1187 = vadd.f32 0.0, %v1186
        %v1188 = vpop.f32.mrb[0].mxu0
        %v1189 = vadd.f32 0.0, %v1188
        %1190 = vdwg.mxu0
        %v1191 = vadd.f32 %v1098, %v1187
        %v1192 = vadd.f32 %v1100, %v1189
        %v1193 = vsel %vm370, 1, 0
        %v1194 = vsel %vm371, 1, 0
        %vm1195 = vcmp.eq.s32.totalorder %v1193, 1
        %vm1196 = vcmp.eq.s32.totalorder %v1194, 1
        %v1197 = vsel %vm1195, %v1191, 0.0
        %v1198 = vsel %vm1196, %v1192, 0.0
        %v1199 = vadd.f32 %v922, %v1197
        %v1200 = vadd.f32 %v923, %v1198
        %v1201 = vld [vmem:[%s2] sm:$0xf]
        %1203 = vset.pattern.permute.xlu0 0
        %1204 = vperm.xlu0 %1203, %v1201
        %v1205 = vpop.permute.xlu0 %1204
        %v1207 = vadd.f32 %v1199, %v1205
        %v1208 = vadd.f32 %v1200, %v1205
        %v1209 = vmax.f32 %v1207, 0.0
        %v1210 = vmax.f32 %v1208, 0.0
        %v1213 = vrot.slane %v1209, 4
        %v1214 = vrot.slane %v1210, 4
        %1217 = vst [vmem:[#allocation2 + $0x8] sm:$0xf0] %v1213
        %1218 = vst [vmem:[#allocation2 + $0x10] sm:$0xf0] %v1214
        %v1219 = vld [vmem:[#allocation2] sm:$0xff]
        %v1220 = vld [vmem:[#allocation2 + $0x8] sm:$0xff]
        %v1221 = vld [vmem:[#allocation2 + $0x10] sm:$0xff]
        %v1222 = vld [vmem:[%s3] sm:$0xf]
        %s1223 = scalar_lea.vmem %s3, 12
        %v1224 = vld [vmem:[%s1223] sm:$0xf]
        %1228 = vrot.lane.b32.xlu0 %v1219, 1
        %v1229 = vpop.permute.xlu0 %1228
        %1230 = vrot.lane.b32.xlu0 %v1220, 1
        %v1231 = vpop.permute.xlu0 %1230
        %1232 = vrot.lane.b32.xlu0 %v1221, 1
        %v1233 = vpop.permute.xlu0 %1232
        %v1234 = vsel %vm387, %v1229, %v1231
        %v1235 = vsel %vm387, %v1231, %v1233
        %vm1238 = vcmask 64512
        %v1240 = vsel %vm1238, %v1224, 0
        %1242 = vmatprep.subr.mxu0 %v1235
        %1243 = vmatpush1.msra.mxu0 %v1234
        %1244 = vmatprep.subr.mxu0 0.0
        %1245 = vmatpush1.msra.mxu0 0.0
        %1246 = vmatprep.subr.mxu0 0.0
        %1247 = vmatpush1.msra.mxu0 0.0
        %1248 = vmatprep.subr.mxu0 0.0
        %1249 = vmatpush1.msra.mxu0 0.0
        %1250 = vmatprep.subr.mxu0 0.0
        %1251 = vmatpush1.msra.mxu0 0.0
        %1252 = vmatprep.subr.mxu0 0.0
        %1253 = vmatpush1.msra.mxu0 0.0
        %1254 = vmatprep.subr.mxu0 0.0
        %1255 = vmatpush1.msra.mxu0 0.0
        %1256 = vmatprep.subr.mxu0 0.0
        %1257 = vmatpush1.msra.mxu0 0.0
        %1258 = vmatprep.subr.mxu0 0.0
        %1259 = vmatpush1.msra.mxu0 0.0
        %1260 = vmatprep.subr.mxu0 0.0
        %1261 = vmatpush1.msra.mxu0 0.0
        %1262 = vmatprep.subr.mxu0 0.0
        %1263 = vmatpush1.msra.mxu0 0.0
        %1264 = vmatprep.subr.mxu0 0.0
        %1265 = vmatpush1.msra.mxu0 0.0
        %1266 = vmatprep.subr.mxu0 0.0
        %1267 = vmatpush1.msra.mxu0 0.0
        %1268 = vmatprep.subr.mxu0 0.0
        %1269 = vmatpush1.msra.mxu0 0.0
        %1270 = vmatprep.subr.mxu0 0.0
        %1271 = vmatpush1.msra.mxu0 0.0
        %1272 = vmatprep.subr.mxu0 0.0
        %1273 = vmatpush1.msra.mxu0 0.0
        %1274 = vmatprep.subr.mxu0 0.0
        %1275 = vmatpush1.msra.mxu0 0.0
        %1276 = vmatprep.subr.mxu0 0.0
        %1277 = vmatpush1.msra.mxu0 0.0
        %1278 = vmatprep.subr.mxu0 0.0
        %1279 = vmatpush1.msra.mxu0 0.0
        %1280 = vmatprep.subr.mxu0 0.0
        %1281 = vmatpush1.msra.mxu0 0.0
        %1282 = vmatprep.subr.mxu0 0.0
        %1283 = vmatpush1.msra.mxu0 0.0
        %1284 = vmatprep.subr.mxu0 0.0
        %1285 = vmatpush1.msra.mxu0 0.0
        %1286 = vmatprep.subr.mxu0 0.0
        %1287 = vmatpush1.msra.mxu0 0.0
        %1288 = vmatprep.subr.mxu0 0.0
        %1289 = vmatpush1.msra.mxu0 0.0
        %1290 = vmatprep.subr.mxu0 0.0
        %1291 = vmatpush1.msra.mxu0 0.0
        %1292 = vmatprep.subr.mxu0 0.0
        %1293 = vmatpush1.msra.mxu0 0.0
        %1294 = vmatprep.subr.mxu0 0.0
        %1295 = vmatpush1.msra.mxu0 0.0
        %1296 = vmatprep.subr.mxu0 0.0
        %1297 = vmatpush1.msra.mxu0 0.0
        %1298 = vmatprep.subr.mxu0 0.0
        %1299 = vmatpush1.msra.mxu0 0.0
        %1300 = vmatprep.subr.mxu0 0.0
        %1301 = vmatpush1.msra.mxu0 0.0
        %1302 = vmatprep.subr.mxu0 0.0
        %1303 = vmatpush1.msra.mxu0 0.0
        %1304 = vmatprep.subr.mxu0 0.0
        %1305 = vmatpush1.msra.mxu0 0.0
        %1306 = vmatprep.mubr.f32.mxu0 0.0
        %1307 = vmatmul.mubr.f32.gmra.mrb[0].mxu0 %v1240
        %v1308 = vpop.f32.mrb[0].mxu0
        %v1309 = vadd.f32 0.0, %v1308
        %v1310 = vpop.f32.mrb[0].mxu0
        %v1311 = vadd.f32 0.0, %v1310
        %1312 = vdwg.mxu0
        %1313 = vrot.lane.b32.xlu0 %v1219, 17
        %v1314 = vpop.permute.xlu0 %1313
        %1315 = vrot.lane.b32.xlu0 %v1220, 17
        %v1316 = vpop.permute.xlu0 %1315
        %1317 = vrot.lane.b32.xlu0 %v1221, 17
        %v1318 = vpop.permute.xlu0 %1317
        %v1319 = vsel %vm476, %v1314, %v1316
        %v1320 = vsel %vm476, %v1316, %v1318
        %v1324 = vsel %vm1238, %v1222, 0
        %1326 = vmatprep.subr.mxu0 %v1320
        %1327 = vmatpush1.msra.mxu0 %v1319
        %1328 = vmatprep.subr.mxu0 0.0
        %1329 = vmatpush1.msra.mxu0 0.0
        %1330 = vmatprep.subr.mxu0 0.0
        %1331 = vmatpush1.msra.mxu0 0.0
        %1332 = vmatprep.subr.mxu0 0.0
        %1333 = vmatpush1.msra.mxu0 0.0
        %1334 = vmatprep.subr.mxu0 0.0
        %1335 = vmatpush1.msra.mxu0 0.0
        %1336 = vmatprep.subr.mxu0 0.0
        %1337 = vmatpush1.msra.mxu0 0.0
        %1338 = vmatprep.subr.mxu0 0.0
        %1339 = vmatpush1.msra.mxu0 0.0
        %1340 = vmatprep.subr.mxu0 0.0
        %1341 = vmatpush1.msra.mxu0 0.0
        %1342 = vmatprep.subr.mxu0 0.0
        %1343 = vmatpush1.msra.mxu0 0.0
        %1344 = vmatprep.subr.mxu0 0.0
        %1345 = vmatpush1.msra.mxu0 0.0
        %1346 = vmatprep.subr.mxu0 0.0
        %1347 = vmatpush1.msra.mxu0 0.0
        %1348 = vmatprep.subr.mxu0 0.0
        %1349 = vmatpush1.msra.mxu0 0.0
        %1350 = vmatprep.subr.mxu0 0.0
        %1351 = vmatpush1.msra.mxu0 0.0
        %1352 = vmatprep.subr.mxu0 0.0
        %1353 = vmatpush1.msra.mxu0 0.0
        %1354 = vmatprep.subr.mxu0 0.0
        %1355 = vmatpush1.msra.mxu0 0.0
        %1356 = vmatprep.subr.mxu0 0.0
        %1357 = vmatpush1.msra.mxu0 0.0
        %1358 = vmatprep.subr.mxu0 0.0
        %1359 = vmatpush1.msra.mxu0 0.0
        %1360 = vmatprep.subr.mxu0 0.0
        %1361 = vmatpush1.msra.mxu0 0.0
        %1362 = vmatprep.subr.mxu0 0.0
        %1363 = vmatpush1.msra.mxu0 0.0
        %1364 = vmatprep.subr.mxu0 0.0
        %1365 = vmatpush1.msra.mxu0 0.0
        %1366 = vmatprep.subr.mxu0 0.0
        %1367 = vmatpush1.msra.mxu0 0.0
        %1368 = vmatprep.subr.mxu0 0.0
        %1369 = vmatpush1.msra.mxu0 0.0
        %1370 = vmatprep.subr.mxu0 0.0
        %1371 = vmatpush1.msra.mxu0 0.0
        %1372 = vmatprep.subr.mxu0 0.0
        %1373 = vmatpush1.msra.mxu0 0.0
        %1374 = vmatprep.subr.mxu0 0.0
        %1375 = vmatpush1.msra.mxu0 0.0
        %1376 = vmatprep.subr.mxu0 0.0
        %1377 = vmatpush1.msra.mxu0 0.0
        %1378 = vmatprep.subr.mxu0 0.0
        %1379 = vmatpush1.msra.mxu0 0.0
        %1380 = vmatprep.subr.mxu0 0.0
        %1381 = vmatpush1.msra.mxu0 0.0
        %1382 = vmatprep.subr.mxu0 0.0
        %1383 = vmatpush1.msra.mxu0 0.0
        %1384 = vmatprep.subr.mxu0 0.0
        %1385 = vmatpush1.msra.mxu0 0.0
        %1386 = vmatprep.subr.mxu0 0.0
        %1387 = vmatpush1.msra.mxu0 0.0
        %1388 = vmatprep.subr.mxu0 0.0
        %1389 = vmatpush1.msra.mxu0 0.0
        %1390 = vmatprep.mubr.f32.mxu0 0.0
        %1391 = vmatmul.mubr.f32.gmra.mrb[0].mxu0 %v1324
        %v1392 = vpop.f32.mrb[0].mxu0
        %v1393 = vadd.f32 %v1309, %v1392
        %v1394 = vpop.f32.mrb[0].mxu0
        %v1395 = vadd.f32 %v1311, %v1394
        %1396 = vdwg.mxu0
        %v1397 = vld [vmem:[#allocation2 + $0x8] sm:$0xff]
        %v1398 = vld [vmem:[#allocation2 + $0x10] sm:$0xff]
        %v1399 = vld [vmem:[#allocation2 + $0x18] sm:$0xff]
        %s1400 = scalar_lea.vmem %s3, 24
        %v1401 = vld [vmem:[%s1400] sm:$0xf]
        %1405 = vrot.lane.b32.xlu0 %v1397, 113
        %v1406 = vpop.permute.xlu0 %1405
        %1407 = vrot.lane.b32.xlu0 %v1398, 113
        %v1408 = vpop.permute.xlu0 %1407
        %1409 = vrot.lane.b32.xlu0 %v1399, 113
        %v1410 = vpop.permute.xlu0 %1409
        %v1411 = vsel %vm571, %v1406, %v1408
        %v1412 = vsel %vm571, %v1408, %v1410
        %v1416 = vsel %vm1238, %v1401, 0
        %1418 = vmatprep.subr.mxu0 %v1412
        %1419 = vmatpush1.msra.mxu0 %v1411
        %1420 = vmatprep.subr.mxu0 0.0
        %1421 = vmatpush1.msra.mxu0 0.0
        %1422 = vmatprep.subr.mxu0 0.0
        %1423 = vmatpush1.msra.mxu0 0.0
        %1424 = vmatprep.subr.mxu0 0.0
        %1425 = vmatpush1.msra.mxu0 0.0
        %1426 = vmatprep.subr.mxu0 0.0
        %1427 = vmatpush1.msra.mxu0 0.0
        %1428 = vmatprep.subr.mxu0 0.0
        %1429 = vmatpush1.msra.mxu0 0.0
        %1430 = vmatprep.subr.mxu0 0.0
        %1431 = vmatpush1.msra.mxu0 0.0
        %1432 = vmatprep.subr.mxu0 0.0
        %1433 = vmatpush1.msra.mxu0 0.0
        %1434 = vmatprep.subr.mxu0 0.0
        %1435 = vmatpush1.msra.mxu0 0.0
        %1436 = vmatprep.subr.mxu0 0.0
        %1437 = vmatpush1.msra.mxu0 0.0
        %1438 = vmatprep.subr.mxu0 0.0
        %1439 = vmatpush1.msra.mxu0 0.0
        %1440 = vmatprep.subr.mxu0 0.0
        %1441 = vmatpush1.msra.mxu0 0.0
        %1442 = vmatprep.subr.mxu0 0.0
        %1443 = vmatpush1.msra.mxu0 0.0
        %1444 = vmatprep.subr.mxu0 0.0
        %1445 = vmatpush1.msra.mxu0 0.0
        %1446 = vmatprep.subr.mxu0 0.0
        %1447 = vmatpush1.msra.mxu0 0.0
        %1448 = vmatprep.subr.mxu0 0.0
        %1449 = vmatpush1.msra.mxu0 0.0
        %1450 = vmatprep.subr.mxu0 0.0
        %1451 = vmatpush1.msra.mxu0 0.0
        %1452 = vmatprep.subr.mxu0 0.0
        %1453 = vmatpush1.msra.mxu0 0.0
        %1454 = vmatprep.subr.mxu0 0.0
        %1455 = vmatpush1.msra.mxu0 0.0
        %1456 = vmatprep.subr.mxu0 0.0
        %1457 = vmatpush1.msra.mxu0 0.0
        %1458 = vmatprep.subr.mxu0 0.0
        %1459 = vmatpush1.msra.mxu0 0.0
        %1460 = vmatprep.subr.mxu0 0.0
        %1461 = vmatpush1.msra.mxu0 0.0
        %1462 = vmatprep.subr.mxu0 0.0
        %1463 = vmatpush1.msra.mxu0 0.0
        %1464 = vmatprep.subr.mxu0 0.0
        %1465 = vmatpush1.msra.mxu0 0.0
        %1466 = vmatprep.subr.mxu0 0.0
        %1467 = vmatpush1.msra.mxu0 0.0
        %1468 = vmatprep.subr.mxu0 0.0
        %1469 = vmatpush1.msra.mxu0 0.0
        %1470 = vmatprep.subr.mxu0 0.0
        %1471 = vmatpush1.msra.mxu0 0.0
        %1472 = vmatprep.subr.mxu0 0.0
        %1473 = vmatpush1.msra.mxu0 0.0
        %1474 = vmatprep.subr.mxu0 0.0
        %1475 = vmatpush1.msra.mxu0 0.0
        %1476 = vmatprep.subr.mxu0 0.0
        %1477 = vmatpush1.msra.mxu0 0.0
        %1478 = vmatprep.subr.mxu0 0.0
        %1479 = vmatpush1.msra.mxu0 0.0
        %1480 = vmatprep.subr.mxu0 0.0
        %1481 = vmatpush1.msra.mxu0 0.0
        %1482 = vmatprep.mubr.f32.mxu0 0.0
        %1483 = vmatmul.mubr.f32.gmra.mrb[0].mxu0 %v1416
        %v1484 = vpop.f32.mrb[0].mxu0
        %v1485 = vadd.f32 0.0, %v1484
        %v1486 = vpop.f32.mrb[0].mxu0
        %v1487 = vadd.f32 0.0, %v1486
        %1488 = vdwg.mxu0
        %v1489 = vadd.f32 %v1393, %v1485
        %v1490 = vadd.f32 %v1395, %v1487
        %v1491 = vsel %vm656, %v1489, 0.0
        %v1492 = vsel %vm657, %v1490, 0.0
        %v1493 = vadd.f32 %v1491, 0.0
        %v1494 = vadd.f32 %v1492, 0.0
        %s1495 = scalar_lea.vmem %s3, 4
        %v1496 = vld [vmem:[%s1495] sm:$0xf]
        %s1497 = scalar_lea.vmem %s3, 16
        %v1498 = vld [vmem:[%s1497] sm:$0xf]
        %v1500 = vsel %vm1238, %v1498, 0
        %1502 = vmatprep.subr.mxu0 %v1221
        %1503 = vmatpush1.msra.mxu0 %v1220
        %1504 = vmatprep.subr.mxu0 0.0
        %1505 = vmatpush1.msra.mxu0 0.0
        %1506 = vmatprep.subr.mxu0 0.0
        %1507 = vmatpush1.msra.mxu0 0.0
        %1508 = vmatprep.subr.mxu0 0.0
        %1509 = vmatpush1.msra.mxu0 0.0
        %1510 = vmatprep.subr.mxu0 0.0
        %1511 = vmatpush1.msra.mxu0 0.0
        %1512 = vmatprep.subr.mxu0 0.0
        %1513 = vmatpush1.msra.mxu0 0.0
        %1514 = vmatprep.subr.mxu0 0.0
        %1515 = vmatpush1.msra.mxu0 0.0
        %1516 = vmatprep.subr.mxu0 0.0
        %1517 = vmatpush1.msra.mxu0 0.0
        %1518 = vmatprep.subr.mxu0 0.0
        %1519 = vmatpush1.msra.mxu0 0.0
        %1520 = vmatprep.subr.mxu0 0.0
        %1521 = vmatpush1.msra.mxu0 0.0
        %1522 = vmatprep.subr.mxu0 0.0
        %1523 = vmatpush1.msra.mxu0 0.0
        %1524 = vmatprep.subr.mxu0 0.0
        %1525 = vmatpush1.msra.mxu0 0.0
        %1526 = vmatprep.subr.mxu0 0.0
        %1527 = vmatpush1.msra.mxu0 0.0
        %1528 = vmatprep.subr.mxu0 0.0
        %1529 = vmatpush1.msra.mxu0 0.0
        %1530 = vmatprep.subr.mxu0 0.0
        %1531 = vmatpush1.msra.mxu0 0.0
        %1532 = vmatprep.subr.mxu0 0.0
        %1533 = vmatpush1.msra.mxu0 0.0
        %1534 = vmatprep.subr.mxu0 0.0
        %1535 = vmatpush1.msra.mxu0 0.0
        %1536 = vmatprep.subr.mxu0 0.0
        %1537 = vmatpush1.msra.mxu0 0.0
        %1538 = vmatprep.subr.mxu0 0.0
        %1539 = vmatpush1.msra.mxu0 0.0
        %1540 = vmatprep.subr.mxu0 0.0
        %1541 = vmatpush1.msra.mxu0 0.0
        %1542 = vmatprep.subr.mxu0 0.0
        %1543 = vmatpush1.msra.mxu0 0.0
        %1544 = vmatprep.subr.mxu0 0.0
        %1545 = vmatpush1.msra.mxu0 0.0
        %1546 = vmatprep.subr.mxu0 0.0
        %1547 = vmatpush1.msra.mxu0 0.0
        %1548 = vmatprep.subr.mxu0 0.0
        %1549 = vmatpush1.msra.mxu0 0.0
        %1550 = vmatprep.subr.mxu0 0.0
        %1551 = vmatpush1.msra.mxu0 0.0
        %1552 = vmatprep.subr.mxu0 0.0
        %1553 = vmatpush1.msra.mxu0 0.0
        %1554 = vmatprep.subr.mxu0 0.0
        %1555 = vmatpush1.msra.mxu0 0.0
        %1556 = vmatprep.subr.mxu0 0.0
        %1557 = vmatpush1.msra.mxu0 0.0
        %1558 = vmatprep.subr.mxu0 0.0
        %1559 = vmatpush1.msra.mxu0 0.0
        %1560 = vmatprep.subr.mxu0 0.0
        %1561 = vmatpush1.msra.mxu0 0.0
        %1562 = vmatprep.subr.mxu0 0.0
        %1563 = vmatpush1.msra.mxu0 0.0
        %1564 = vmatprep.subr.mxu0 0.0
        %1565 = vmatpush1.msra.mxu0 0.0
        %1566 = vmatprep.mubr.f32.mxu0 0.0
        %1567 = vmatmul.mubr.f32.gmra.mrb[0].mxu0 %v1500
        %v1568 = vpop.f32.mrb[0].mxu0
        %v1569 = vadd.f32 0.0, %v1568
        %v1570 = vpop.f32.mrb[0].mxu0
        %v1571 = vadd.f32 0.0, %v1570
        %1572 = vdwg.mxu0
        %1573 = vrot.lane.b32.xlu0 %v1219, 16
        %v1574 = vpop.permute.xlu0 %1573
        %1575 = vrot.lane.b32.xlu0 %v1220, 16
        %v1576 = vpop.permute.xlu0 %1575
        %1577 = vrot.lane.b32.xlu0 %v1221, 16
        %v1578 = vpop.permute.xlu0 %1577
        %v1579 = vsel %vm750, %v1574, %v1576
        %v1580 = vsel %vm750, %v1576, %v1578
        %v1584 = vsel %vm1238, %v1496, 0
        %1586 = vmatprep.subr.mxu0 %v1580
        %1587 = vmatpush1.msra.mxu0 %v1579
        %1588 = vmatprep.subr.mxu0 0.0
        %1589 = vmatpush1.msra.mxu0 0.0
        %1590 = vmatprep.subr.mxu0 0.0
        %1591 = vmatpush1.msra.mxu0 0.0
        %1592 = vmatprep.subr.mxu0 0.0
        %1593 = vmatpush1.msra.mxu0 0.0
        %1594 = vmatprep.subr.mxu0 0.0
        %1595 = vmatpush1.msra.mxu0 0.0
        %1596 = vmatprep.subr.mxu0 0.0
        %1597 = vmatpush1.msra.mxu0 0.0
        %1598 = vmatprep.subr.mxu0 0.0
        %1599 = vmatpush1.msra.mxu0 0.0
        %1600 = vmatprep.subr.mxu0 0.0
        %1601 = vmatpush1.msra.mxu0 0.0
        %1602 = vmatprep.subr.mxu0 0.0
        %1603 = vmatpush1.msra.mxu0 0.0
        %1604 = vmatprep.subr.mxu0 0.0
        %1605 = vmatpush1.msra.mxu0 0.0
        %1606 = vmatprep.subr.mxu0 0.0
        %1607 = vmatpush1.msra.mxu0 0.0
        %1608 = vmatprep.subr.mxu0 0.0
        %1609 = vmatpush1.msra.mxu0 0.0
        %1610 = vmatprep.subr.mxu0 0.0
        %1611 = vmatpush1.msra.mxu0 0.0
        %1612 = vmatprep.subr.mxu0 0.0
        %1613 = vmatpush1.msra.mxu0 0.0
        %1614 = vmatprep.subr.mxu0 0.0
        %1615 = vmatpush1.msra.mxu0 0.0
        %1616 = vmatprep.subr.mxu0 0.0
        %1617 = vmatpush1.msra.mxu0 0.0
        %1618 = vmatprep.subr.mxu0 0.0
        %1619 = vmatpush1.msra.mxu0 0.0
        %1620 = vmatprep.subr.mxu0 0.0
        %1621 = vmatpush1.msra.mxu0 0.0
        %1622 = vmatprep.subr.mxu0 0.0
        %1623 = vmatpush1.msra.mxu0 0.0
        %1624 = vmatprep.subr.mxu0 0.0
        %1625 = vmatpush1.msra.mxu0 0.0
        %1626 = vmatprep.subr.mxu0 0.0
        %1627 = vmatpush1.msra.mxu0 0.0
        %1628 = vmatprep.subr.mxu0 0.0
        %1629 = vmatpush1.msra.mxu0 0.0
        %1630 = vmatprep.subr.mxu0 0.0
        %1631 = vmatpush1.msra.mxu0 0.0
        %1632 = vmatprep.subr.mxu0 0.0
        %1633 = vmatpush1.msra.mxu0 0.0
        %1634 = vmatprep.subr.mxu0 0.0
        %1635 = vmatpush1.msra.mxu0 0.0
        %1636 = vmatprep.subr.mxu0 0.0
        %1637 = vmatpush1.msra.mxu0 0.0
        %1638 = vmatprep.subr.mxu0 0.0
        %1639 = vmatpush1.msra.mxu0 0.0
        %1640 = vmatprep.subr.mxu0 0.0
        %1641 = vmatpush1.msra.mxu0 0.0
        %1642 = vmatprep.subr.mxu0 0.0
        %1643 = vmatpush1.msra.mxu0 0.0
        %1644 = vmatprep.subr.mxu0 0.0
        %1645 = vmatpush1.msra.mxu0 0.0
        %1646 = vmatprep.subr.mxu0 0.0
        %1647 = vmatpush1.msra.mxu0 0.0
        %1648 = vmatprep.subr.mxu0 0.0
        %1649 = vmatpush1.msra.mxu0 0.0
        %1650 = vmatprep.mubr.f32.mxu0 0.0
        %1651 = vmatmul.mubr.f32.gmra.mrb[0].mxu0 %v1584
        %v1652 = vpop.f32.mrb[0].mxu0
        %v1653 = vadd.f32 %v1569, %v1652
        %v1654 = vpop.f32.mrb[0].mxu0
        %v1655 = vadd.f32 %v1571, %v1654
        %1656 = vdwg.mxu0
        %s1657 = scalar_lea.vmem %s3, 28
        %v1658 = vld [vmem:[%s1657] sm:$0xf]
        %1659 = vrot.lane.b32.xlu0 %v1397, 112
        %v1660 = vpop.permute.xlu0 %1659
        %1661 = vrot.lane.b32.xlu0 %v1398, 112
        %v1662 = vpop.permute.xlu0 %1661
        %1663 = vrot.lane.b32.xlu0 %v1399, 112
        %v1664 = vpop.permute.xlu0 %1663
        %v1665 = vsel %vm839, %v1660, %v1662
        %v1666 = vsel %vm839, %v1662, %v1664
        %v1670 = vsel %vm1238, %v1658, 0
        %1672 = vmatprep.subr.mxu0 %v1666
        %1673 = vmatpush1.msra.mxu0 %v1665
        %1674 = vmatprep.subr.mxu0 0.0
        %1675 = vmatpush1.msra.mxu0 0.0
        %1676 = vmatprep.subr.mxu0 0.0
        %1677 = vmatpush1.msra.mxu0 0.0
        %1678 = vmatprep.subr.mxu0 0.0
        %1679 = vmatpush1.msra.mxu0 0.0
        %1680 = vmatprep.subr.mxu0 0.0
        %1681 = vmatpush1.msra.mxu0 0.0
        %1682 = vmatprep.subr.mxu0 0.0
        %1683 = vmatpush1.msra.mxu0 0.0
        %1684 = vmatprep.subr.mxu0 0.0
        %1685 = vmatpush1.msra.mxu0 0.0
        %1686 = vmatprep.subr.mxu0 0.0
        %1687 = vmatpush1.msra.mxu0 0.0
        %1688 = vmatprep.subr.mxu0 0.0
        %1689 = vmatpush1.msra.mxu0 0.0
        %1690 = vmatprep.subr.mxu0 0.0
        %1691 = vmatpush1.msra.mxu0 0.0
        %1692 = vmatprep.subr.mxu0 0.0
        %1693 = vmatpush1.msra.mxu0 0.0
        %1694 = vmatprep.subr.mxu0 0.0
        %1695 = vmatpush1.msra.mxu0 0.0
        %1696 = vmatprep.subr.mxu0 0.0
        %1697 = vmatpush1.msra.mxu0 0.0
        %1698 = vmatprep.subr.mxu0 0.0
        %1699 = vmatpush1.msra.mxu0 0.0
        %1700 = vmatprep.subr.mxu0 0.0
        %1701 = vmatpush1.msra.mxu0 0.0
        %1702 = vmatprep.subr.mxu0 0.0
        %1703 = vmatpush1.msra.mxu0 0.0
        %1704 = vmatprep.subr.mxu0 0.0
        %1705 = vmatpush1.msra.mxu0 0.0
        %1706 = vmatprep.subr.mxu0 0.0
        %1707 = vmatpush1.msra.mxu0 0.0
        %1708 = vmatprep.subr.mxu0 0.0
        %1709 = vmatpush1.msra.mxu0 0.0
        %1710 = vmatprep.subr.mxu0 0.0
        %1711 = vmatpush1.msra.mxu0 0.0
        %1712 = vmatprep.subr.mxu0 0.0
        %1713 = vmatpush1.msra.mxu0 0.0
        %1714 = vmatprep.subr.mxu0 0.0
        %1715 = vmatpush1.msra.mxu0 0.0
        %1716 = vmatprep.subr.mxu0 0.0
        %1717 = vmatpush1.msra.mxu0 0.0
        %1718 = vmatprep.subr.mxu0 0.0
        %1719 = vmatpush1.msra.mxu0 0.0
        %1720 = vmatprep.subr.mxu0 0.0
        %1721 = vmatpush1.msra.mxu0 0.0
        %1722 = vmatprep.subr.mxu0 0.0
        %1723 = vmatpush1.msra.mxu0 0.0
        %1724 = vmatprep.subr.mxu0 0.0
        %1725 = vmatpush1.msra.mxu0 0.0
        %1726 = vmatprep.subr.mxu0 0.0
        %1727 = vmatpush1.msra.mxu0 0.0
        %1728 = vmatprep.subr.mxu0 0.0
        %1729 = vmatpush1.msra.mxu0 0.0
        %1730 = vmatprep.subr.mxu0 0.0
        %1731 = vmatpush1.msra.mxu0 0.0
        %1732 = vmatprep.subr.mxu0 0.0
        %1733 = vmatpush1.msra.mxu0 0.0
        %1734 = vmatprep.subr.mxu0 0.0
        %1735 = vmatpush1.msra.mxu0 0.0
        %1736 = vmatprep.mubr.f32.mxu0 0.0
        %1737 = vmatmul.mubr.f32.gmra.mrb[0].mxu0 %v1670
        %v1738 = vpop.f32.mrb[0].mxu0
        %v1739 = vadd.f32 0.0, %v1738
        %v1740 = vpop.f32.mrb[0].mxu0
        %v1741 = vadd.f32 0.0, %v1740
        %1742 = vdwg.mxu0
        %v1743 = vadd.f32 %v1653, %v1739
        %v1744 = vadd.f32 %v1655, %v1741
        %v1745 = vadd.f32 %v1493, %v1743
        %v1746 = vadd.f32 %v1494, %v1744
        %s1747 = scalar_lea.vmem %s3, 8
        %v1748 = vld [vmem:[%s1747] sm:$0xf]
        %s1749 = scalar_lea.vmem %s3, 20
        %v1750 = vld [vmem:[%s1749] sm:$0xf]
        %1751 = vrot.lane.b32.xlu0 %v1397, 127
        %v1752 = vpop.permute.xlu0 %1751
        %1753 = vrot.lane.b32.xlu0 %v1398, 127
        %v1754 = vpop.permute.xlu0 %1753
        %1755 = vrot.lane.b32.xlu0 %v1399, 127
        %v1756 = vpop.permute.xlu0 %1755
        %v1757 = vsel %vm934, %v1752, %v1754
        %v1758 = vsel %vm934, %v1754, %v1756
        %v1762 = vsel %vm1238, %v1750, 0
        %1764 = vmatprep.subr.mxu0 %v1758
        %1765 = vmatpush1.msra.mxu0 %v1757
        %1766 = vmatprep.subr.mxu0 0.0
        %1767 = vmatpush1.msra.mxu0 0.0
        %1768 = vmatprep.subr.mxu0 0.0
        %1769 = vmatpush1.msra.mxu0 0.0
        %1770 = vmatprep.subr.mxu0 0.0
        %1771 = vmatpush1.msra.mxu0 0.0
        %1772 = vmatprep.subr.mxu0 0.0
        %1773 = vmatpush1.msra.mxu0 0.0
        %1774 = vmatprep.subr.mxu0 0.0
        %1775 = vmatpush1.msra.mxu0 0.0
        %1776 = vmatprep.subr.mxu0 0.0
        %1777 = vmatpush1.msra.mxu0 0.0
        %1778 = vmatprep.subr.mxu0 0.0
        %1779 = vmatpush1.msra.mxu0 0.0
        %1780 = vmatprep.subr.mxu0 0.0
        %1781 = vmatpush1.msra.mxu0 0.0
        %1782 = vmatprep.subr.mxu0 0.0
        %1783 = vmatpush1.msra.mxu0 0.0
        %1784 = vmatprep.subr.mxu0 0.0
        %1785 = vmatpush1.msra.mxu0 0.0
        %1786 = vmatprep.subr.mxu0 0.0
        %1787 = vmatpush1.msra.mxu0 0.0
        %1788 = vmatprep.subr.mxu0 0.0
        %1789 = vmatpush1.msra.mxu0 0.0
        %1790 = vmatprep.subr.mxu0 0.0
        %1791 = vmatpush1.msra.mxu0 0.0
        %1792 = vmatprep.subr.mxu0 0.0
        %1793 = vmatpush1.msra.mxu0 0.0
        %1794 = vmatprep.subr.mxu0 0.0
        %1795 = vmatpush1.msra.mxu0 0.0
        %1796 = vmatprep.subr.mxu0 0.0
        %1797 = vmatpush1.msra.mxu0 0.0
        %1798 = vmatprep.subr.mxu0 0.0
        %1799 = vmatpush1.msra.mxu0 0.0
        %1800 = vmatprep.subr.mxu0 0.0
        %1801 = vmatpush1.msra.mxu0 0.0
        %1802 = vmatprep.subr.mxu0 0.0
        %1803 = vmatpush1.msra.mxu0 0.0
        %1804 = vmatprep.subr.mxu0 0.0
        %1805 = vmatpush1.msra.mxu0 0.0
        %1806 = vmatprep.subr.mxu0 0.0
        %1807 = vmatpush1.msra.mxu0 0.0
        %1808 = vmatprep.subr.mxu0 0.0
        %1809 = vmatpush1.msra.mxu0 0.0
        %1810 = vmatprep.subr.mxu0 0.0
        %1811 = vmatpush1.msra.mxu0 0.0
        %1812 = vmatprep.subr.mxu0 0.0
        %1813 = vmatpush1.msra.mxu0 0.0
        %1814 = vmatprep.subr.mxu0 0.0
        %1815 = vmatpush1.msra.mxu0 0.0
        %1816 = vmatprep.subr.mxu0 0.0
        %1817 = vmatpush1.msra.mxu0 0.0
        %1818 = vmatprep.subr.mxu0 0.0
        %1819 = vmatpush1.msra.mxu0 0.0
        %1820 = vmatprep.subr.mxu0 0.0
        %1821 = vmatpush1.msra.mxu0 0.0
        %1822 = vmatprep.subr.mxu0 0.0
        %1823 = vmatpush1.msra.mxu0 0.0
        %1824 = vmatprep.subr.mxu0 0.0
        %1825 = vmatpush1.msra.mxu0 0.0
        %1826 = vmatprep.subr.mxu0 0.0
        %1827 = vmatpush1.msra.mxu0 0.0
        %1828 = vmatprep.mubr.f32.mxu0 0.0
        %1829 = vmatmul.mubr.f32.gmra.mrb[0].mxu0 %v1762
        %v1830 = vpop.f32.mrb[0].mxu0
        %v1831 = vadd.f32 0.0, %v1830
        %v1832 = vpop.f32.mrb[0].mxu0
        %v1833 = vadd.f32 0.0, %v1832
        %1834 = vdwg.mxu0
        %1835 = vrot.lane.b32.xlu0 %v1219, 15
        %v1836 = vpop.permute.xlu0 %1835
        %1837 = vrot.lane.b32.xlu0 %v1220, 15
        %v1838 = vpop.permute.xlu0 %1837
        %1839 = vrot.lane.b32.xlu0 %v1221, 15
        %v1840 = vpop.permute.xlu0 %1839
        %v1841 = vsel %vm1021, %v1836, %v1838
        %v1842 = vsel %vm1021, %v1838, %v1840
        %v1846 = vsel %vm1238, %v1748, 0
        %1848 = vmatprep.subr.mxu0 %v1842
        %1849 = vmatpush1.msra.mxu0 %v1841
        %1850 = vmatprep.subr.mxu0 0.0
        %1851 = vmatpush1.msra.mxu0 0.0
        %1852 = vmatprep.subr.mxu0 0.0
        %1853 = vmatpush1.msra.mxu0 0.0
        %1854 = vmatprep.subr.mxu0 0.0
        %1855 = vmatpush1.msra.mxu0 0.0
        %1856 = vmatprep.subr.mxu0 0.0
        %1857 = vmatpush1.msra.mxu0 0.0
        %1858 = vmatprep.subr.mxu0 0.0
        %1859 = vmatpush1.msra.mxu0 0.0
        %1860 = vmatprep.subr.mxu0 0.0
        %1861 = vmatpush1.msra.mxu0 0.0
        %1862 = vmatprep.subr.mxu0 0.0
        %1863 = vmatpush1.msra.mxu0 0.0
        %1864 = vmatprep.subr.mxu0 0.0
        %1865 = vmatpush1.msra.mxu0 0.0
        %1866 = vmatprep.subr.mxu0 0.0
        %1867 = vmatpush1.msra.mxu0 0.0
        %1868 = vmatprep.subr.mxu0 0.0
        %1869 = vmatpush1.msra.mxu0 0.0
        %1870 = vmatprep.subr.mxu0 0.0
        %1871 = vmatpush1.msra.mxu0 0.0
        %1872 = vmatprep.subr.mxu0 0.0
        %1873 = vmatpush1.msra.mxu0 0.0
        %1874 = vmatprep.subr.mxu0 0.0
        %1875 = vmatpush1.msra.mxu0 0.0
        %1876 = vmatprep.subr.mxu0 0.0
        %1877 = vmatpush1.msra.mxu0 0.0
        %1878 = vmatprep.subr.mxu0 0.0
        %1879 = vmatpush1.msra.mxu0 0.0
        %1880 = vmatprep.subr.mxu0 0.0
        %1881 = vmatpush1.msra.mxu0 0.0
        %1882 = vmatprep.subr.mxu0 0.0
        %1883 = vmatpush1.msra.mxu0 0.0
        %1884 = vmatprep.subr.mxu0 0.0
        %1885 = vmatpush1.msra.mxu0 0.0
        %1886 = vmatprep.subr.mxu0 0.0
        %1887 = vmatpush1.msra.mxu0 0.0
        %1888 = vmatprep.subr.mxu0 0.0
        %1889 = vmatpush1.msra.mxu0 0.0
        %1890 = vmatprep.subr.mxu0 0.0
        %1891 = vmatpush1.msra.mxu0 0.0
        %1892 = vmatprep.subr.mxu0 0.0
        %1893 = vmatpush1.msra.mxu0 0.0
        %1894 = vmatprep.subr.mxu0 0.0
        %1895 = vmatpush1.msra.mxu0 0.0
        %1896 = vmatprep.subr.mxu0 0.0
        %1897 = vmatpush1.msra.mxu0 0.0
        %1898 = vmatprep.subr.mxu0 0.0
        %1899 = vmatpush1.msra.mxu0 0.0
        %1900 = vmatprep.subr.mxu0 0.0
        %1901 = vmatpush1.msra.mxu0 0.0
        %1902 = vmatprep.subr.mxu0 0.0
        %1903 = vmatpush1.msra.mxu0 0.0
        %1904 = vmatprep.subr.mxu0 0.0
        %1905 = vmatpush1.msra.mxu0 0.0
        %1906 = vmatprep.subr.mxu0 0.0
        %1907 = vmatpush1.msra.mxu0 0.0
        %1908 = vmatprep.subr.mxu0 0.0
        %1909 = vmatpush1.msra.mxu0 0.0
        %1910 = vmatprep.subr.mxu0 0.0
        %1911 = vmatpush1.msra.mxu0 0.0
        %1912 = vmatprep.mubr.f32.mxu0 0.0
        %1913 = vmatmul.mubr.f32.gmra.mrb[0].mxu0 %v1846
        %v1914 = vpop.f32.mrb[0].mxu0
        %v1915 = vadd.f32 %v1831, %v1914
        %v1916 = vpop.f32.mrb[0].mxu0
        %v1917 = vadd.f32 %v1833, %v1916
        %1918 = vdwg.mxu0
        %s1919 = scalar_lea.vmem %s3, 32
        %v1920 = vld [vmem:[%s1919] sm:$0xf]
        %1921 = vrot.lane.b32.xlu0 %v1397, 111
        %v1922 = vpop.permute.xlu0 %1921
        %1923 = vrot.lane.b32.xlu0 %v1398, 111
        %v1924 = vpop.permute.xlu0 %1923
        %1925 = vrot.lane.b32.xlu0 %v1399, 111
        %v1926 = vpop.permute.xlu0 %1925
        %v1927 = vsel %vm1110, %v1922, %v1924
        %v1928 = vsel %vm1110, %v1924, %v1926
        %v1932 = vsel %vm1238, %v1920, 0
        %1934 = vmatprep.subr.mxu0 %v1928
        %1935 = vmatpush1.msra.mxu0 %v1927
        %1936 = vmatprep.subr.mxu0 0.0
        %1937 = vmatpush1.msra.mxu0 0.0
        %1938 = vmatprep.subr.mxu0 0.0
        %1939 = vmatpush1.msra.mxu0 0.0
        %1940 = vmatprep.subr.mxu0 0.0
        %1941 = vmatpush1.msra.mxu0 0.0
        %1942 = vmatprep.subr.mxu0 0.0
        %1943 = vmatpush1.msra.mxu0 0.0
        %1944 = vmatprep.subr.mxu0 0.0
        %1945 = vmatpush1.msra.mxu0 0.0
        %1946 = vmatprep.subr.mxu0 0.0
        %1947 = vmatpush1.msra.mxu0 0.0
        %1948 = vmatprep.subr.mxu0 0.0
        %1949 = vmatpush1.msra.mxu0 0.0
        %1950 = vmatprep.subr.mxu0 0.0
        %1951 = vmatpush1.msra.mxu0 0.0
        %1952 = vmatprep.subr.mxu0 0.0
        %1953 = vmatpush1.msra.mxu0 0.0
        %1954 = vmatprep.subr.mxu0 0.0
        %1955 = vmatpush1.msra.mxu0 0.0
        %1956 = vmatprep.subr.mxu0 0.0
        %1957 = vmatpush1.msra.mxu0 0.0
        %1958 = vmatprep.subr.mxu0 0.0
        %1959 = vmatpush1.msra.mxu0 0.0
        %1960 = vmatprep.subr.mxu0 0.0
        %1961 = vmatpush1.msra.mxu0 0.0
        %1962 = vmatprep.subr.mxu0 0.0
        %1963 = vmatpush1.msra.mxu0 0.0
        %1964 = vmatprep.subr.mxu0 0.0
        %1965 = vmatpush1.msra.mxu0 0.0
        %1966 = vmatprep.subr.mxu0 0.0
        %1967 = vmatpush1.msra.mxu0 0.0
        %1968 = vmatprep.subr.mxu0 0.0
        %1969 = vmatpush1.msra.mxu0 0.0
        %1970 = vmatprep.subr.mxu0 0.0
        %1971 = vmatpush1.msra.mxu0 0.0
        %1972 = vmatprep.subr.mxu0 0.0
        %1973 = vmatpush1.msra.mxu0 0.0
        %1974 = vmatprep.subr.mxu0 0.0
        %1975 = vmatpush1.msra.mxu0 0.0
        %1976 = vmatprep.subr.mxu0 0.0
        %1977 = vmatpush1.msra.mxu0 0.0
        %1978 = vmatprep.subr.mxu0 0.0
        %1979 = vmatpush1.msra.mxu0 0.0
        %1980 = vmatprep.subr.mxu0 0.0
        %1981 = vmatpush1.msra.mxu0 0.0
        %1982 = vmatprep.subr.mxu0 0.0
        %1983 = vmatpush1.msra.mxu0 0.0
        %1984 = vmatprep.subr.mxu0 0.0
        %1985 = vmatpush1.msra.mxu0 0.0
        %1986 = vmatprep.subr.mxu0 0.0
        %1987 = vmatpush1.msra.mxu0 0.0
        %1988 = vmatprep.subr.mxu0 0.0
        %1989 = vmatpush1.msra.mxu0 0.0
        %1990 = vmatprep.subr.mxu0 0.0
        %1991 = vmatpush1.msra.mxu0 0.0
        %1992 = vmatprep.subr.mxu0 0.0
        %1993 = vmatpush1.msra.mxu0 0.0
        %1994 = vmatprep.subr.mxu0 0.0
        %1995 = vmatpush1.msra.mxu0 0.0
        %1996 = vmatprep.subr.mxu0 0.0
        %1997 = vmatpush1.msra.mxu0 0.0
        %1998 = vmatprep.mubr.f32.mxu0 0.0
        %1999 = vmatmul.mubr.f32.gmra.mrb[0].mxu0 %v1932
        %v2000 = vpop.f32.mrb[0].mxu0
        %v2001 = vadd.f32 0.0, %v2000
        %v2002 = vpop.f32.mrb[0].mxu0
        %v2003 = vadd.f32 0.0, %v2002
        %2004 = vdwg.mxu0
        %v2005 = vadd.f32 %v1915, %v2001
        %v2006 = vadd.f32 %v1917, %v2003
        %v2007 = vsel %vm1195, %v2005, 0.0
        %v2008 = vsel %vm1196, %v2006, 0.0
        %v2009 = vadd.f32 %v1745, %v2007
        %v2010 = vadd.f32 %v1746, %v2008
        %v2011 = vld [vmem:[%s4] sm:$0xf]
        %2013 = vset.pattern.permute.xlu0 0
        %2014 = vperm.xlu0 %2013, %v2011
        %v2015 = vpop.permute.xlu0 %2014
        %v2017 = vadd.f32 %v2009, %v2015
        %v2018 = vadd.f32 %v2010, %v2015
        %v2019 = vmax.f32 %v2017, 0.0
        %v2020 = vmax.f32 %v2018, 0.0
        %2021 = vst [vmem:[#allocation2 + $0x28] sm:$0xf] %v2019
        %2022 = vst [vmem:[#allocation2 + $0x30] sm:$0xf] %v2020
        %v2023 = vld [vmem:[#allocation2] sm:$0xff]
        %v2024 = vld [vmem:[#allocation2 + $0x8] sm:$0xff]
        %v2025 = vld [vmem:[#allocation2 + $0x10] sm:$0xff]
        %v2026 = vld [vmem:[#allocation2 + $0x20] sm:$0xf]
        %v2027 = vld [vmem:[#allocation2 + $0x28] sm:$0xf]
        %v2028 = vld [vmem:[#allocation2 + $0x30] sm:$0xf]
        %v2029 = vld [vmem:[%s5] sm:$0xf]
        %s2030 = scalar_lea.vmem %s5, 12
        %v2031 = vld [vmem:[%s2030] sm:$0xf]
        %2038 = vrot.lane.b32.xlu0 %v2023, 1
        %v2039 = vpop.permute.xlu0 %2038
        %2040 = vrot.lane.b32.xlu0 %v2024, 1
        %v2041 = vpop.permute.xlu0 %2040
        %2042 = vrot.lane.b32.xlu0 %v2025, 1
        %v2043 = vpop.permute.xlu0 %2042
        %2044 = vrot.lane.b32.xlu0 %v2026, 1
        %v2045 = vpop.permute.xlu0 %2044
        %2046 = vrot.lane.b32.xlu0 %v2027, 1
        %v2047 = vpop.permute.xlu0 %2046
        %2048 = vrot.lane.b32.xlu0 %v2028, 1
        %v2049 = vpop.permute.xlu0 %2048
        %v2050 = vsel %vm387, %v2039, %v2041
        %v2051 = vsel %vm387, %v2041, %v2043
        %v2052 = vsel %vm387, %v2045, %v2047
        %v2053 = vsel %vm387, %v2047, %v2049
        %vm2056 = vcmask 97280
        %v2058 = vsel %vm2056, %v2031, 0
        %v2060 = vsel %vm394, %v2052, 0
        %v2062 = vsel %vm394, %v2053, 0
        %2064 = vmatprep.subr.mxu0 %v2051
        %2065 = vmatpush1.msra.mxu0 %v2050
        %2066 = vmatprep.subr.mxu0 %v2062
        %2067 = vmatpush1.msra.mxu0 %v2060
        %2068 = vmatprep.subr.mxu0 0.0
        %2069 = vmatpush1.msra.mxu0 0.0
        %2070 = vmatprep.subr.mxu0 0.0
        %2071 = vmatpush1.msra.mxu0 0.0
        %2072 = vmatprep.subr.mxu0 0.0
        %2073 = vmatpush1.msra.mxu0 0.0
        %2074 = vmatprep.subr.mxu0 0.0
        %2075 = vmatpush1.msra.mxu0 0.0
        %2076 = vmatprep.subr.mxu0 0.0
        %2077 = vmatpush1.msra.mxu0 0.0
        %2078 = vmatprep.subr.mxu0 0.0
        %2079 = vmatpush1.msra.mxu0 0.0
        %2080 = vmatprep.subr.mxu0 0.0
        %2081 = vmatpush1.msra.mxu0 0.0
        %2082 = vmatprep.subr.mxu0 0.0
        %2083 = vmatpush1.msra.mxu0 0.0
        %2084 = vmatprep.subr.mxu0 0.0
        %2085 = vmatpush1.msra.mxu0 0.0
        %2086 = vmatprep.subr.mxu0 0.0
        %2087 = vmatpush1.msra.mxu0 0.0
        %2088 = vmatprep.subr.mxu0 0.0
        %2089 = vmatpush1.msra.mxu0 0.0
        %2090 = vmatprep.subr.mxu0 0.0
        %2091 = vmatpush1.msra.mxu0 0.0
        %2092 = vmatprep.subr.mxu0 0.0
        %2093 = vmatpush1.msra.mxu0 0.0
        %2094 = vmatprep.subr.mxu0 0.0
        %2095 = vmatpush1.msra.mxu0 0.0
        %2096 = vmatprep.subr.mxu0 0.0
        %2097 = vmatpush1.msra.mxu0 0.0
        %2098 = vmatprep.subr.mxu0 0.0
        %2099 = vmatpush1.msra.mxu0 0.0
        %2100 = vmatprep.subr.mxu0 0.0
        %2101 = vmatpush1.msra.mxu0 0.0
        %2102 = vmatprep.subr.mxu0 0.0
        %2103 = vmatpush1.msra.mxu0 0.0
        %2104 = vmatprep.subr.mxu0 0.0
        %2105 = vmatpush1.msra.mxu0 0.0
        %2106 = vmatprep.subr.mxu0 0.0
        %2107 = vmatpush1.msra.mxu0 0.0
        %2108 = vmatprep.subr.mxu0 0.0
        %2109 = vmatpush1.msra.mxu0 0.0
        %2110 = vmatprep.subr.mxu0 0.0
        %2111 = vmatpush1.msra.mxu0 0.0
        %2112 = vmatprep.subr.mxu0 0.0
        %2113 = vmatpush1.msra.mxu0 0.0
        %2114 = vmatprep.subr.mxu0 0.0
        %2115 = vmatpush1.msra.mxu0 0.0
        %2116 = vmatprep.subr.mxu0 0.0
        %2117 = vmatpush1.msra.mxu0 0.0
        %2118 = vmatprep.subr.mxu0 0.0
        %2119 = vmatpush1.msra.mxu0 0.0
        %2120 = vmatprep.subr.mxu0 0.0
        %2121 = vmatpush1.msra.mxu0 0.0
        %2122 = vmatprep.subr.mxu0 0.0
        %2123 = vmatpush1.msra.mxu0 0.0
        %2124 = vmatprep.subr.mxu0 0.0
        %2125 = vmatpush1.msra.mxu0 0.0
        %2126 = vmatprep.subr.mxu0 0.0
        %2127 = vmatpush1.msra.mxu0 0.0
        %2128 = vmatprep.mubr.f32.mxu0 0.0
        %2129 = vmatmul.mubr.f32.gmra.mrb[0].mxu0 %v2058
        %v2130 = vpop.f32.mrb[0].mxu0
        %v2131 = vadd.f32 0.0, %v2130
        %v2132 = vpop.f32.mrb[0].mxu0
        %v2133 = vadd.f32 0.0, %v2132
        %2134 = vdwg.mxu0
        %2135 = vrot.lane.b32.xlu0 %v2023, 17
        %v2136 = vpop.permute.xlu0 %2135
        %2137 = vrot.lane.b32.xlu0 %v2024, 17
        %v2138 = vpop.permute.xlu0 %2137
        %2139 = vrot.lane.b32.xlu0 %v2025, 17
        %v2140 = vpop.permute.xlu0 %2139
        %2141 = vrot.lane.b32.xlu0 %v2026, 17
        %v2142 = vpop.permute.xlu0 %2141
        %2143 = vrot.lane.b32.xlu0 %v2027, 17
        %v2144 = vpop.permute.xlu0 %2143
        %2145 = vrot.lane.b32.xlu0 %v2028, 17
        %v2146 = vpop.permute.xlu0 %2145
        %v2147 = vsel %vm476, %v2136, %v2138
        %v2148 = vsel %vm476, %v2138, %v2140
        %v2149 = vsel %vm476, %v2142, %v2144
        %v2150 = vsel %vm476, %v2144, %v2146
        %v2154 = vsel %vm2056, %v2029, 0
        %v2156 = vsel %vm394, %v2149, 0
        %v2158 = vsel %vm394, %v2150, 0
        %2160 = vmatprep.subr.mxu0 %v2148
        %2161 = vmatpush1.msra.mxu0 %v2147
        %2162 = vmatprep.subr.mxu0 %v2158
        %2163 = vmatpush1.msra.mxu0 %v2156
        %2164 = vmatprep.subr.mxu0 0.0
        %2165 = vmatpush1.msra.mxu0 0.0
        %2166 = vmatprep.subr.mxu0 0.0
        %2167 = vmatpush1.msra.mxu0 0.0
        %2168 = vmatprep.subr.mxu0 0.0
        %2169 = vmatpush1.msra.mxu0 0.0
        %2170 = vmatprep.subr.mxu0 0.0
        %2171 = vmatpush1.msra.mxu0 0.0
        %2172 = vmatprep.subr.mxu0 0.0
        %2173 = vmatpush1.msra.mxu0 0.0
        %2174 = vmatprep.subr.mxu0 0.0
        %2175 = vmatpush1.msra.mxu0 0.0
        %2176 = vmatprep.subr.mxu0 0.0
        %2177 = vmatpush1.msra.mxu0 0.0
        %2178 = vmatprep.subr.mxu0 0.0
        %2179 = vmatpush1.msra.mxu0 0.0
        %2180 = vmatprep.subr.mxu0 0.0
        %2181 = vmatpush1.msra.mxu0 0.0
        %2182 = vmatprep.subr.mxu0 0.0
        %2183 = vmatpush1.msra.mxu0 0.0
        %2184 = vmatprep.subr.mxu0 0.0
        %2185 = vmatpush1.msra.mxu0 0.0
        %2186 = vmatprep.subr.mxu0 0.0
        %2187 = vmatpush1.msra.mxu0 0.0
        %2188 = vmatprep.subr.mxu0 0.0
        %2189 = vmatpush1.msra.mxu0 0.0
        %2190 = vmatprep.subr.mxu0 0.0
        %2191 = vmatpush1.msra.mxu0 0.0
        %2192 = vmatprep.subr.mxu0 0.0
        %2193 = vmatpush1.msra.mxu0 0.0
        %2194 = vmatprep.subr.mxu0 0.0
        %2195 = vmatpush1.msra.mxu0 0.0
        %2196 = vmatprep.subr.mxu0 0.0
        %2197 = vmatpush1.msra.mxu0 0.0
        %2198 = vmatprep.subr.mxu0 0.0
        %2199 = vmatpush1.msra.mxu0 0.0
        %2200 = vmatprep.subr.mxu0 0.0
        %2201 = vmatpush1.msra.mxu0 0.0
        %2202 = vmatprep.subr.mxu0 0.0
        %2203 = vmatpush1.msra.mxu0 0.0
        %2204 = vmatprep.subr.mxu0 0.0
        %2205 = vmatpush1.msra.mxu0 0.0
        %2206 = vmatprep.subr.mxu0 0.0
        %2207 = vmatpush1.msra.mxu0 0.0
        %2208 = vmatprep.subr.mxu0 0.0
        %2209 = vmatpush1.msra.mxu0 0.0
        %2210 = vmatprep.subr.mxu0 0.0
        %2211 = vmatpush1.msra.mxu0 0.0
        %2212 = vmatprep.subr.mxu0 0.0
        %2213 = vmatpush1.msra.mxu0 0.0
        %2214 = vmatprep.subr.mxu0 0.0
        %2215 = vmatpush1.msra.mxu0 0.0
        %2216 = vmatprep.subr.mxu0 0.0
        %2217 = vmatpush1.msra.mxu0 0.0
        %2218 = vmatprep.subr.mxu0 0.0
        %2219 = vmatpush1.msra.mxu0 0.0
        %2220 = vmatprep.subr.mxu0 0.0
        %2221 = vmatpush1.msra.mxu0 0.0
        %2222 = vmatprep.subr.mxu0 0.0
        %2223 = vmatpush1.msra.mxu0 0.0
        %2224 = vmatprep.mubr.f32.mxu0 0.0
        %2225 = vmatmul.mubr.f32.gmra.mrb[0].mxu0 %v2154
        %v2226 = vpop.f32.mrb[0].mxu0
        %v2227 = vadd.f32 %v2131, %v2226
        %v2228 = vpop.f32.mrb[0].mxu0
        %v2229 = vadd.f32 %v2133, %v2228
        %2230 = vdwg.mxu0
        %v2231 = vld [vmem:[#allocation2 + $0x8] sm:$0xff]
        %v2232 = vld [vmem:[#allocation2 + $0x10] sm:$0xff]
        %v2233 = vld [vmem:[#allocation2 + $0x18] sm:$0xff]
        %v2234 = vld [vmem:[#allocation2 + $0x28] sm:$0xf]
        %v2235 = vld [vmem:[#allocation2 + $0x30] sm:$0xf]
        %v2236 = vld [vmem:[#allocation2 + $0x38] sm:$0xf]
        %s2237 = scalar_lea.vmem %s5, 24
        %v2238 = vld [vmem:[%s2237] sm:$0xf]
        %2245 = vrot.lane.b32.xlu0 %v2231, 113
        %v2246 = vpop.permute.xlu0 %2245
        %2247 = vrot.lane.b32.xlu0 %v2232, 113
        %v2248 = vpop.permute.xlu0 %2247
        %2249 = vrot.lane.b32.xlu0 %v2233, 113
        %v2250 = vpop.permute.xlu0 %2249
        %2251 = vrot.lane.b32.xlu0 %v2234, 113
        %v2252 = vpop.permute.xlu0 %2251
        %2253 = vrot.lane.b32.xlu0 %v2235, 113
        %v2254 = vpop.permute.xlu0 %2253
        %2255 = vrot.lane.b32.xlu0 %v2236, 113
        %v2256 = vpop.permute.xlu0 %2255
        %v2257 = vsel %vm571, %v2246, %v2248
        %v2258 = vsel %vm571, %v2248, %v2250
        %v2259 = vsel %vm571, %v2252, %v2254
        %v2260 = vsel %vm571, %v2254, %v2256
        %v2264 = vsel %vm2056, %v2238, 0
        %v2266 = vsel %vm394, %v2259, 0
        %v2268 = vsel %vm394, %v2260, 0
        %2270 = vmatprep.subr.mxu0 %v2258
        %2271 = vmatpush1.msra.mxu0 %v2257
        %2272 = vmatprep.subr.mxu0 %v2268
        %2273 = vmatpush1.msra.mxu0 %v2266
        %2274 = vmatprep.subr.mxu0 0.0
        %2275 = vmatpush1.msra.mxu0 0.0
        %2276 = vmatprep.subr.mxu0 0.0
        %2277 = vmatpush1.msra.mxu0 0.0
        %2278 = vmatprep.subr.mxu0 0.0
        %2279 = vmatpush1.msra.mxu0 0.0
        %2280 = vmatprep.subr.mxu0 0.0
        %2281 = vmatpush1.msra.mxu0 0.0
        %2282 = vmatprep.subr.mxu0 0.0
        %2283 = vmatpush1.msra.mxu0 0.0
        %2284 = vmatprep.subr.mxu0 0.0
        %2285 = vmatpush1.msra.mxu0 0.0
        %2286 = vmatprep.subr.mxu0 0.0
        %2287 = vmatpush1.msra.mxu0 0.0
        %2288 = vmatprep.subr.mxu0 0.0
        %2289 = vmatpush1.msra.mxu0 0.0
        %2290 = vmatprep.subr.mxu0 0.0
        %2291 = vmatpush1.msra.mxu0 0.0
        %2292 = vmatprep.subr.mxu0 0.0
        %2293 = vmatpush1.msra.mxu0 0.0
        %2294 = vmatprep.subr.mxu0 0.0
        %2295 = vmatpush1.msra.mxu0 0.0
        %2296 = vmatprep.subr.mxu0 0.0
        %2297 = vmatpush1.msra.mxu0 0.0
        %2298 = vmatprep.subr.mxu0 0.0
        %2299 = vmatpush1.msra.mxu0 0.0
        %2300 = vmatprep.subr.mxu0 0.0
        %2301 = vmatpush1.msra.mxu0 0.0
        %2302 = vmatprep.subr.mxu0 0.0
        %2303 = vmatpush1.msra.mxu0 0.0
        %2304 = vmatprep.subr.mxu0 0.0
        %2305 = vmatpush1.msra.mxu0 0.0
        %2306 = vmatprep.subr.mxu0 0.0
        %2307 = vmatpush1.msra.mxu0 0.0
        %2308 = vmatprep.subr.mxu0 0.0
        %2309 = vmatpush1.msra.mxu0 0.0
        %2310 = vmatprep.subr.mxu0 0.0
        %2311 = vmatpush1.msra.mxu0 0.0
        %2312 = vmatprep.subr.mxu0 0.0
        %2313 = vmatpush1.msra.mxu0 0.0
        %2314 = vmatprep.subr.mxu0 0.0
        %2315 = vmatpush1.msra.mxu0 0.0
        %2316 = vmatprep.subr.mxu0 0.0
        %2317 = vmatpush1.msra.mxu0 0.0
        %2318 = vmatprep.subr.mxu0 0.0
        %2319 = vmatpush1.msra.mxu0 0.0
        %2320 = vmatprep.subr.mxu0 0.0
        %2321 = vmatpush1.msra.mxu0 0.0
        %2322 = vmatprep.subr.mxu0 0.0
        %2323 = vmatpush1.msra.mxu0 0.0
        %2324 = vmatprep.subr.mxu0 0.0
        %2325 = vmatpush1.msra.mxu0 0.0
        %2326 = vmatprep.subr.mxu0 0.0
        %2327 = vmatpush1.msra.mxu0 0.0
        %2328 = vmatprep.subr.mxu0 0.0
        %2329 = vmatpush1.msra.mxu0 0.0
        %2330 = vmatprep.subr.mxu0 0.0
        %2331 = vmatpush1.msra.mxu0 0.0
        %2332 = vmatprep.subr.mxu0 0.0
        %2333 = vmatpush1.msra.mxu0 0.0
        %2334 = vmatprep.mubr.f32.mxu0 0.0
        %2335 = vmatmul.mubr.f32.gmra.mrb[0].mxu0 %v2264
        %v2336 = vpop.f32.mrb[0].mxu0
        %v2337 = vadd.f32 0.0, %v2336
        %v2338 = vpop.f32.mrb[0].mxu0
        %v2339 = vadd.f32 0.0, %v2338
        %2340 = vdwg.mxu0
        %v2341 = vadd.f32 %v2227, %v2337
        %v2342 = vadd.f32 %v2229, %v2339
        %v2343 = vsel %vm656, %v2341, 0.0
        %v2344 = vsel %vm657, %v2342, 0.0
        %v2345 = vadd.f32 %v2343, 0.0
        %v2346 = vadd.f32 %v2344, 0.0
        %s2347 = scalar_lea.vmem %s5, 4
        %v2348 = vld [vmem:[%s2347] sm:$0xf]
        %s2349 = scalar_lea.vmem %s5, 16
        %v2350 = vld [vmem:[%s2349] sm:$0xf]
        %v2352 = vsel %vm2056, %v2350, 0
        %v2354 = vsel %vm394, %v2027, 0
        %v2356 = vsel %vm394, %v2028, 0
        %2358 = vmatprep.subr.mxu0 %v2025
        %2359 = vmatpush1.msra.mxu0 %v2024
        %2360 = vmatprep.subr.mxu0 %v2356
        %2361 = vmatpush1.msra.mxu0 %v2354
        %2362 = vmatprep.subr.mxu0 0.0
        %2363 = vmatpush1.msra.mxu0 0.0
        %2364 = vmatprep.subr.mxu0 0.0
        %2365 = vmatpush1.msra.mxu0 0.0
        %2366 = vmatprep.subr.mxu0 0.0
        %2367 = vmatpush1.msra.mxu0 0.0
        %2368 = vmatprep.subr.mxu0 0.0
        %2369 = vmatpush1.msra.mxu0 0.0
        %2370 = vmatprep.subr.mxu0 0.0
        %2371 = vmatpush1.msra.mxu0 0.0
        %2372 = vmatprep.subr.mxu0 0.0
        %2373 = vmatpush1.msra.mxu0 0.0
        %2374 = vmatprep.subr.mxu0 0.0
        %2375 = vmatpush1.msra.mxu0 0.0
        %2376 = vmatprep.subr.mxu0 0.0
        %2377 = vmatpush1.msra.mxu0 0.0
        %2378 = vmatprep.subr.mxu0 0.0
        %2379 = vmatpush1.msra.mxu0 0.0
        %2380 = vmatprep.subr.mxu0 0.0
        %2381 = vmatpush1.msra.mxu0 0.0
        %2382 = vmatprep.subr.mxu0 0.0
        %2383 = vmatpush1.msra.mxu0 0.0
        %2384 = vmatprep.subr.mxu0 0.0
        %2385 = vmatpush1.msra.mxu0 0.0
        %2386 = vmatprep.subr.mxu0 0.0
        %2387 = vmatpush1.msra.mxu0 0.0
        %2388 = vmatprep.subr.mxu0 0.0
        %2389 = vmatpush1.msra.mxu0 0.0
        %2390 = vmatprep.subr.mxu0 0.0
        %2391 = vmatpush1.msra.mxu0 0.0
        %2392 = vmatprep.subr.mxu0 0.0
        %2393 = vmatpush1.msra.mxu0 0.0
        %2394 = vmatprep.subr.mxu0 0.0
        %2395 = vmatpush1.msra.mxu0 0.0
        %2396 = vmatprep.subr.mxu0 0.0
        %2397 = vmatpush1.msra.mxu0 0.0
        %2398 = vmatprep.subr.mxu0 0.0
        %2399 = vmatpush1.msra.mxu0 0.0
        %2400 = vmatprep.subr.mxu0 0.0
        %2401 = vmatpush1.msra.mxu0 0.0
        %2402 = vmatprep.subr.mxu0 0.0
        %2403 = vmatpush1.msra.mxu0 0.0
        %2404 = vmatprep.subr.mxu0 0.0
        %2405 = vmatpush1.msra.mxu0 0.0
        %2406 = vmatprep.subr.mxu0 0.0
        %2407 = vmatpush1.msra.mxu0 0.0
        %2408 = vmatprep.subr.mxu0 0.0
        %2409 = vmatpush1.msra.mxu0 0.0
        %2410 = vmatprep.subr.mxu0 0.0
        %2411 = vmatpush1.msra.mxu0 0.0
        %2412 = vmatprep.subr.mxu0 0.0
        %2413 = vmatpush1.msra.mxu0 0.0
        %2414 = vmatprep.subr.mxu0 0.0
        %2415 = vmatpush1.msra.mxu0 0.0
        %2416 = vmatprep.subr.mxu0 0.0
        %2417 = vmatpush1.msra.mxu0 0.0
        %2418 = vmatprep.subr.mxu0 0.0
        %2419 = vmatpush1.msra.mxu0 0.0
        %2420 = vmatprep.subr.mxu0 0.0
        %2421 = vmatpush1.msra.mxu0 0.0
        %2422 = vmatprep.mubr.f32.mxu0 0.0
        %2423 = vmatmul.mubr.f32.gmra.mrb[0].mxu0 %v2352
        %v2424 = vpop.f32.mrb[0].mxu0
        %v2425 = vadd.f32 0.0, %v2424
        %v2426 = vpop.f32.mrb[0].mxu0
        %v2427 = vadd.f32 0.0, %v2426
        %2428 = vdwg.mxu0
        %2429 = vrot.lane.b32.xlu0 %v2023, 16
        %v2430 = vpop.permute.xlu0 %2429
        %2431 = vrot.lane.b32.xlu0 %v2024, 16
        %v2432 = vpop.permute.xlu0 %2431
        %2433 = vrot.lane.b32.xlu0 %v2025, 16
        %v2434 = vpop.permute.xlu0 %2433
        %2435 = vrot.lane.b32.xlu0 %v2026, 16
        %v2436 = vpop.permute.xlu0 %2435
        %2437 = vrot.lane.b32.xlu0 %v2027, 16
        %v2438 = vpop.permute.xlu0 %2437
        %2439 = vrot.lane.b32.xlu0 %v2028, 16
        %v2440 = vpop.permute.xlu0 %2439
        %v2441 = vsel %vm750, %v2430, %v2432
        %v2442 = vsel %vm750, %v2432, %v2434
        %v2443 = vsel %vm750, %v2436, %v2438
        %v2444 = vsel %vm750, %v2438, %v2440
        %v2448 = vsel %vm2056, %v2348, 0
        %v2450 = vsel %vm394, %v2443, 0
        %v2452 = vsel %vm394, %v2444, 0
        %2454 = vmatprep.subr.mxu0 %v2442
        %2455 = vmatpush1.msra.mxu0 %v2441
        %2456 = vmatprep.subr.mxu0 %v2452
        %2457 = vmatpush1.msra.mxu0 %v2450
        %2458 = vmatprep.subr.mxu0 0.0
        %2459 = vmatpush1.msra.mxu0 0.0
        %2460 = vmatprep.subr.mxu0 0.0
        %2461 = vmatpush1.msra.mxu0 0.0
        %2462 = vmatprep.subr.mxu0 0.0
        %2463 = vmatpush1.msra.mxu0 0.0
        %2464 = vmatprep.subr.mxu0 0.0
        %2465 = vmatpush1.msra.mxu0 0.0
        %2466 = vmatprep.subr.mxu0 0.0
        %2467 = vmatpush1.msra.mxu0 0.0
        %2468 = vmatprep.subr.mxu0 0.0
        %2469 = vmatpush1.msra.mxu0 0.0
        %2470 = vmatprep.subr.mxu0 0.0
        %2471 = vmatpush1.msra.mxu0 0.0
        %2472 = vmatprep.subr.mxu0 0.0
        %2473 = vmatpush1.msra.mxu0 0.0
        %2474 = vmatprep.subr.mxu0 0.0
        %2475 = vmatpush1.msra.mxu0 0.0
        %2476 = vmatprep.subr.mxu0 0.0
        %2477 = vmatpush1.msra.mxu0 0.0
        %2478 = vmatprep.subr.mxu0 0.0
        %2479 = vmatpush1.msra.mxu0 0.0
        %2480 = vmatprep.subr.mxu0 0.0
        %2481 = vmatpush1.msra.mxu0 0.0
        %2482 = vmatprep.subr.mxu0 0.0
        %2483 = vmatpush1.msra.mxu0 0.0
        %2484 = vmatprep.subr.mxu0 0.0
        %2485 = vmatpush1.msra.mxu0 0.0
        %2486 = vmatprep.subr.mxu0 0.0
        %2487 = vmatpush1.msra.mxu0 0.0
        %2488 = vmatprep.subr.mxu0 0.0
        %2489 = vmatpush1.msra.mxu0 0.0
        %2490 = vmatprep.subr.mxu0 0.0
        %2491 = vmatpush1.msra.mxu0 0.0
        %2492 = vmatprep.subr.mxu0 0.0
        %2493 = vmatpush1.msra.mxu0 0.0
        %2494 = vmatprep.subr.mxu0 0.0
        %2495 = vmatpush1.msra.mxu0 0.0
        %2496 = vmatprep.subr.mxu0 0.0
        %2497 = vmatpush1.msra.mxu0 0.0
        %2498 = vmatprep.subr.mxu0 0.0
        %2499 = vmatpush1.msra.mxu0 0.0
        %2500 = vmatprep.subr.mxu0 0.0
        %2501 = vmatpush1.msra.mxu0 0.0
        %2502 = vmatprep.subr.mxu0 0.0
        %2503 = vmatpush1.msra.mxu0 0.0
        %2504 = vmatprep.subr.mxu0 0.0
        %2505 = vmatpush1.msra.mxu0 0.0
        %2506 = vmatprep.subr.mxu0 0.0
        %2507 = vmatpush1.msra.mxu0 0.0
        %2508 = vmatprep.subr.mxu0 0.0
        %2509 = vmatpush1.msra.mxu0 0.0
        %2510 = vmatprep.subr.mxu0 0.0
        %2511 = vmatpush1.msra.mxu0 0.0
        %2512 = vmatprep.subr.mxu0 0.0
        %2513 = vmatpush1.msra.mxu0 0.0
        %2514 = vmatprep.subr.mxu0 0.0
        %2515 = vmatpush1.msra.mxu0 0.0
        %2516 = vmatprep.subr.mxu0 0.0
        %2517 = vmatpush1.msra.mxu0 0.0
        %2518 = vmatprep.mubr.f32.mxu0 0.0
        %2519 = vmatmul.mubr.f32.gmra.mrb[0].mxu0 %v2448
        %v2520 = vpop.f32.mrb[0].mxu0
        %v2521 = vadd.f32 %v2425, %v2520
        %v2522 = vpop.f32.mrb[0].mxu0
        %v2523 = vadd.f32 %v2427, %v2522
        %2524 = vdwg.mxu0
        %s2525 = scalar_lea.vmem %s5, 28
        %v2526 = vld [vmem:[%s2525] sm:$0xf]
        %2527 = vrot.lane.b32.xlu0 %v2231, 112
        %v2528 = vpop.permute.xlu0 %2527
        %2529 = vrot.lane.b32.xlu0 %v2232, 112
        %v2530 = vpop.permute.xlu0 %2529
        %2531 = vrot.lane.b32.xlu0 %v2233, 112
        %v2532 = vpop.permute.xlu0 %2531
        %2533 = vrot.lane.b32.xlu0 %v2234, 112
        %v2534 = vpop.permute.xlu0 %2533
        %2535 = vrot.lane.b32.xlu0 %v2235, 112
        %v2536 = vpop.permute.xlu0 %2535
        %2537 = vrot.lane.b32.xlu0 %v2236, 112
        %v2538 = vpop.permute.xlu0 %2537
        %v2539 = vsel %vm839, %v2528, %v2530
        %v2540 = vsel %vm839, %v2530, %v2532
        %v2541 = vsel %vm839, %v2534, %v2536
        %v2542 = vsel %vm839, %v2536, %v2538
        %v2546 = vsel %vm2056, %v2526, 0
        %v2548 = vsel %vm394, %v2541, 0
        %v2550 = vsel %vm394, %v2542, 0
        %2552 = vmatprep.subr.mxu0 %v2540
        %2553 = vmatpush1.msra.mxu0 %v2539
        %2554 = vmatprep.subr.mxu0 %v2550
        %2555 = vmatpush1.msra.mxu0 %v2548
        %2556 = vmatprep.subr.mxu0 0.0
        %2557 = vmatpush1.msra.mxu0 0.0
        %2558 = vmatprep.subr.mxu0 0.0
        %2559 = vmatpush1.msra.mxu0 0.0
        %2560 = vmatprep.subr.mxu0 0.0
        %2561 = vmatpush1.msra.mxu0 0.0
        %2562 = vmatprep.subr.mxu0 0.0
        %2563 = vmatpush1.msra.mxu0 0.0
        %2564 = vmatprep.subr.mxu0 0.0
        %2565 = vmatpush1.msra.mxu0 0.0
        %2566 = vmatprep.subr.mxu0 0.0
        %2567 = vmatpush1.msra.mxu0 0.0
        %2568 = vmatprep.subr.mxu0 0.0
        %2569 = vmatpush1.msra.mxu0 0.0
        %2570 = vmatprep.subr.mxu0 0.0
        %2571 = vmatpush1.msra.mxu0 0.0
        %2572 = vmatprep.subr.mxu0 0.0
        %2573 = vmatpush1.msra.mxu0 0.0
        %2574 = vmatprep.subr.mxu0 0.0
        %2575 = vmatpush1.msra.mxu0 0.0
        %2576 = vmatprep.subr.mxu0 0.0
        %2577 = vmatpush1.msra.mxu0 0.0
        %2578 = vmatprep.subr.mxu0 0.0
        %2579 = vmatpush1.msra.mxu0 0.0
        %2580 = vmatprep.subr.mxu0 0.0
        %2581 = vmatpush1.msra.mxu0 0.0
        %2582 = vmatprep.subr.mxu0 0.0
        %2583 = vmatpush1.msra.mxu0 0.0
        %2584 = vmatprep.subr.mxu0 0.0
        %2585 = vmatpush1.msra.mxu0 0.0
        %2586 = vmatprep.subr.mxu0 0.0
        %2587 = vmatpush1.msra.mxu0 0.0
        %2588 = vmatprep.subr.mxu0 0.0
        %2589 = vmatpush1.msra.mxu0 0.0
        %2590 = vmatprep.subr.mxu0 0.0
        %2591 = vmatpush1.msra.mxu0 0.0
        %2592 = vmatprep.subr.mxu0 0.0
        %2593 = vmatpush1.msra.mxu0 0.0
        %2594 = vmatprep.subr.mxu0 0.0
        %2595 = vmatpush1.msra.mxu0 0.0
        %2596 = vmatprep.subr.mxu0 0.0
        %2597 = vmatpush1.msra.mxu0 0.0
        %2598 = vmatprep.subr.mxu0 0.0
        %2599 = vmatpush1.msra.mxu0 0.0
        %2600 = vmatprep.subr.mxu0 0.0
        %2601 = vmatpush1.msra.mxu0 0.0
        %2602 = vmatprep.subr.mxu0 0.0
        %2603 = vmatpush1.msra.mxu0 0.0
        %2604 = vmatprep.subr.mxu0 0.0
        %2605 = vmatpush1.msra.mxu0 0.0
        %2606 = vmatprep.subr.mxu0 0.0
        %2607 = vmatpush1.msra.mxu0 0.0
        %2608 = vmatprep.subr.mxu0 0.0
        %2609 = vmatpush1.msra.mxu0 0.0
        %2610 = vmatprep.subr.mxu0 0.0
        %2611 = vmatpush1.msra.mxu0 0.0
        %2612 = vmatprep.subr.mxu0 0.0
        %2613 = vmatpush1.msra.mxu0 0.0
        %2614 = vmatprep.subr.mxu0 0.0
        %2615 = vmatpush1.msra.mxu0 0.0
        %2616 = vmatprep.mubr.f32.mxu0 0.0
        %2617 = vmatmul.mubr.f32.gmra.mrb[0].mxu0 %v2546
        %v2618 = vpop.f32.mrb[0].mxu0
        %v2619 = vadd.f32 0.0, %v2618
        %v2620 = vpop.f32.mrb[0].mxu0
        %v2621 = vadd.f32 0.0, %v2620
        %2622 = vdwg.mxu0
        %v2623 = vadd.f32 %v2521, %v2619
        %v2624 = vadd.f32 %v2523, %v2621
        %v2625 = vadd.f32 %v2345, %v2623
        %v2626 = vadd.f32 %v2346, %v2624
        %s2627 = scalar_lea.vmem %s5, 8
        %v2628 = vld [vmem:[%s2627] sm:$0xf]
        %s2629 = scalar_lea.vmem %s5, 20
        %v2630 = vld [vmem:[%s2629] sm:$0xf]
        %2631 = vrot.lane.b32.xlu0 %v2231, 127
        %v2632 = vpop.permute.xlu0 %2631
        %2633 = vrot.lane.b32.xlu0 %v2232, 127
        %v2634 = vpop.permute.xlu0 %2633
        %2635 = vrot.lane.b32.xlu0 %v2233, 127
        %v2636 = vpop.permute.xlu0 %2635
        %2637 = vrot.lane.b32.xlu0 %v2234, 127
        %v2638 = vpop.permute.xlu0 %2637
        %2639 = vrot.lane.b32.xlu0 %v2235, 127
        %v2640 = vpop.permute.xlu0 %2639
        %2641 = vrot.lane.b32.xlu0 %v2236, 127
        %v2642 = vpop.permute.xlu0 %2641
        %v2643 = vsel %vm934, %v2632, %v2634
        %v2644 = vsel %vm934, %v2634, %v2636
        %v2645 = vsel %vm934, %v2638, %v2640
        %v2646 = vsel %vm934, %v2640, %v2642
        %v2650 = vsel %vm2056, %v2630, 0
        %v2652 = vsel %vm394, %v2645, 0
        %v2654 = vsel %vm394, %v2646, 0
        %2656 = vmatprep.subr.mxu0 %v2644
        %2657 = vmatpush1.msra.mxu0 %v2643
        %2658 = vmatprep.subr.mxu0 %v2654
        %2659 = vmatpush1.msra.mxu0 %v2652
        %2660 = vmatprep.subr.mxu0 0.0
        %2661 = vmatpush1.msra.mxu0 0.0
        %2662 = vmatprep.subr.mxu0 0.0
        %2663 = vmatpush1.msra.mxu0 0.0
        %2664 = vmatprep.subr.mxu0 0.0
        %2665 = vmatpush1.msra.mxu0 0.0
        %2666 = vmatprep.subr.mxu0 0.0
        %2667 = vmatpush1.msra.mxu0 0.0
        %2668 = vmatprep.subr.mxu0 0.0
        %2669 = vmatpush1.msra.mxu0 0.0
        %2670 = vmatprep.subr.mxu0 0.0
        %2671 = vmatpush1.msra.mxu0 0.0
        %2672 = vmatprep.subr.mxu0 0.0
        %2673 = vmatpush1.msra.mxu0 0.0
        %2674 = vmatprep.subr.mxu0 0.0
        %2675 = vmatpush1.msra.mxu0 0.0
        %2676 = vmatprep.subr.mxu0 0.0
        %2677 = vmatpush1.msra.mxu0 0.0
        %2678 = vmatprep.subr.mxu0 0.0
        %2679 = vmatpush1.msra.mxu0 0.0
        %2680 = vmatprep.subr.mxu0 0.0
        %2681 = vmatpush1.msra.mxu0 0.0
        %2682 = vmatprep.subr.mxu0 0.0
        %2683 = vmatpush1.msra.mxu0 0.0
        %2684 = vmatprep.subr.mxu0 0.0
        %2685 = vmatpush1.msra.mxu0 0.0
        %2686 = vmatprep.subr.mxu0 0.0
        %2687 = vmatpush1.msra.mxu0 0.0
        %2688 = vmatprep.subr.mxu0 0.0
        %2689 = vmatpush1.msra.mxu0 0.0
        %2690 = vmatprep.subr.mxu0 0.0
        %2691 = vmatpush1.msra.mxu0 0.0
        %2692 = vmatprep.subr.mxu0 0.0
        %2693 = vmatpush1.msra.mxu0 0.0
        %2694 = vmatprep.subr.mxu0 0.0
        %2695 = vmatpush1.msra.mxu0 0.0
        %2696 = vmatprep.subr.mxu0 0.0
        %2697 = vmatpush1.msra.mxu0 0.0
        %2698 = vmatprep.subr.mxu0 0.0
        %2699 = vmatpush1.msra.mxu0 0.0
        %2700 = vmatprep.subr.mxu0 0.0
        %2701 = vmatpush1.msra.mxu0 0.0
        %2702 = vmatprep.subr.mxu0 0.0
        %2703 = vmatpush1.msra.mxu0 0.0
        %2704 = vmatprep.subr.mxu0 0.0
        %2705 = vmatpush1.msra.mxu0 0.0
        %2706 = vmatprep.subr.mxu0 0.0
        %2707 = vmatpush1.msra.mxu0 0.0
        %2708 = vmatprep.subr.mxu0 0.0
        %2709 = vmatpush1.msra.mxu0 0.0
        %2710 = vmatprep.subr.mxu0 0.0
        %2711 = vmatpush1.msra.mxu0 0.0
        %2712 = vmatprep.subr.mxu0 0.0
        %2713 = vmatpush1.msra.mxu0 0.0
        %2714 = vmatprep.subr.mxu0 0.0
        %2715 = vmatpush1.msra.mxu0 0.0
        %2716 = vmatprep.subr.mxu0 0.0
        %2717 = vmatpush1.msra.mxu0 0.0
        %2718 = vmatprep.subr.mxu0 0.0
        %2719 = vmatpush1.msra.mxu0 0.0
        %2720 = vmatprep.mubr.f32.mxu0 0.0
        %2721 = vmatmul.mubr.f32.gmra.mrb[0].mxu0 %v2650
        %v2722 = vpop.f32.mrb[0].mxu0
        %v2723 = vadd.f32 0.0, %v2722
        %v2724 = vpop.f32.mrb[0].mxu0
        %v2725 = vadd.f32 0.0, %v2724
        %2726 = vdwg.mxu0
        %2727 = vrot.lane.b32.xlu0 %v2023, 15
        %v2728 = vpop.permute.xlu0 %2727
        %2729 = vrot.lane.b32.xlu0 %v2024, 15
        %v2730 = vpop.permute.xlu0 %2729
        %2731 = vrot.lane.b32.xlu0 %v2025, 15
        %v2732 = vpop.permute.xlu0 %2731
        %2733 = vrot.lane.b32.xlu0 %v2026, 15
        %v2734 = vpop.permute.xlu0 %2733
        %2735 = vrot.lane.b32.xlu0 %v2027, 15
        %v2736 = vpop.permute.xlu0 %2735
        %2737 = vrot.lane.b32.xlu0 %v2028, 15
        %v2738 = vpop.permute.xlu0 %2737
        %v2739 = vsel %vm1021, %v2728, %v2730
        %v2740 = vsel %vm1021, %v2730, %v2732
        %v2741 = vsel %vm1021, %v2734, %v2736
        %v2742 = vsel %vm1021, %v2736, %v2738
        %v2746 = vsel %vm2056, %v2628, 0
        %v2748 = vsel %vm394, %v2741, 0
        %v2750 = vsel %vm394, %v2742, 0
        %2752 = vmatprep.subr.mxu0 %v2740
        %2753 = vmatpush1.msra.mxu0 %v2739
        %2754 = vmatprep.subr.mxu0 %v2750
        %2755 = vmatpush1.msra.mxu0 %v2748
        %2756 = vmatprep.subr.mxu0 0.0
        %2757 = vmatpush1.msra.mxu0 0.0
        %2758 = vmatprep.subr.mxu0 0.0
        %2759 = vmatpush1.msra.mxu0 0.0
        %2760 = vmatprep.subr.mxu0 0.0
        %2761 = vmatpush1.msra.mxu0 0.0
        %2762 = vmatprep.subr.mxu0 0.0
        %2763 = vmatpush1.msra.mxu0 0.0
        %2764 = vmatprep.subr.mxu0 0.0
        %2765 = vmatpush1.msra.mxu0 0.0
        %2766 = vmatprep.subr.mxu0 0.0
        %2767 = vmatpush1.msra.mxu0 0.0
        %2768 = vmatprep.subr.mxu0 0.0
        %2769 = vmatpush1.msra.mxu0 0.0
        %2770 = vmatprep.subr.mxu0 0.0
        %2771 = vmatpush1.msra.mxu0 0.0
        %2772 = vmatprep.subr.mxu0 0.0
        %2773 = vmatpush1.msra.mxu0 0.0
        %2774 = vmatprep.subr.mxu0 0.0
        %2775 = vmatpush1.msra.mxu0 0.0
        %2776 = vmatprep.subr.mxu0 0.0
        %2777 = vmatpush1.msra.mxu0 0.0
        %2778 = vmatprep.subr.mxu0 0.0
        %2779 = vmatpush1.msra.mxu0 0.0
        %2780 = vmatprep.subr.mxu0 0.0
        %2781 = vmatpush1.msra.mxu0 0.0
        %2782 = vmatprep.subr.mxu0 0.0
        %2783 = vmatpush1.msra.mxu0 0.0
        %2784 = vmatprep.subr.mxu0 0.0
        %2785 = vmatpush1.msra.mxu0 0.0
        %2786 = vmatprep.subr.mxu0 0.0
        %2787 = vmatpush1.msra.mxu0 0.0
        %2788 = vmatprep.subr.mxu0 0.0
        %2789 = vmatpush1.msra.mxu0 0.0
        %2790 = vmatprep.subr.mxu0 0.0
        %2791 = vmatpush1.msra.mxu0 0.0
        %2792 = vmatprep.subr.mxu0 0.0
        %2793 = vmatpush1.msra.mxu0 0.0
        %2794 = vmatprep.subr.mxu0 0.0
        %2795 = vmatpush1.msra.mxu0 0.0
        %2796 = vmatprep.subr.mxu0 0.0
        %2797 = vmatpush1.msra.mxu0 0.0
        %2798 = vmatprep.subr.mxu0 0.0
        %2799 = vmatpush1.msra.mxu0 0.0
        %2800 = vmatprep.subr.mxu0 0.0
        %2801 = vmatpush1.msra.mxu0 0.0
        %2802 = vmatprep.subr.mxu0 0.0
        %2803 = vmatpush1.msra.mxu0 0.0
        %2804 = vmatprep.subr.mxu0 0.0
        %2805 = vmatpush1.msra.mxu0 0.0
        %2806 = vmatprep.subr.mxu0 0.0
        %2807 = vmatpush1.msra.mxu0 0.0
        %2808 = vmatprep.subr.mxu0 0.0
        %2809 = vmatpush1.msra.mxu0 0.0
        %2810 = vmatprep.subr.mxu0 0.0
        %2811 = vmatpush1.msra.mxu0 0.0
        %2812 = vmatprep.subr.mxu0 0.0
        %2813 = vmatpush1.msra.mxu0 0.0
        %2814 = vmatprep.subr.mxu0 0.0
        %2815 = vmatpush1.msra.mxu0 0.0
        %2816 = vmatprep.mubr.f32.mxu0 0.0
        %2817 = vmatmul.mubr.f32.gmra.mrb[0].mxu0 %v2746
        %v2818 = vpop.f32.mrb[0].mxu0
        %v2819 = vadd.f32 %v2723, %v2818
        %v2820 = vpop.f32.mrb[0].mxu0
        %v2821 = vadd.f32 %v2725, %v2820
        %2822 = vdwg.mxu0
        %s2823 = scalar_lea.vmem %s5, 32
        %v2824 = vld [vmem:[%s2823] sm:$0xf]
        %2825 = vrot.lane.b32.xlu0 %v2231, 111
        %v2826 = vpop.permute.xlu0 %2825
        %2827 = vrot.lane.b32.xlu0 %v2232, 111
        %v2828 = vpop.permute.xlu0 %2827
        %2829 = vrot.lane.b32.xlu0 %v2233, 111
        %v2830 = vpop.permute.xlu0 %2829
        %2831 = vrot.lane.b32.xlu0 %v2234, 111
        %v2832 = vpop.permute.xlu0 %2831
        %2833 = vrot.lane.b32.xlu0 %v2235, 111
        %v2834 = vpop.permute.xlu0 %2833
        %2835 = vrot.lane.b32.xlu0 %v2236, 111
        %v2836 = vpop.permute.xlu0 %2835
        %v2837 = vsel %vm1110, %v2826, %v2828
        %v2838 = vsel %vm1110, %v2828, %v2830
        %v2839 = vsel %vm1110, %v2832, %v2834
        %v2840 = vsel %vm1110, %v2834, %v2836
        %v2844 = vsel %vm2056, %v2824, 0
        %v2846 = vsel %vm394, %v2839, 0
        %v2848 = vsel %vm394, %v2840, 0
        %2850 = vmatprep.subr.mxu0 %v2838
        %2851 = vmatpush1.msra.mxu0 %v2837
        %2852 = vmatprep.subr.mxu0 %v2848
        %2853 = vmatpush1.msra.mxu0 %v2846
        %2854 = vmatprep.subr.mxu0 0.0
        %2855 = vmatpush1.msra.mxu0 0.0
        %2856 = vmatprep.subr.mxu0 0.0
        %2857 = vmatpush1.msra.mxu0 0.0
        %2858 = vmatprep.subr.mxu0 0.0
        %2859 = vmatpush1.msra.mxu0 0.0
        %2860 = vmatprep.subr.mxu0 0.0
        %2861 = vmatpush1.msra.mxu0 0.0
        %2862 = vmatprep.subr.mxu0 0.0
        %2863 = vmatpush1.msra.mxu0 0.0
        %2864 = vmatprep.subr.mxu0 0.0
        %2865 = vmatpush1.msra.mxu0 0.0
        %2866 = vmatprep.subr.mxu0 0.0
        %2867 = vmatpush1.msra.mxu0 0.0
        %2868 = vmatprep.subr.mxu0 0.0
        %2869 = vmatpush1.msra.mxu0 0.0
        %2870 = vmatprep.subr.mxu0 0.0
        %2871 = vmatpush1.msra.mxu0 0.0
        %2872 = vmatprep.subr.mxu0 0.0
        %2873 = vmatpush1.msra.mxu0 0.0
        %2874 = vmatprep.subr.mxu0 0.0
        %2875 = vmatpush1.msra.mxu0 0.0
        %2876 = vmatprep.subr.mxu0 0.0
        %2877 = vmatpush1.msra.mxu0 0.0
        %2878 = vmatprep.subr.mxu0 0.0
        %2879 = vmatpush1.msra.mxu0 0.0
        %2880 = vmatprep.subr.mxu0 0.0
        %2881 = vmatpush1.msra.mxu0 0.0
        %2882 = vmatprep.subr.mxu0 0.0
        %2883 = vmatpush1.msra.mxu0 0.0
        %2884 = vmatprep.subr.mxu0 0.0
        %2885 = vmatpush1.msra.mxu0 0.0
        %2886 = vmatprep.subr.mxu0 0.0
        %2887 = vmatpush1.msra.mxu0 0.0
        %2888 = vmatprep.subr.mxu0 0.0
        %2889 = vmatpush1.msra.mxu0 0.0
        %2890 = vmatprep.subr.mxu0 0.0
        %2891 = vmatpush1.msra.mxu0 0.0
        %2892 = vmatprep.subr.mxu0 0.0
        %2893 = vmatpush1.msra.mxu0 0.0
        %2894 = vmatprep.subr.mxu0 0.0
        %2895 = vmatpush1.msra.mxu0 0.0
        %2896 = vmatprep.subr.mxu0 0.0
        %2897 = vmatpush1.msra.mxu0 0.0
        %2898 = vmatprep.subr.mxu0 0.0
        %2899 = vmatpush1.msra.mxu0 0.0
        %2900 = vmatprep.subr.mxu0 0.0
        %2901 = vmatpush1.msra.mxu0 0.0
        %2902 = vmatprep.subr.mxu0 0.0
        %2903 = vmatpush1.msra.mxu0 0.0
        %2904 = vmatprep.subr.mxu0 0.0
        %2905 = vmatpush1.msra.mxu0 0.0
        %2906 = vmatprep.subr.mxu0 0.0
        %2907 = vmatpush1.msra.mxu0 0.0
        %2908 = vmatprep.subr.mxu0 0.0
        %2909 = vmatpush1.msra.mxu0 0.0
        %2910 = vmatprep.subr.mxu0 0.0
        %2911 = vmatpush1.msra.mxu0 0.0
        %2912 = vmatprep.subr.mxu0 0.0
        %2913 = vmatpush1.msra.mxu0 0.0
        %2914 = vmatprep.mubr.f32.mxu0 0.0
        %2915 = vmatmul.mubr.f32.gmra.mrb[0].mxu0 %v2844
        %v2916 = vpop.f32.mrb[0].mxu0
        %v2917 = vadd.f32 0.0, %v2916
        %v2918 = vpop.f32.mrb[0].mxu0
        %v2919 = vadd.f32 0.0, %v2918
        %2920 = vdwg.mxu0
        %v2921 = vadd.f32 %v2819, %v2917
        %v2922 = vadd.f32 %v2821, %v2919
        %v2923 = vsel %vm1195, %v2921, 0.0
        %v2924 = vsel %vm1196, %v2922, 0.0
        %v2925 = vadd.f32 %v2625, %v2923
        %v2926 = vadd.f32 %v2626, %v2924
        %v2927 = vld [vmem:[%s6] sm:$0xf]
        %2929 = vset.pattern.permute.xlu0 0
        %2930 = vperm.xlu0 %2929, %v2927
        %v2931 = vpop.permute.xlu0 %2930
        %v2933 = vadd.f32 %v2925, %v2931
        %v2934 = vadd.f32 %v2926, %v2931
        %v2935 = vmax.f32 %v2933, 0.0
        %v2936 = vmax.f32 %v2934, 0.0
        %v2939 = vrot.slane %v2935, 4
        %v2940 = vrot.slane %v2936, 4
        %2943 = vst [vmem:[#allocation2 + $0x28] sm:$0xf0] %v2939
        %2944 = vst [vmem:[#allocation2 + $0x30] sm:$0xf0] %v2940
        %v2945 = vld [vmem:[#allocation2 + $0x8] sm:$0xff]
        %v2946 = vld [vmem:[#allocation2 + $0x10] sm:$0xff]
        %v2947 = vld [vmem:[#allocation2 + $0x28] sm:$0xff]
        %v2948 = vld [vmem:[#allocation2 + $0x30] sm:$0xff]
        %v2949 = vld [vmem:[%s7] sm:$0xf]
        %v2950 = vld [vmem:[%s8] sm:$0xf]
        %2952 = vset.pattern.permute.xlu0 0
        %2953 = vperm.xlu0 %2952, %v2950
        %v2954 = vpop.permute.xlu0 %2953
        %v2957 = vsel %vm750, %v2949, 0
        %2959 = vmatprep.subr.mxu0 %v2946
        %2960 = vmatpush1.msra.mxu0 %v2945
        %2961 = vmatprep.subr.mxu0 %v2948
        %2962 = vmatpush1.msra.mxu0 %v2947
        %2963 = vmatprep.subr.mxu0 0.0
        %2964 = vmatpush1.msra.mxu0 0.0
        %2965 = vmatprep.subr.mxu0 0.0
        %2966 = vmatpush1.msra.mxu0 0.0
        %2967 = vmatprep.subr.mxu0 0.0
        %2968 = vmatpush1.msra.mxu0 0.0
        %2969 = vmatprep.subr.mxu0 0.0
        %2970 = vmatpush1.msra.mxu0 0.0
        %2971 = vmatprep.subr.mxu0 0.0
        %2972 = vmatpush1.msra.mxu0 0.0
        %2973 = vmatprep.subr.mxu0 0.0
        %2974 = vmatpush1.msra.mxu0 0.0
        %2975 = vmatprep.subr.mxu0 0.0
        %2976 = vmatpush1.msra.mxu0 0.0
        %2977 = vmatprep.subr.mxu0 0.0
        %2978 = vmatpush1.msra.mxu0 0.0
        %2979 = vmatprep.subr.mxu0 0.0
        %2980 = vmatpush1.msra.mxu0 0.0
        %2981 = vmatprep.subr.mxu0 0.0
        %2982 = vmatpush1.msra.mxu0 0.0
        %2983 = vmatprep.subr.mxu0 0.0
        %2984 = vmatpush1.msra.mxu0 0.0
        %2985 = vmatprep.subr.mxu0 0.0
        %2986 = vmatpush1.msra.mxu0 0.0
        %2987 = vmatprep.subr.mxu0 0.0
        %2988 = vmatpush1.msra.mxu0 0.0
        %2989 = vmatprep.subr.mxu0 0.0
        %2990 = vmatpush1.msra.mxu0 0.0
        %2991 = vmatprep.subr.mxu0 0.0
        %2992 = vmatpush1.msra.mxu0 0.0
        %2993 = vmatprep.subr.mxu0 0.0
        %2994 = vmatpush1.msra.mxu0 0.0
        %2995 = vmatprep.subr.mxu0 0.0
        %2996 = vmatpush1.msra.mxu0 0.0
        %2997 = vmatprep.subr.mxu0 0.0
        %2998 = vmatpush1.msra.mxu0 0.0
        %2999 = vmatprep.subr.mxu0 0.0
        %3000 = vmatpush1.msra.mxu0 0.0
        %3001 = vmatprep.subr.mxu0 0.0
        %3002 = vmatpush1.msra.mxu0 0.0
        %3003 = vmatprep.subr.mxu0 0.0
        %3004 = vmatpush1.msra.mxu0 0.0
        %3005 = vmatprep.subr.mxu0 0.0
        %3006 = vmatpush1.msra.mxu0 0.0
        %3007 = vmatprep.subr.mxu0 0.0
        %3008 = vmatpush1.msra.mxu0 0.0
        %3009 = vmatprep.subr.mxu0 0.0
        %3010 = vmatpush1.msra.mxu0 0.0
        %3011 = vmatprep.subr.mxu0 0.0
        %3012 = vmatpush1.msra.mxu0 0.0
        %3013 = vmatprep.subr.mxu0 0.0
        %3014 = vmatpush1.msra.mxu0 0.0
        %3015 = vmatprep.subr.mxu0 0.0
        %3016 = vmatpush1.msra.mxu0 0.0
        %3017 = vmatprep.subr.mxu0 0.0
        %3018 = vmatpush1.msra.mxu0 0.0
        %3019 = vmatprep.subr.mxu0 0.0
        %3020 = vmatpush1.msra.mxu0 0.0
        %3021 = vmatprep.subr.mxu0 0.0
        %3022 = vmatpush1.msra.mxu0 0.0
        %3023 = vmatprep.mubr.f32.mxu0 0.0
        %3024 = vmatmul.mubr.f32.gmra.mrb[0].mxu0 %v2957
        %v3025 = vpop.f32.mrb[0].mxu0
        %v3026 = vadd.f32 %v2954, %v3025
        %v3027 = vpop.f32.mrb[0].mxu0
        %v3028 = vadd.f32 %v2954, %v3027
        %3029 = vdwg.mxu0
        %v3030 = vadd.f32 %v3026, %v331
        %v3031 = vadd.f32 %v3028, %v337
        %v3034 = vcombine.low %v3030, %v3031
        %3036 = vst [vmem:[%s325] sm:$0xff] %v3034
        %s3037 = sand.u32 %s225, 1
        %s3038 = scalar_lea.sflag [#allocation4], %s3037
        %s3039 = sand.u32 %s225, 1
        %s3040 = smul.addr %s3039, 8
        %s3041 = scalar_lea.vmem [#allocation3], %s3040
        // Predicated region
        $region57: #{tpu_custom_call.1} parent=55 // pred_check
          %p3042 = pneg %p235
        $region58: #{tpu_custom_call.1} parent=55 // pred_check_branch
          %3044 = sbr.rel (%p3042) target = $region60
        $region59: #{tpu_custom_call.1} parent=55 // pred_region
          %s3046 = ssub.s32 128, 128
          %3047 = vsyncadd %s3038, %s3046
          %s3048 = smul.addr %s23, 2
          %s3049 = smul.addr %s3048, 64
          %s3050 = scalar_lea.hbm %s9, %s3049
          %s3052 = sshll.u32 %s3041, 4
          %s3053 = int_to_ptr.vmem [resolvable:$true] %s3052
          %3055 = dma.vmem_to_hbm [thread:$0]  %s3053, 128, %s3050, %s3038
        $region60: #{tpu_custom_call.1} parent=55 // pred_fallthru
          _
      $region56: #{tpu_custom_call.1} parent=5 // pred_fallthru
        _
      %p3056 = scmp.le.s32.totalorder 2, %s18
      // Predicated region
      $region61: #{tpu_custom_call.1} parent=5 // pred_check
        %p3057 = pneg %p3056
      $region62: #{tpu_custom_call.1} parent=5 // pred_check_branch
        %3059 = sbr.rel (%p3057) target = $region64
      $region63: #{tpu_custom_call.1} parent=5 // pred_region
        %s3060 = ssub.s32 %s18, 2
        // Predicated region
        $region65: #{tpu_custom_call.1} parent=63 // pred_check
          %p3061 = pneg %p241
        $region66: #{tpu_custom_call.1} parent=63 // pred_check_branch
          %3063 = sbr.rel (%p3061) target = $region68
        $region67: #{tpu_custom_call.1} parent=63 // pred_region
          %s3064 = sand.u32 %s226, 1
          %s3065 = scalar_lea.sflag [#allocation4], %s3064
          %s3066 = sand.u32 %s226, 1
          %s3067 = smul.addr %s3066, 8
          %s3068 = scalar_lea.vmem [#allocation3], %s3067
          %3069 = dma.done %s3065, 128
        $region68: #{tpu_custom_call.1} parent=63 // pred_fallthru
          _
      $region64: #{tpu_custom_call.1} parent=5 // pred_fallthru
        _
    $region6: #{tpu_custom_call.1} parent=1 // loop_footer
      %s22 = sadd.s32 1, %s18
    $region7: #{tpu_custom_call.1} parent=1 // loop_footer_branch
      %17 = sbr.rel target = $region3
    $region8: #{tpu_custom_call.1} parent=1 // loop_exit
      _
    %3070 = vsyncpa [#allocation4], 1
    %s3071 = scalar_lea.sflag [#allocation4], 1
    %3072 = vsyncpa %s3071, 1

</llo_original>
